<compile_context>
chip_gen: v7x
topology: tpu7x:2x2x1
jax: 0.10.0
libtpu: 0.0.40
codegen_flags: <defaults>
</compile_context>

<pallas_src>
import functools

import jax
import jax.numpy as jnp
from jax.experimental import pallas as pl
from jax.experimental.pallas import tpu as pltpu


LANE = 128            # Cout is padded to a multiple of this (lane-dense stores)
TILE_ALIGN = 16       # M-tile alignment (bf16 sublane packing = 16)


def _round_up(x, m):
    return (x + m - 1) // m * m


def _detect_vmem_capacity():
    """Physical VMEM bytes of the attached TPU generation (conservative fallback)."""
    try:
        info = pltpu.get_tpu_info()
        for attr in ("vmem_capacity_bytes", "vmem_bytes", "vmem_size_bytes"):
            v = getattr(info, attr, None)
            if v:
                return int(v)
    except Exception:
        pass
    return 64 * 1024 * 1024          # v7x-sized conservative default


_VMEM_CAP = _detect_vmem_capacity()
if _VMEM_CAP >= 100 * 1024 * 1024:   # v5e / v6e: 128 MiB physical VMEM
    VMEM_LIMIT_BYTES = 96 * 1024 * 1024
    VMEM_TILE_BUDGET = 64 * 1024 * 1024
else:                                # v7x: 64 MiB physical VMEM
    VMEM_LIMIT_BYTES = 32 * 1024 * 1024
    VMEM_TILE_BUDGET = 24 * 1024 * 1024


def _pick_tm(m, k, coutp, in_bytes, out_bytes, budget=VMEM_TILE_BUDGET):
    """Largest M-tile whose double-buffered working set fits the VMEM tile budget.
    Small-K (memory-bound) layers get a larger cap to amortize grid-step overhead."""
    cap = 2048 if k <= 512 else 512
    tm = _round_up(min(cap, _round_up(m, TILE_ALIGN)), TILE_ALIGN)
    while tm > TILE_ALIGN:
        need = (2 * tm * k * in_bytes          # double-buffered patch tile
                + 2 * tm * coutp * out_bytes   # double-buffered output tile
                + 2 * k * coutp * in_bytes     # weight (conservatively counted x2)
                + 32 * coutp * 4)              # per-channel vectors / partial stats
        if need <= budget:
            break
        tm = max(TILE_ALIGN, (tm // 2) // TILE_ALIGN * TILE_ALIGN)
    return tm


def _pick_phase2_tm(mp, tm, coutp, budget=VMEM_TILE_BUDGET):
    """Phase-2 (normalize) tile: largest multiple of tm that divides mp, <= 2048 rows,
    and fits the budget (bf16 in + bf16 out, double-buffered, no weight)."""
    grid1 = mp // tm
    best = tm
    for d in range(1, grid1 + 1):
        if grid1 % d:
            continue
        t = d * tm
        if t > 2048:
            break
        if 8 * t * coutp + 32 * coutp * 4 <= budget:
            best = t
    return best


# ----------------------------------------------------------------------------
# Pallas kernels
# ----------------------------------------------------------------------------
def _conv_bias_act_kernel(p_ref, w_ref, b_ref, o_ref, *, use_lrelu, negative_slope):
    """Fused conv-as-matmul + bias + optional LeakyReLU for one M-tile.
    Inputs are bf16; MXU accumulates f32; post-matmul math in f32 (v5e-safe)."""
    y = jnp.dot(p_ref[...], w_ref[...], preferred_element_type=jnp.float32)
    y = y + b_ref[...]                                   # (1, Coutp) f32 bias
    if use_lrelu:
        y = jnp.where(y >= 0.0, y, negative_slope * y)
    o_ref[...] = y.astype(o_ref.dtype)


def _conv_stats_kernel(p_ref, w_ref, y_ref, stat_ref):
    """BN phase 1: conv-as-matmul for one M-tile plus PER-TILE partial channel
    statistics (sum / sum-of-squares) so the grid axis can stay "parallel"
    (both v7x TensorCores).  Padded zero rows contribute exactly zero and BN
    convs have no bias, so the later divide uses the true M."""
    y = jnp.dot(p_ref[...], w_ref[...], preferred_element_type=jnp.float32)
    y_ref[...] = y.astype(y_ref.dtype)                               # bf16 round-trip
    stat_ref[0:1, 0:1, :] = jnp.sum(y, axis=0, keepdims=True)[None]
    stat_ref[0:1, 1:2, :] = jnp.sum(y * y, axis=0, keepdims=True)[None]


def _bn_lrelu_kernel(y_ref, sum_ref, ssq_ref, g_ref, bt_ref, o_ref, *, inv_m, eps,
                     negative_slope):
    """BN phase 2: normalize with full-batch statistics + affine + LeakyReLU."""
    mean = sum_ref[...] * inv_m
    # Biased variance (torch training-mode semantics); clamp guards f32 cancellation.
    var = jnp.maximum(ssq_ref[...] * inv_m - mean * mean, 0.0)
    scale = g_ref[...] * jax.lax.rsqrt(var + eps)        # EUP rsqrt
    shift = bt_ref[...] - mean * scale
    z = y_ref[...].astype(jnp.float32) * scale + shift
    o_ref[...] = jnp.where(z >= 0.0, z, negative_slope * z).astype(o_ref.dtype)


# ----------------------------------------------------------------------------
# pallas_call wrappers
# ----------------------------------------------------------------------------
def conv_bias_act(patches, w_mat, bias, *, tm, out_dtype, use_lrelu,
                  negative_slope=0.2):
    mp, k = patches.shape
    coutp = w_mat.shape[1]
    kernel = functools.partial(_conv_bias_act_kernel, use_lrelu=use_lrelu,
                               negative_slope=negative_slope)
    return pl.pallas_call(
        kernel,
        out_shape=jax.ShapeDtypeStruct((mp, coutp), out_dtype),
        grid_spec=pltpu.PrefetchScalarGridSpec(
            num_scalar_prefetch=0,
            grid=(mp // tm,),
            in_specs=[pl.BlockSpec((tm, k), lambda i: (i, 0)),
                      pl.BlockSpec((k, coutp), lambda i: (0, 0)),     # VMEM-resident
                      pl.BlockSpec((1, coutp), lambda i: (0, 0))],
            out_specs=pl.BlockSpec((tm, coutp), lambda i: (i, 0))),
        compiler_params=pltpu.CompilerParams(
            dimension_semantics=("parallel",),
            vmem_limit_bytes=VMEM_LIMIT_BYTES),
    )(patches, w_mat, bias)


def conv_bn_lrelu(patches, w_mat, gamma, beta, *, tm, m_true, act_dtype,
                  eps=1e-5, negative_slope=0.2):
    mp, k = patches.shape
    coutp = w_mat.shape[1]
    grid1 = mp // tm

    # ---- phase 1: tiled matmul + per-tile partial stats (fully "parallel") --
    y, stats = pl.pallas_call(
        _conv_stats_kernel,
        out_shape=(jax.ShapeDtypeStruct((mp, coutp), act_dtype),       # bf16 round-trip
                   jax.ShapeDtypeStruct((grid1, 2, coutp), jnp.float32)),
        grid_spec=pltpu.PrefetchScalarGridSpec(
            num_scalar_prefetch=0,
            grid=(grid1,),
            in_specs=[pl.BlockSpec((tm, k), lambda i: (i, 0)),
                      pl.BlockSpec((k, coutp), lambda i: (0, 0))],     # VMEM-resident
            out_specs=(pl.BlockSpec((tm, coutp), lambda i: (i, 0)),
                       pl.BlockSpec((1, 2, coutp), lambda i: (i, 0, 0)))),
        compiler_params=pltpu.CompilerParams(
            dimension_semantics=("parallel",),
            vmem_limit_bytes=VMEM_LIMIT_BYTES),
    )(patches, w_mat)

    # Tiny XLA reduction of the per-tile partials -> (1, Coutp) batch statistics.
    csum = jnp.sum(stats[:, 0, :], axis=0, keepdims=True)
    cssq = jnp.sum(stats[:, 1, :], axis=0, keepdims=True)

    # ---- phase 2: normalize + affine + LeakyReLU (memory-bound, bigger tile) -
    tm2 = _pick_phase2_tm(mp, tm, coutp)
    kernel = functools.partial(_bn_lrelu_kernel, inv_m=1.0 / float(m_true),
                               eps=eps, negative_slope=negative_slope)
    return pl.pallas_call(
        kernel,
        out_shape=jax.ShapeDtypeStruct((mp, coutp), act_dtype),
        grid_spec=pltpu.PrefetchScalarGridSpec(
            num_scalar_prefetch=0,
            grid=(mp // tm2,),
            in_specs=[pl.BlockSpec((tm2, coutp), lambda i: (i, 0)),
                      pl.BlockSpec((1, coutp), lambda i: (0, 0)),
                      pl.BlockSpec((1, coutp), lambda i: (0, 0)),
                      pl.BlockSpec((1, coutp), lambda i: (0, 0)),
                      pl.BlockSpec((1, coutp), lambda i: (0, 0))],
            out_specs=pl.BlockSpec((tm2, coutp), lambda i: (i, 0))),
        input_output_aliases={0: 0},              # reuse the conv-output HBM buffer
        compiler_params=pltpu.CompilerParams(
            dimension_semantics=("parallel",),
            vmem_limit_bytes=VMEM_LIMIT_BYTES),
    )(y, csum, cssq, gamma, beta)


# ----------------------------------------------------------------------------
# Glue: im2col (XLA), spectral norm (parameter reparameterization), params
# ----------------------------------------------------------------------------
def im2col(x_nhwc, k, stride, pad):
    """x: (N, H, W, C) -> patches (N*Ho*Wo, k*k*C), Ho, Wo.  Runs in x's dtype (bf16)."""
    n, h, w, c = x_nhwc.shape
    xp = jnp.pad(x_nhwc, ((0, 0), (pad, pad), (pad, pad), (0, 0)))
    ho = (h + 2 * pad - k) // stride + 1
    wo = (w + 2 * pad - k) // stride + 1
    cols = []
    for i in range(k):
        for j in range(k):
            cols.append(xp[:, i:i + (ho - 1) * stride + 1:stride,
                              j:j + (wo - 1) * stride + 1:stride, :])
    patches = jnp.stack(cols, axis=3)                 # (N, Ho, Wo, k*k, C)
    return patches.reshape(n * ho * wo, k * k * c), ho, wo


def spectral_normalize(w, key, n_iters=10, eps=1e-12):
    """Torch-style spectral norm: W / sigma_max(W.view(Cout, -1)), power iteration.
    Applied once at init (inference-style reparameterization), not per forward."""
    cout = w.shape[0]
    wm = w.reshape(cout, -1)
    u = jax.random.normal(key, (cout,), dtype=jnp.float32)
    u = u / (jnp.linalg.norm(u) + eps)
    v = jnp.zeros((wm.shape[1],), dtype=jnp.float32)
    for _ in range(n_iters):
        v = wm.T @ u
        v = v / (jnp.linalg.norm(v) + eps)
        u = wm @ v
        u = u / (jnp.linalg.norm(u) + eps)
    sigma = u @ (wm @ v)
    return w / sigma


def build_layer_cfgs(input_nc, ndf, n_layers):
    """Mirror of NLayerDiscriminator.__init__ (spectral=True, BatchNorm2d -> use_bias=False)."""
    cfgs = [dict(cin=input_nc, cout=ndf, stride=2, use_bn=False, use_lrelu=True)]
    nf_mult = 1
    for n in range(1, n_layers):
        nf_prev, nf_mult = nf_mult, min(2 ** n, 8)
        cfgs.append(dict(cin=ndf * nf_prev, cout=ndf * nf_mult, stride=2,
                         use_bn=True, use_lrelu=True))
    nf_prev, nf_mult = nf_mult, min(2 ** n_layers, 8)
    cfgs.append(dict(cin=ndf * nf_prev, cout=ndf * nf_mult, stride=2,
                     use_bn=True, use_lrelu=True))
    cfgs.append(dict(cin=ndf * nf_mult, cout=1, stride=1,
                     use_bn=False, use_lrelu=False))
    return cfgs


def init_params(key, cfgs, kw=4, io_dtype=jnp.bfloat16):
    """Deterministic synthetic init (DCGAN-style N(0,0.02) weights, zero bias,
    BN gamma=1 / beta=0), spectral norm applied in f32, and ALL weight
    preprocessing hoisted here: (Cout,Cin,kh,kw) -> (kh*kw*Cin, Cout), Cout
    zero-padded to a lane multiple, then cast to bf16.  K is NOT padded."""
    params = []
    for cfg in cfgs:
        key, k_w, k_sn = jax.random.split(key, 3)
        w = 0.02 * jax.random.normal(k_w, (cfg["cout"], cfg["cin"], kw, kw),
                                     dtype=jnp.float32)
        w = spectral_normalize(w, k_sn)
        k_dim = kw * kw * cfg["cin"]
        coutp = _round_up(cfg["cout"], LANE)
        w_mat = jnp.transpose(w, (2, 3, 1, 0)).reshape(k_dim, cfg["cout"])
        w_mat = jnp.pad(w_mat, ((0, 0), (0, coutp - cfg["cout"]))).astype(io_dtype)
        bias = jnp.zeros((1, coutp), dtype=jnp.float32)
        gamma = jnp.zeros((1, coutp), dtype=jnp.float32).at[:, :cfg["cout"]].set(1.0)
        beta = jnp.zeros((1, coutp), dtype=jnp.float32)
        params.append(dict(w=w_mat, bias=bias, gamma=gamma, beta=beta))
    return params


def nlayer_discriminator_forward(x_nchw, params, cfgs, kw=4, padw=1,
                                 io_dtype=jnp.bfloat16):
    """Forward pass of NLayerDiscriminator. Input/output NCHW like PyTorch.
    Activations/patches/weights travel as bf16; all accumulation/pointwise math is f32."""
    x = jnp.transpose(x_nchw, (0, 2, 3, 1)).astype(io_dtype)   # NCHW -> NHWC (bf16)
    n = x.shape[0]
    for li, (cfg, p) in enumerate(zip(cfgs, params)):
        is_last = li == len(cfgs) - 1
        # TODO(synk): replace host-side im2col with in-kernel halo-DMA / per-tap accumulation.
        patches, ho, wo = im2col(x, kw, cfg["stride"], padw)
        m, k_dim = patches.shape
        coutp = p["w"].shape[1]
        out_dtype = jnp.float32 if is_last else io_dtype
        tm = _pick_tm(m, k_dim, coutp,
                      in_bytes=jnp.dtype(io_dtype).itemsize,
                      out_bytes=jnp.dtype(out_dtype).itemsize)
        mp = _round_up(m, tm)
        if mp > m:                       # pad M with zero rows (excluded from BN stats)
            patches = jnp.pad(patches, ((0, mp - m), (0, 0)))
        if cfg["use_bn"]:
            y = conv_bn_lrelu(patches, p["w"], p["gamma"], p["beta"],
                              tm=tm, m_true=m, act_dtype=io_dtype)
        else:
            y = conv_bias_act(patches, p["w"], p["bias"], tm=tm,
                              out_dtype=out_dtype, use_lrelu=cfg["use_lrelu"])
        x = y[:m, :cfg["cout"]].reshape(n, ho, wo, cfg["cout"])
    # use_sigmoid=False -> no final sigmoid; BN uses training-mode batch statistics.
    return jnp.transpose(x, (0, 3, 1, 2)).astype(jnp.float32)      # NHWC -> NCHW


# ----------------------------------------------------------------------------
# Demo
# ----------------------------------------------------------------------------
if __name__ == "__main__":
    # Small shapes consistent with the module: 4 stride-2 convs + 1 stride-1 conv
    # require spatial >= 32; keep channels modest via ndf=16.
    input_nc, ndf, n_layers = 3, 16, 3
    N, H, W = 2, 32, 32

    key = jax.random.PRNGKey(0)
    k_x, k_p = jax.random.split(key)
    x = jax.random.normal(k_x, (N, input_nc, H, W), dtype=jnp.float32)  # NCHW like PyTorch

    cfgs = build_layer_cfgs(input_nc, ndf, n_layers)
    params = init_params(k_p, cfgs)

    fwd = jax.jit(lambda xin, ps: nlayer_discriminator_forward(xin, ps, cfgs))
    out = jax.block_until_ready(fwd(x, params))
    assert out.shape == (N, 1, 1, 1), out.shape
    print("KERNEL_OK")
</pallas_src>

<mosaic_0001>
module attributes {stable_mosaic.version = 11 : i64} {
  func.func @_conv_bias_act_kernel(%arg0: i32, %arg1: memref<512x48xbf16, #tpu.memory_space<vmem>>, %arg2: memref<48x128xbf16, #tpu.memory_space<vmem>>, %arg3: memref<1x128xf32, #tpu.memory_space<vmem>>, %arg4: memref<512x128xbf16, #tpu.memory_space<vmem>>) attributes {dimension_semantics = [#tpu.dimension_semantics<parallel>], iteration_bounds = array<i64: 1>, scalar_prefetch = 0 : i64, scratch_operands = 0 : i64, tpu.core_type = #tpu.core_type<tc>, window_params = [{transform_indices = @transform_0, window_bounds = array<i64: 512, 48>}, {pipeline_mode = #tpu.pipeline_mode<synchronous>, transform_indices = @transform_1, window_bounds = array<i64: 48, 128>}, {pipeline_mode = #tpu.pipeline_mode<synchronous>, transform_indices = @transform_2, window_bounds = array<i64: 1, 128>}, {transform_indices = @transform_3, window_bounds = array<i64: 512, 128>}]} {
    %c0 = arith.constant 0 : index
    %c0_0 = arith.constant 0 : index
    %0 = vector.load %arg1[%c0, %c0_0] : memref<512x48xbf16, #tpu.memory_space<vmem>>, vector<512x48xbf16>
    %c0_1 = arith.constant 0 : index
    %c0_2 = arith.constant 0 : index
    %1 = vector.load %arg2[%c0_1, %c0_2] : memref<48x128xbf16, #tpu.memory_space<vmem>>, vector<48x128xbf16>
    %cst = arith.constant dense<0.000000e+00> : vector<512x128xf32>
    %2 = tpu.matmul %0, %1, %cst {dimension_numbers = #tpu.dot_dimension_numbers<[1], [0], [0], [1], [0, 0, 1, 1], [], []>} : vector<512x48xbf16>, vector<48x128xbf16>, vector<512x128xf32> -> vector<512x128xf32>
    %c0_3 = arith.constant 0 : index
    %c0_4 = arith.constant 0 : index
    %3 = vector.load %arg3[%c0_3, %c0_4] : memref<1x128xf32, #tpu.memory_space<vmem>>, vector<1x128xf32>
    %4 = vector.broadcast %3 : vector<1x128xf32> to vector<512x128xf32>
    %5 = arith.addf %2, %4 : vector<512x128xf32>
    %cst_5 = arith.constant 0.000000e+00 : f32
    %6 = vector.broadcast %cst_5 : f32 to vector<512x128xf32>
    %7 = arith.cmpf oge, %5, %6 : vector<512x128xf32>
    %cst_6 = arith.constant 2.000000e-01 : f32
    %8 = vector.broadcast %cst_6 : f32 to vector<512x128xf32>
    %9 = arith.mulf %8, %5 : vector<512x128xf32>
    %10 = arith.select %7, %5, %9 : vector<512x128xi1>, vector<512x128xf32>
    %11 = arith.truncf %10 : vector<512x128xf32> to vector<512x128xbf16>
    %c0_7 = arith.constant 0 : index
    %c0_8 = arith.constant 0 : index
    %12 = vector.load %arg4[%c0_7, %c0_8] : memref<512x128xbf16, #tpu.memory_space<vmem>>, vector<512x128xbf16>
    tpu.vector_store %arg4[%c0_7, %c0_8], %11 {strides = array<i32>} : memref<512x128xbf16, #tpu.memory_space<vmem>>, vector<512x128xbf16>,
    return
  }
  func.func @transform_0(%arg0: i32) -> (i32, i32) {
    %c0_i32 = arith.constant 0 : i32
    %c0_i32_0 = arith.constant 0 : i32
    return %arg0, %c0_i32 : i32, i32
  }
  func.func @transform_1(%arg0: i32) -> (i32, i32) {
    %c0_i32 = arith.constant 0 : i32
    %c0_i32_0 = arith.constant 0 : i32
    %c0_i32_1 = arith.constant 0 : i32
    return %c0_i32, %c0_i32_0 : i32, i32
  }
  func.func @transform_2(%arg0: i32) -> (i32, i32) {
    %c0_i32 = arith.constant 0 : i32
    %c0_i32_0 = arith.constant 0 : i32
    %c0_i32_1 = arith.constant 0 : i32
    return %c0_i32, %c0_i32_0 : i32, i32
  }
  func.func @transform_3(%arg0: i32) -> (i32, i32) {
    %c0_i32 = arith.constant 0 : i32
    %c0_i32_0 = arith.constant 0 : i32
    return %arg0, %c0_i32 : i32, i32
  }
}

module attributes {stable_mosaic.version = 11 : i64} {
  func.func @_conv_stats_kernel(%arg0: i32, %arg1: memref<128x256xbf16, #tpu.memory_space<vmem>>, %arg2: memref<256x128xbf16, #tpu.memory_space<vmem>>, %arg3: memref<128x128xbf16, #tpu.memory_space<vmem>>, %arg4: memref<1x2x128xf32, #tpu.memory_space<vmem>>) attributes {dimension_semantics = [#tpu.dimension_semantics<parallel>], iteration_bounds = array<i64: 1>, scalar_prefetch = 0 : i64, scratch_operands = 0 : i64, tpu.core_type = #tpu.core_type<tc>, window_params = [{transform_indices = @transform_0, window_bounds = array<i64: 128, 256>}, {pipeline_mode = #tpu.pipeline_mode<synchronous>, transform_indices = @transform_1, window_bounds = array<i64: 256, 128>}, {transform_indices = @transform_2, window_bounds = array<i64: 128, 128>}, {transform_indices = @transform_3, window_bounds = array<i64: 1, 2, 128>}]} {
    %c0 = arith.constant 0 : index
    %c0_0 = arith.constant 0 : index
    %0 = vector.load %arg1[%c0, %c0_0] : memref<128x256xbf16, #tpu.memory_space<vmem>>, vector<128x256xbf16>
    %c0_1 = arith.constant 0 : index
    %c0_2 = arith.constant 0 : index
    %1 = vector.load %arg2[%c0_1, %c0_2] : memref<256x128xbf16, #tpu.memory_space<vmem>>, vector<256x128xbf16>
    %cst = arith.constant dense<0.000000e+00> : vector<128x128xf32>
    %2 = tpu.matmul %0, %1, %cst {dimension_numbers = #tpu.dot_dimension_numbers<[1], [0], [0], [1], [0, 0, 1, 1], [], []>} : vector<128x256xbf16>, vector<256x128xbf16>, vector<128x128xf32> -> vector<128x128xf32>
    %3 = arith.truncf %2 : vector<128x128xf32> to vector<128x128xbf16>
    %c0_3 = arith.constant 0 : index
    %c0_4 = arith.constant 0 : index
    %4 = vector.load %arg3[%c0_3, %c0_4] : memref<128x128xbf16, #tpu.memory_space<vmem>>, vector<128x128xbf16>
    tpu.vector_store %arg3[%c0_3, %c0_4], %3 {strides = array<i32>} : memref<128x128xbf16, #tpu.memory_space<vmem>>, vector<128x128xbf16>,
    %cst_5 = arith.constant dense<0.000000e+00> : vector<128xf32>
    %5 = vector.multi_reduction <add>, %2, %cst_5 [0] : vector<128x128xf32> to vector<128xf32>
    %6 = vector.shape_cast %5 : vector<128xf32> to vector<1x128xf32>
    %7 = vector.shape_cast %6 : vector<1x128xf32> to vector<1x1x128xf32>
    %c0_6 = arith.constant 0 : index
    %c0_7 = arith.constant 0 : index
    %c0_8 = arith.constant 0 : index
    %8 = vector.load %arg4[%c0_6, %c0_7, %c0_8] : memref<1x2x128xf32, #tpu.memory_space<vmem>>, vector<1x1x128xf32>
    tpu.vector_store %arg4[%c0_6, %c0_7, %c0_8], %7 {strides = array<i32>} : memref<1x2x128xf32, #tpu.memory_space<vmem>>, vector<1x1x128xf32>,
    %9 = arith.mulf %2, %2 : vector<128x128xf32>
    %cst_9 = arith.constant dense<0.000000e+00> : vector<128xf32>
    %10 = vector.multi_reduction <add>, %9, %cst_9 [0] : vector<128x128xf32> to vector<128xf32>
    %11 = vector.shape_cast %10 : vector<128xf32> to vector<1x128xf32>
    %12 = vector.shape_cast %11 : vector<1x128xf32> to vector<1x1x128xf32>
    %c0_10 = arith.constant 0 : index
    %c1 = arith.constant 1 : index
    %c0_11 = arith.constant 0 : index
    %13 = vector.load %arg4[%c0_10, %c1, %c0_11] : memref<1x2x128xf32, #tpu.memory_space<vmem>>, vector<1x1x128xf32>
    tpu.vector_store %arg4[%c0_10, %c1, %c0_11], %12 {strides = array<i32>} : memref<1x2x128xf32, #tpu.memory_space<vmem>>, vector<1x1x128xf32>,
    return
  }
  func.func @transform_0(%arg0: i32) -> (i32, i32) {
    %c0_i32 = arith.constant 0 : i32
    %c0_i32_0 = arith.constant 0 : i32
    return %arg0, %c0_i32 : i32, i32
  }
  func.func @transform_1(%arg0: i32) -> (i32, i32) {
    %c0_i32 = arith.constant 0 : i32
    %c0_i32_0 = arith.constant 0 : i32
    %c0_i32_1 = arith.constant 0 : i32
    return %c0_i32, %c0_i32_0 : i32, i32
  }
  func.func @transform_2(%arg0: i32) -> (i32, i32) {
    %c0_i32 = arith.constant 0 : i32
    %c0_i32_0 = arith.constant 0 : i32
    return %arg0, %c0_i32 : i32, i32
  }
  func.func @transform_3(%arg0: i32) -> (i32, i32, i32) {
    %c0_i32 = arith.constant 0 : i32
    %c0_i32_0 = arith.constant 0 : i32
    %c0_i32_1 = arith.constant 0 : i32
    return %arg0, %c0_i32, %c0_i32_0 : i32, i32, i32
  }
}

module attributes {stable_mosaic.version = 11 : i64} {
  func.func @_bn_lrelu_kernel(%arg0: i32, %arg1: memref<128x128xbf16, #tpu.memory_space<vmem>>, %arg2: memref<1x128xf32, #tpu.memory_space<vmem>>, %arg3: memref<1x128xf32, #tpu.memory_space<vmem>>, %arg4: memref<1x128xf32, #tpu.memory_space<vmem>>, %arg5: memref<1x128xf32, #tpu.memory_space<vmem>>, %arg6: memref<128x128xbf16, #tpu.memory_space<vmem>>) attributes {dimension_semantics = [#tpu.dimension_semantics<parallel>], iteration_bounds = array<i64: 1>, scalar_prefetch = 0 : i64, scratch_operands = 0 : i64, tpu.core_type = #tpu.core_type<tc>, window_params = [{transform_indices = @transform_0, window_bounds = array<i64: 128, 128>}, {pipeline_mode = #tpu.pipeline_mode<synchronous>, transform_indices = @transform_1, window_bounds = array<i64: 1, 128>}, {pipeline_mode = #tpu.pipeline_mode<synchronous>, transform_indices = @transform_2, window_bounds = array<i64: 1, 128>}, {pipeline_mode = #tpu.pipeline_mode<synchronous>, transform_indices = @transform_3, window_bounds = array<i64: 1, 128>}, {pipeline_mode = #tpu.pipeline_mode<synchronous>, transform_indices = @transform_4, window_bounds = array<i64: 1, 128>}, {transform_indices = @transform_5, window_bounds = array<i64: 128, 128>}]} {
    %c0 = arith.constant 0 : index
    %c0_0 = arith.constant 0 : index
    %0 = vector.load %arg2[%c0, %c0_0] : memref<1x128xf32, #tpu.memory_space<vmem>>, vector<1x128xf32>
    %cst = arith.constant 7.812500e-03 : f32
    %1 = vector.broadcast %cst : f32 to vector<1x128xf32>
    %2 = arith.mulf %0, %1 : vector<1x128xf32>
    %c0_1 = arith.constant 0 : index
    %c0_2 = arith.constant 0 : index
    %3 = vector.load %arg3[%c0_1, %c0_2] : memref<1x128xf32, #tpu.memory_space<vmem>>, vector<1x128xf32>
    %cst_3 = arith.constant 7.812500e-03 : f32
    %4 = vector.broadcast %cst_3 : f32 to vector<1x128xf32>
    %5 = arith.mulf %3, %4 : vector<1x128xf32>
    %6 = arith.mulf %2, %2 : vector<1x128xf32>
    %7 = arith.subf %5, %6 : vector<1x128xf32>
    %cst_4 = arith.constant 0.000000e+00 : f32
    %8 = vector.broadcast %cst_4 : f32 to vector<1x128xf32>
    %9 = arith.maximumf %7, %8 : vector<1x128xf32>
    %c0_5 = arith.constant 0 : index
    %c0_6 = arith.constant 0 : index
    %10 = vector.load %arg4[%c0_5, %c0_6] : memref<1x128xf32, #tpu.memory_space<vmem>>, vector<1x128xf32>
    %cst_7 = arith.constant 9.99999974E-6 : f32
    %11 = vector.broadcast %cst_7 : f32 to vector<1x128xf32>
    %12 = arith.addf %9, %11 : vector<1x128xf32>
    %13 = math.rsqrt %12 : vector<1x128xf32>
    %14 = arith.mulf %10, %13 : vector<1x128xf32>
    %c0_8 = arith.constant 0 : index
    %c0_9 = arith.constant 0 : index
    %15 = vector.load %arg5[%c0_8, %c0_9] : memref<1x128xf32, #tpu.memory_space<vmem>>, vector<1x128xf32>
    %16 = arith.mulf %2, %14 : vector<1x128xf32>
    %17 = arith.subf %15, %16 : vector<1x128xf32>
    %c0_10 = arith.constant 0 : index
    %c0_11 = arith.constant 0 : index
    %18 = vector.load %arg1[%c0_10, %c0_11] : memref<128x128xbf16, #tpu.memory_space<vmem>>, vector<128x128xbf16>
    %19 = arith.extf %18 : vector<128x128xbf16> to vector<128x128xf32>
    %20 = vector.broadcast %14 : vector<1x128xf32> to vector<128x128xf32>
    %21 = arith.mulf %19, %20 : vector<128x128xf32>
    %22 = vector.broadcast %17 : vector<1x128xf32> to vector<128x128xf32>
    %23 = arith.addf %21, %22 : vector<128x128xf32>
    %cst_12 = arith.constant 0.000000e+00 : f32
    %24 = vector.broadcast %cst_12 : f32 to vector<128x128xf32>
    %25 = arith.cmpf oge, %23, %24 : vector<128x128xf32>
    %cst_13 = arith.constant 2.000000e-01 : f32
    %26 = vector.broadcast %cst_13 : f32 to vector<128x128xf32>
    %27 = arith.mulf %26, %23 : vector<128x128xf32>
    %28 = arith.select %25, %23, %27 : vector<128x128xi1>, vector<128x128xf32>
    %29 = arith.truncf %28 : vector<128x128xf32> to vector<128x128xbf16>
    %c0_14 = arith.constant 0 : index
    %c0_15 = arith.constant 0 : index
    %30 = vector.load %arg6[%c0_14, %c0_15] : memref<128x128xbf16, #tpu.memory_space<vmem>>, vector<128x128xbf16>
    tpu.vector_store %arg6[%c0_14, %c0_15], %29 {strides = array<i32>} : memref<128x128xbf16, #tpu.memory_space<vmem>>, vector<128x128xbf16>,
    return
  }
  func.func @transform_0(%arg0: i32) -> (i32, i32) {
    %c0_i32 = arith.constant 0 : i32
    %c0_i32_0 = arith.constant 0 : i32
    return %arg0, %c0_i32 : i32, i32
  }
  func.func @transform_1(%arg0: i32) -> (i32, i32) {
    %c0_i32 = arith.constant 0 : i32
    %c0_i32_0 = arith.constant 0 : i32
    %c0_i32_1 = arith.constant 0 : i32
    return %c0_i32, %c0_i32_0 : i32, i32
  }
  func.func @transform_2(%arg0: i32) -> (i32, i32) {
    %c0_i32 = arith.constant 0 : i32
    %c0_i32_0 = arith.constant 0 : i32
    %c0_i32_1 = arith.constant 0 : i32
    return %c0_i32, %c0_i32_0 : i32, i32
  }
  func.func @transform_3(%arg0: i32) -> (i32, i32) {
    %c0_i32 = arith.constant 0 : i32
    %c0_i32_0 = arith.constant 0 : i32
    %c0_i32_1 = arith.constant 0 : i32
    return %c0_i32, %c0_i32_0 : i32, i32
  }
  func.func @transform_4(%arg0: i32) -> (i32, i32) {
    %c0_i32 = arith.constant 0 : i32
    %c0_i32_0 = arith.constant 0 : i32
    %c0_i32_1 = arith.constant 0 : i32
    return %c0_i32, %c0_i32_0 : i32, i32
  }
  func.func @transform_5(%arg0: i32) -> (i32, i32) {
    %c0_i32 = arith.constant 0 : i32
    %c0_i32_0 = arith.constant 0 : i32
    return %arg0, %c0_i32 : i32, i32
  }
}

module attributes {stable_mosaic.version = 11 : i64} {
  func.func @_conv_stats_kernel(%arg0: i32, %arg1: memref<32x512xbf16, #tpu.memory_space<vmem>>, %arg2: memref<512x128xbf16, #tpu.memory_space<vmem>>, %arg3: memref<32x128xbf16, #tpu.memory_space<vmem>>, %arg4: memref<1x2x128xf32, #tpu.memory_space<vmem>>) attributes {dimension_semantics = [#tpu.dimension_semantics<parallel>], iteration_bounds = array<i64: 1>, scalar_prefetch = 0 : i64, scratch_operands = 0 : i64, tpu.core_type = #tpu.core_type<tc>, window_params = [{transform_indices = @transform_0, window_bounds = array<i64: 32, 512>}, {pipeline_mode = #tpu.pipeline_mode<synchronous>, transform_indices = @transform_1, window_bounds = array<i64: 512, 128>}, {transform_indices = @transform_2, window_bounds = array<i64: 32, 128>}, {transform_indices = @transform_3, window_bounds = array<i64: 1, 2, 128>}]} {
    %c0 = arith.constant 0 : index
    %c0_0 = arith.constant 0 : index
    %0 = vector.load %arg1[%c0, %c0_0] : memref<32x512xbf16, #tpu.memory_space<vmem>>, vector<32x512xbf16>
    %c0_1 = arith.constant 0 : index
    %c0_2 = arith.constant 0 : index
    %1 = vector.load %arg2[%c0_1, %c0_2] : memref<512x128xbf16, #tpu.memory_space<vmem>>, vector<512x128xbf16>
    %cst = arith.constant dense<0.000000e+00> : vector<32x128xf32>
    %2 = tpu.matmul %0, %1, %cst {dimension_numbers = #tpu.dot_dimension_numbers<[1], [0], [0], [1], [0, 0, 1, 1], [], []>} : vector<32x512xbf16>, vector<512x128xbf16>, vector<32x128xf32> -> vector<32x128xf32>
    %3 = arith.truncf %2 : vector<32x128xf32> to vector<32x128xbf16>
    %c0_3 = arith.constant 0 : index
    %c0_4 = arith.constant 0 : index
    %4 = vector.load %arg3[%c0_3, %c0_4] : memref<32x128xbf16, #tpu.memory_space<vmem>>, vector<32x128xbf16>
    tpu.vector_store %arg3[%c0_3, %c0_4], %3 {strides = array<i32>} : memref<32x128xbf16, #tpu.memory_space<vmem>>, vector<32x128xbf16>,
    %cst_5 = arith.constant dense<0.000000e+00> : vector<128xf32>
    %5 = vector.multi_reduction <add>, %2, %cst_5 [0] : vector<32x128xf32> to vector<128xf32>
    %6 = vector.shape_cast %5 : vector<128xf32> to vector<1x128xf32>
    %7 = vector.shape_cast %6 : vector<1x128xf32> to vector<1x1x128xf32>
    %c0_6 = arith.constant 0 : index
    %c0_7 = arith.constant 0 : index
    %c0_8 = arith.constant 0 : index
    %8 = vector.load %arg4[%c0_6, %c0_7, %c0_8] : memref<1x2x128xf32, #tpu.memory_space<vmem>>, vector<1x1x128xf32>
    tpu.vector_store %arg4[%c0_6, %c0_7, %c0_8], %7 {strides = array<i32>} : memref<1x2x128xf32, #tpu.memory_space<vmem>>, vector<1x1x128xf32>,
    %9 = arith.mulf %2, %2 : vector<32x128xf32>
    %cst_9 = arith.constant dense<0.000000e+00> : vector<128xf32>
    %10 = vector.multi_reduction <add>, %9, %cst_9 [0] : vector<32x128xf32> to vector<128xf32>
    %11 = vector.shape_cast %10 : vector<128xf32> to vector<1x128xf32>
    %12 = vector.shape_cast %11 : vector<1x128xf32> to vector<1x1x128xf32>
    %c0_10 = arith.constant 0 : index
    %c1 = arith.constant 1 : index
    %c0_11 = arith.constant 0 : index
    %13 = vector.load %arg4[%c0_10, %c1, %c0_11] : memref<1x2x128xf32, #tpu.memory_space<vmem>>, vector<1x1x128xf32>
    tpu.vector_store %arg4[%c0_10, %c1, %c0_11], %12 {strides = array<i32>} : memref<1x2x128xf32, #tpu.memory_space<vmem>>, vector<1x1x128xf32>,
    return
  }
  func.func @transform_0(%arg0: i32) -> (i32, i32) {
    %c0_i32 = arith.constant 0 : i32
    %c0_i32_0 = arith.constant 0 : i32
    return %arg0, %c0_i32 : i32, i32
  }
  func.func @transform_1(%arg0: i32) -> (i32, i32) {
    %c0_i32 = arith.constant 0 : i32
    %c0_i32_0 = arith.constant 0 : i32
    %c0_i32_1 = arith.constant 0 : i32
    return %c0_i32, %c0_i32_0 : i32, i32
  }
  func.func @transform_2(%arg0: i32) -> (i32, i32) {
    %c0_i32 = arith.constant 0 : i32
    %c0_i32_0 = arith.constant 0 : i32
    return %arg0, %c0_i32 : i32, i32
  }
  func.func @transform_3(%arg0: i32) -> (i32, i32, i32) {
    %c0_i32 = arith.constant 0 : i32
    %c0_i32_0 = arith.constant 0 : i32
    %c0_i32_1 = arith.constant 0 : i32
    return %arg0, %c0_i32, %c0_i32_0 : i32, i32, i32
  }
}

module attributes {stable_mosaic.version = 11 : i64} {
  func.func @_bn_lrelu_kernel(%arg0: i32, %arg1: memref<32x128xbf16, #tpu.memory_space<vmem>>, %arg2: memref<1x128xf32, #tpu.memory_space<vmem>>, %arg3: memref<1x128xf32, #tpu.memory_space<vmem>>, %arg4: memref<1x128xf32, #tpu.memory_space<vmem>>, %arg5: memref<1x128xf32, #tpu.memory_space<vmem>>, %arg6: memref<32x128xbf16, #tpu.memory_space<vmem>>) attributes {dimension_semantics = [#tpu.dimension_semantics<parallel>], iteration_bounds = array<i64: 1>, scalar_prefetch = 0 : i64, scratch_operands = 0 : i64, tpu.core_type = #tpu.core_type<tc>, window_params = [{transform_indices = @transform_0, window_bounds = array<i64: 32, 128>}, {pipeline_mode = #tpu.pipeline_mode<synchronous>, transform_indices = @transform_1, window_bounds = array<i64: 1, 128>}, {pipeline_mode = #tpu.pipeline_mode<synchronous>, transform_indices = @transform_2, window_bounds = array<i64: 1, 128>}, {pipeline_mode = #tpu.pipeline_mode<synchronous>, transform_indices = @transform_3, window_bounds = array<i64: 1, 128>}, {pipeline_mode = #tpu.pipeline_mode<synchronous>, transform_indices = @transform_4, window_bounds = array<i64: 1, 128>}, {transform_indices = @transform_5, window_bounds = array<i64: 32, 128>}]} {
    %c0 = arith.constant 0 : index
    %c0_0 = arith.constant 0 : index
    %0 = vector.load %arg2[%c0, %c0_0] : memref<1x128xf32, #tpu.memory_space<vmem>>, vector<1x128xf32>
    %cst = arith.constant 3.125000e-02 : f32
    %1 = vector.broadcast %cst : f32 to vector<1x128xf32>
    %2 = arith.mulf %0, %1 : vector<1x128xf32>
    %c0_1 = arith.constant 0 : index
    %c0_2 = arith.constant 0 : index
    %3 = vector.load %arg3[%c0_1, %c0_2] : memref<1x128xf32, #tpu.memory_space<vmem>>, vector<1x128xf32>
    %cst_3 = arith.constant 3.125000e-02 : f32
    %4 = vector.broadcast %cst_3 : f32 to vector<1x128xf32>
    %5 = arith.mulf %3, %4 : vector<1x128xf32>
    %6 = arith.mulf %2, %2 : vector<1x128xf32>
    %7 = arith.subf %5, %6 : vector<1x128xf32>
    %cst_4 = arith.constant 0.000000e+00 : f32
    %8 = vector.broadcast %cst_4 : f32 to vector<1x128xf32>
    %9 = arith.maximumf %7, %8 : vector<1x128xf32>
    %c0_5 = arith.constant 0 : index
    %c0_6 = arith.constant 0 : index
    %10 = vector.load %arg4[%c0_5, %c0_6] : memref<1x128xf32, #tpu.memory_space<vmem>>, vector<1x128xf32>
    %cst_7 = arith.constant 9.99999974E-6 : f32
    %11 = vector.broadcast %cst_7 : f32 to vector<1x128xf32>
    %12 = arith.addf %9, %11 : vector<1x128xf32>
    %13 = math.rsqrt %12 : vector<1x128xf32>
    %14 = arith.mulf %10, %13 : vector<1x128xf32>
    %c0_8 = arith.constant 0 : index
    %c0_9 = arith.constant 0 : index
    %15 = vector.load %arg5[%c0_8, %c0_9] : memref<1x128xf32, #tpu.memory_space<vmem>>, vector<1x128xf32>
    %16 = arith.mulf %2, %14 : vector<1x128xf32>
    %17 = arith.subf %15, %16 : vector<1x128xf32>
    %c0_10 = arith.constant 0 : index
    %c0_11 = arith.constant 0 : index
    %18 = vector.load %arg1[%c0_10, %c0_11] : memref<32x128xbf16, #tpu.memory_space<vmem>>, vector<32x128xbf16>
    %19 = arith.extf %18 : vector<32x128xbf16> to vector<32x128xf32>
    %20 = vector.broadcast %14 : vector<1x128xf32> to vector<32x128xf32>
    %21 = arith.mulf %19, %20 : vector<32x128xf32>
    %22 = vector.broadcast %17 : vector<1x128xf32> to vector<32x128xf32>
    %23 = arith.addf %21, %22 : vector<32x128xf32>
    %cst_12 = arith.constant 0.000000e+00 : f32
    %24 = vector.broadcast %cst_12 : f32 to vector<32x128xf32>
    %25 = arith.cmpf oge, %23, %24 : vector<32x128xf32>
    %cst_13 = arith.constant 2.000000e-01 : f32
    %26 = vector.broadcast %cst_13 : f32 to vector<32x128xf32>
    %27 = arith.mulf %26, %23 : vector<32x128xf32>
    %28 = arith.select %25, %23, %27 : vector<32x128xi1>, vector<32x128xf32>
    %29 = arith.truncf %28 : vector<32x128xf32> to vector<32x128xbf16>
    %c0_14 = arith.constant 0 : index
    %c0_15 = arith.constant 0 : index
    %30 = vector.load %arg6[%c0_14, %c0_15] : memref<32x128xbf16, #tpu.memory_space<vmem>>, vector<32x128xbf16>
    tpu.vector_store %arg6[%c0_14, %c0_15], %29 {strides = array<i32>} : memref<32x128xbf16, #tpu.memory_space<vmem>>, vector<32x128xbf16>,
    return
  }
  func.func @transform_0(%arg0: i32) -> (i32, i32) {
    %c0_i32 = arith.constant 0 : i32
    %c0_i32_0 = arith.constant 0 : i32
    return %arg0, %c0_i32 : i32, i32
  }
  func.func @transform_1(%arg0: i32) -> (i32, i32) {
    %c0_i32 = arith.constant 0 : i32
    %c0_i32_0 = arith.constant 0 : i32
    %c0_i32_1 = arith.constant 0 : i32
    return %c0_i32, %c0_i32_0 : i32, i32
  }
  func.func @transform_2(%arg0: i32) -> (i32, i32) {
    %c0_i32 = arith.constant 0 : i32
    %c0_i32_0 = arith.constant 0 : i32
    %c0_i32_1 = arith.constant 0 : i32
    return %c0_i32, %c0_i32_0 : i32, i32
  }
  func.func @transform_3(%arg0: i32) -> (i32, i32) {
    %c0_i32 = arith.constant 0 : i32
    %c0_i32_0 = arith.constant 0 : i32
    %c0_i32_1 = arith.constant 0 : i32
    return %c0_i32, %c0_i32_0 : i32, i32
  }
  func.func @transform_4(%arg0: i32) -> (i32, i32) {
    %c0_i32 = arith.constant 0 : i32
    %c0_i32_0 = arith.constant 0 : i32
    %c0_i32_1 = arith.constant 0 : i32
    return %c0_i32, %c0_i32_0 : i32, i32
  }
  func.func @transform_5(%arg0: i32) -> (i32, i32) {
    %c0_i32 = arith.constant 0 : i32
    %c0_i32_0 = arith.constant 0 : i32
    return %arg0, %c0_i32 : i32, i32
  }
}

module attributes {stable_mosaic.version = 11 : i64} {
  func.func @_conv_stats_kernel(%arg0: i32, %arg1: memref<16x1024xbf16, #tpu.memory_space<vmem>>, %arg2: memref<1024x128xbf16, #tpu.memory_space<vmem>>, %arg3: memref<16x128xbf16, #tpu.memory_space<vmem>>, %arg4: memref<1x2x128xf32, #tpu.memory_space<vmem>>) attributes {dimension_semantics = [#tpu.dimension_semantics<parallel>], iteration_bounds = array<i64: 1>, scalar_prefetch = 0 : i64, scratch_operands = 0 : i64, tpu.core_type = #tpu.core_type<tc>, window_params = [{transform_indices = @transform_0, window_bounds = array<i64: 16, 1024>}, {pipeline_mode = #tpu.pipeline_mode<synchronous>, transform_indices = @transform_1, window_bounds = array<i64: 1024, 128>}, {transform_indices = @transform_2, window_bounds = array<i64: 16, 128>}, {transform_indices = @transform_3, window_bounds = array<i64: 1, 2, 128>}]} {
    %c0 = arith.constant 0 : index
    %c0_0 = arith.constant 0 : index
    %0 = vector.load %arg1[%c0, %c0_0] : memref<16x1024xbf16, #tpu.memory_space<vmem>>, vector<16x1024xbf16>
    %c0_1 = arith.constant 0 : index
    %c0_2 = arith.constant 0 : index
    %1 = vector.load %arg2[%c0_1, %c0_2] : memref<1024x128xbf16, #tpu.memory_space<vmem>>, vector<1024x128xbf16>
    %cst = arith.constant dense<0.000000e+00> : vector<16x128xf32>
    %2 = tpu.matmul %0, %1, %cst {dimension_numbers = #tpu.dot_dimension_numbers<[1], [0], [0], [1], [0, 0, 1, 1], [], []>} : vector<16x1024xbf16>, vector<1024x128xbf16>, vector<16x128xf32> -> vector<16x128xf32>
    %3 = arith.truncf %2 : vector<16x128xf32> to vector<16x128xbf16>
    %c0_3 = arith.constant 0 : index
    %c0_4 = arith.constant 0 : index
    %4 = vector.load %arg3[%c0_3, %c0_4] : memref<16x128xbf16, #tpu.memory_space<vmem>>, vector<16x128xbf16>
    tpu.vector_store %arg3[%c0_3, %c0_4], %3 {strides = array<i32>} : memref<16x128xbf16, #tpu.memory_space<vmem>>, vector<16x128xbf16>,
    %cst_5 = arith.constant dense<0.000000e+00> : vector<128xf32>
    %5 = vector.multi_reduction <add>, %2, %cst_5 [0] : vector<16x128xf32> to vector<128xf32>
    %6 = vector.shape_cast %5 : vector<128xf32> to vector<1x128xf32>
    %7 = vector.shape_cast %6 : vector<1x128xf32> to vector<1x1x128xf32>
    %c0_6 = arith.constant 0 : index
    %c0_7 = arith.constant 0 : index
    %c0_8 = arith.constant 0 : index
    %8 = vector.load %arg4[%c0_6, %c0_7, %c0_8] : memref<1x2x128xf32, #tpu.memory_space<vmem>>, vector<1x1x128xf32>
    tpu.vector_store %arg4[%c0_6, %c0_7, %c0_8], %7 {strides = array<i32>} : memref<1x2x128xf32, #tpu.memory_space<vmem>>, vector<1x1x128xf32>,
    %9 = arith.mulf %2, %2 : vector<16x128xf32>
    %cst_9 = arith.constant dense<0.000000e+00> : vector<128xf32>
    %10 = vector.multi_reduction <add>, %9, %cst_9 [0] : vector<16x128xf32> to vector<128xf32>
    %11 = vector.shape_cast %10 : vector<128xf32> to vector<1x128xf32>
    %12 = vector.shape_cast %11 : vector<1x128xf32> to vector<1x1x128xf32>
    %c0_10 = arith.constant 0 : index
    %c1 = arith.constant 1 : index
    %c0_11 = arith.constant 0 : index
    %13 = vector.load %arg4[%c0_10, %c1, %c0_11] : memref<1x2x128xf32, #tpu.memory_space<vmem>>, vector<1x1x128xf32>
    tpu.vector_store %arg4[%c0_10, %c1, %c0_11], %12 {strides = array<i32>} : memref<1x2x128xf32, #tpu.memory_space<vmem>>, vector<1x1x128xf32>,
    return
  }
  func.func @transform_0(%arg0: i32) -> (i32, i32) {
    %c0_i32 = arith.constant 0 : i32
    %c0_i32_0 = arith.constant 0 : i32
    return %arg0, %c0_i32 : i32, i32
  }
  func.func @transform_1(%arg0: i32) -> (i32, i32) {
    %c0_i32 = arith.constant 0 : i32
    %c0_i32_0 = arith.constant 0 : i32
    %c0_i32_1 = arith.constant 0 : i32
    return %c0_i32, %c0_i32_0 : i32, i32
  }
  func.func @transform_2(%arg0: i32) -> (i32, i32) {
    %c0_i32 = arith.constant 0 : i32
    %c0_i32_0 = arith.constant 0 : i32
    return %arg0, %c0_i32 : i32, i32
  }
  func.func @transform_3(%arg0: i32) -> (i32, i32, i32) {
    %c0_i32 = arith.constant 0 : i32
    %c0_i32_0 = arith.constant 0 : i32
    %c0_i32_1 = arith.constant 0 : i32
    return %arg0, %c0_i32, %c0_i32_0 : i32, i32, i32
  }
}

module attributes {stable_mosaic.version = 11 : i64} {
  func.func @_bn_lrelu_kernel(%arg0: i32, %arg1: memref<16x128xbf16, #tpu.memory_space<vmem>>, %arg2: memref<1x128xf32, #tpu.memory_space<vmem>>, %arg3: memref<1x128xf32, #tpu.memory_space<vmem>>, %arg4: memref<1x128xf32, #tpu.memory_space<vmem>>, %arg5: memref<1x128xf32, #tpu.memory_space<vmem>>, %arg6: memref<16x128xbf16, #tpu.memory_space<vmem>>) attributes {dimension_semantics = [#tpu.dimension_semantics<parallel>], iteration_bounds = array<i64: 1>, scalar_prefetch = 0 : i64, scratch_operands = 0 : i64, tpu.core_type = #tpu.core_type<tc>, window_params = [{transform_indices = @transform_0, window_bounds = array<i64: 16, 128>}, {pipeline_mode = #tpu.pipeline_mode<synchronous>, transform_indices = @transform_1, window_bounds = array<i64: 1, 128>}, {pipeline_mode = #tpu.pipeline_mode<synchronous>, transform_indices = @transform_2, window_bounds = array<i64: 1, 128>}, {pipeline_mode = #tpu.pipeline_mode<synchronous>, transform_indices = @transform_3, window_bounds = array<i64: 1, 128>}, {pipeline_mode = #tpu.pipeline_mode<synchronous>, transform_indices = @transform_4, window_bounds = array<i64: 1, 128>}, {transform_indices = @transform_5, window_bounds = array<i64: 16, 128>}]} {
    %c0 = arith.constant 0 : index
    %c0_0 = arith.constant 0 : index
    %0 = vector.load %arg2[%c0, %c0_0] : memref<1x128xf32, #tpu.memory_space<vmem>>, vector<1x128xf32>
    %cst = arith.constant 1.250000e-01 : f32
    %1 = vector.broadcast %cst : f32 to vector<1x128xf32>
    %2 = arith.mulf %0, %1 : vector<1x128xf32>
    %c0_1 = arith.constant 0 : index
    %c0_2 = arith.constant 0 : index
    %3 = vector.load %arg3[%c0_1, %c0_2] : memref<1x128xf32, #tpu.memory_space<vmem>>, vector<1x128xf32>
    %cst_3 = arith.constant 1.250000e-01 : f32
    %4 = vector.broadcast %cst_3 : f32 to vector<1x128xf32>
    %5 = arith.mulf %3, %4 : vector<1x128xf32>
    %6 = arith.mulf %2, %2 : vector<1x128xf32>
    %7 = arith.subf %5, %6 : vector<1x128xf32>
    %cst_4 = arith.constant 0.000000e+00 : f32
    %8 = vector.broadcast %cst_4 : f32 to vector<1x128xf32>
    %9 = arith.maximumf %7, %8 : vector<1x128xf32>
    %c0_5 = arith.constant 0 : index
    %c0_6 = arith.constant 0 : index
    %10 = vector.load %arg4[%c0_5, %c0_6] : memref<1x128xf32, #tpu.memory_space<vmem>>, vector<1x128xf32>
    %cst_7 = arith.constant 9.99999974E-6 : f32
    %11 = vector.broadcast %cst_7 : f32 to vector<1x128xf32>
    %12 = arith.addf %9, %11 : vector<1x128xf32>
    %13 = math.rsqrt %12 : vector<1x128xf32>
    %14 = arith.mulf %10, %13 : vector<1x128xf32>
    %c0_8 = arith.constant 0 : index
    %c0_9 = arith.constant 0 : index
    %15 = vector.load %arg5[%c0_8, %c0_9] : memref<1x128xf32, #tpu.memory_space<vmem>>, vector<1x128xf32>
    %16 = arith.mulf %2, %14 : vector<1x128xf32>
    %17 = arith.subf %15, %16 : vector<1x128xf32>
    %c0_10 = arith.constant 0 : index
    %c0_11 = arith.constant 0 : index
    %18 = vector.load %arg1[%c0_10, %c0_11] : memref<16x128xbf16, #tpu.memory_space<vmem>>, vector<16x128xbf16>
    %19 = arith.extf %18 : vector<16x128xbf16> to vector<16x128xf32>
    %20 = vector.broadcast %14 : vector<1x128xf32> to vector<16x128xf32>
    %21 = arith.mulf %19, %20 : vector<16x128xf32>
    %22 = vector.broadcast %17 : vector<1x128xf32> to vector<16x128xf32>
    %23 = arith.addf %21, %22 : vector<16x128xf32>
    %cst_12 = arith.constant 0.000000e+00 : f32
    %24 = vector.broadcast %cst_12 : f32 to vector<16x128xf32>
    %25 = arith.cmpf oge, %23, %24 : vector<16x128xf32>
    %cst_13 = arith.constant 2.000000e-01 : f32
    %26 = vector.broadcast %cst_13 : f32 to vector<16x128xf32>
    %27 = arith.mulf %26, %23 : vector<16x128xf32>
    %28 = arith.select %25, %23, %27 : vector<16x128xi1>, vector<16x128xf32>
    %29 = arith.truncf %28 : vector<16x128xf32> to vector<16x128xbf16>
    %c0_14 = arith.constant 0 : index
    %c0_15 = arith.constant 0 : index
    %30 = vector.load %arg6[%c0_14, %c0_15] : memref<16x128xbf16, #tpu.memory_space<vmem>>, vector<16x128xbf16>
    tpu.vector_store %arg6[%c0_14, %c0_15], %29 {strides = array<i32>} : memref<16x128xbf16, #tpu.memory_space<vmem>>, vector<16x128xbf16>,
    return
  }
  func.func @transform_0(%arg0: i32) -> (i32, i32) {
    %c0_i32 = arith.constant 0 : i32
    %c0_i32_0 = arith.constant 0 : i32
    return %arg0, %c0_i32 : i32, i32
  }
  func.func @transform_1(%arg0: i32) -> (i32, i32) {
    %c0_i32 = arith.constant 0 : i32
    %c0_i32_0 = arith.constant 0 : i32
    %c0_i32_1 = arith.constant 0 : i32
    return %c0_i32, %c0_i32_0 : i32, i32
  }
  func.func @transform_2(%arg0: i32) -> (i32, i32) {
    %c0_i32 = arith.constant 0 : i32
    %c0_i32_0 = arith.constant 0 : i32
    %c0_i32_1 = arith.constant 0 : i32
    return %c0_i32, %c0_i32_0 : i32, i32
  }
  func.func @transform_3(%arg0: i32) -> (i32, i32) {
    %c0_i32 = arith.constant 0 : i32
    %c0_i32_0 = arith.constant 0 : i32
    %c0_i32_1 = arith.constant 0 : i32
    return %c0_i32, %c0_i32_0 : i32, i32
  }
  func.func @transform_4(%arg0: i32) -> (i32, i32) {
    %c0_i32 = arith.constant 0 : i32
    %c0_i32_0 = arith.constant 0 : i32
    %c0_i32_1 = arith.constant 0 : i32
    return %c0_i32, %c0_i32_0 : i32, i32
  }
  func.func @transform_5(%arg0: i32) -> (i32, i32) {
    %c0_i32 = arith.constant 0 : i32
    %c0_i32_0 = arith.constant 0 : i32
    return %arg0, %c0_i32 : i32, i32
  }
}

module attributes {stable_mosaic.version = 11 : i64} {
  func.func @_conv_bias_act_kernel(%arg0: i32, %arg1: memref<16x2048xbf16, #tpu.memory_space<vmem>>, %arg2: memref<2048x128xbf16, #tpu.memory_space<vmem>>, %arg3: memref<1x128xf32, #tpu.memory_space<vmem>>, %arg4: memref<16x128xf32, #tpu.memory_space<vmem>>) attributes {dimension_semantics = [#tpu.dimension_semantics<parallel>], iteration_bounds = array<i64: 1>, scalar_prefetch = 0 : i64, scratch_operands = 0 : i64, tpu.core_type = #tpu.core_type<tc>, window_params = [{transform_indices = @transform_0, window_bounds = array<i64: 16, 2048>}, {pipeline_mode = #tpu.pipeline_mode<synchronous>, transform_indices = @transform_1, window_bounds = array<i64: 2048, 128>}, {pipeline_mode = #tpu.pipeline_mode<synchronous>, transform_indices = @transform_2, window_bounds = array<i64: 1, 128>}, {transform_indices = @transform_3, window_bounds = array<i64: 16, 128>}]} {
    %c0 = arith.constant 0 : index
    %c0_0 = arith.constant 0 : index
    %0 = vector.load %arg1[%c0, %c0_0] : memref<16x2048xbf16, #tpu.memory_space<vmem>>, vector<16x2048xbf16>
    %c0_1 = arith.constant 0 : index
    %c0_2 = arith.constant 0 : index
    %1 = vector.load %arg2[%c0_1, %c0_2] : memref<2048x128xbf16, #tpu.memory_space<vmem>>, vector<2048x128xbf16>
    %cst = arith.constant dense<0.000000e+00> : vector<16x128xf32>
    %2 = tpu.matmul %0, %1, %cst {dimension_numbers = #tpu.dot_dimension_numbers<[1], [0], [0], [1], [0, 0, 1, 1], [], []>} : vector<16x2048xbf16>, vector<2048x128xbf16>, vector<16x128xf32> -> vector<16x128xf32>
    %c0_3 = arith.constant 0 : index
    %c0_4 = arith.constant 0 : index
    %3 = vector.load %arg3[%c0_3, %c0_4] : memref<1x128xf32, #tpu.memory_space<vmem>>, vector<1x128xf32>
    %4 = vector.broadcast %3 : vector<1x128xf32> to vector<16x128xf32>
    %5 = arith.addf %2, %4 : vector<16x128xf32>
    %c0_5 = arith.constant 0 : index
    %c0_6 = arith.constant 0 : index
    %6 = vector.load %arg4[%c0_5, %c0_6] : memref<16x128xf32, #tpu.memory_space<vmem>>, vector<16x128xf32>
    tpu.vector_store %arg4[%c0_5, %c0_6], %5 {strides = array<i32>} : memref<16x128xf32, #tpu.memory_space<vmem>>, vector<16x128xf32>,
    return
  }
  func.func @transform_0(%arg0: i32) -> (i32, i32) {
    %c0_i32 = arith.constant 0 : i32
    %c0_i32_0 = arith.constant 0 : i32
    return %arg0, %c0_i32 : i32, i32
  }
  func.func @transform_1(%arg0: i32) -> (i32, i32) {
    %c0_i32 = arith.constant 0 : i32
    %c0_i32_0 = arith.constant 0 : i32
    %c0_i32_1 = arith.constant 0 : i32
    return %c0_i32, %c0_i32_0 : i32, i32
  }
  func.func @transform_2(%arg0: i32) -> (i32, i32) {
    %c0_i32 = arith.constant 0 : i32
    %c0_i32_0 = arith.constant 0 : i32
    %c0_i32_1 = arith.constant 0 : i32
    return %c0_i32, %c0_i32_0 : i32, i32
  }
  func.func @transform_3(%arg0: i32) -> (i32, i32) {
    %c0_i32 = arith.constant 0 : i32
    %c0_i32_0 = arith.constant 0 : i32
    return %arg0, %c0_i32 : i32, i32
  }
}

</mosaic_0001>

<llo_original>
// kernel: _lambda_.8
$region0: #{_lambda_.8}
  #allocation0 [shape = 'u32[]', space=smem, size = 0x4, offset = 0x4, fixed_abs, tag = 'smem constant byte address 0x4 - core index']
  #allocation1 [shape = 'u32[144,128]{1,0:T(1,128)}', space=vmem, size = 0x12000, scoped, tag = 'internal scratch']
  %s0 = inlined_call_operand.vmem [shape: bf16[512,48], index: 0, kind: input, shape index: {}]
  %s1 = inlined_call_operand.vmem [shape: bf16[48,128], index: 1, kind: input, shape index: {}]
  %s2 = inlined_call_operand.vmem [shape: f32[1,128], index: 2, kind: input, shape index: {}]
  %s3 = inlined_call_operand.vmem [shape: bf16[512,128], index: 3, kind: output, shape index: {}]
  %s4 = sld [smem:[#allocation0]]
  $region22: #{_lambda_.8} parent=0
    _
  %s6 = ssub.s32 1, %s4
  %s7 = scalar_select 0, %s6, %s4
  // Predicated region
  $region2: #{_lambda_.8} parent=0 // pred_check
    _
  $region3: #{_lambda_.8} parent=0 // pred_check_branch
    %9 = sbr.rel (0) target = $region5
  $region4: #{_lambda_.8} parent=0 // pred_region
    _
  $region5: #{_lambda_.8} parent=0 // pred_fallthru
    _
  // Predicated region
  $region6: #{_lambda_.8} parent=0 // pred_check
    _
  $region7: #{_lambda_.8} parent=0 // pred_check_branch
    %11 = sbr.rel (0) target = $region9
  $region8: #{_lambda_.8} parent=0 // pred_region
    _
  $region9: #{_lambda_.8} parent=0 // pred_fallthru
    _
  // Predicated region
  $region10: #{_lambda_.8} parent=0 // pred_check
    _
  $region11: #{_lambda_.8} parent=0 // pred_check_branch
    %13 = sbr.rel (0) target = $region13
  $region12: #{_lambda_.8} parent=0 // pred_region
    _
  $region13: #{_lambda_.8} parent=0 // pred_fallthru
    _
  %v15 = vld [vmem:[%s0] sm:$0xf]
  %v16 = vld [vmem:[%s0 + $0x4] sm:$0xf]
  %v17 = vld [vmem:[%s0 + $0x8] sm:$0xf]
  %v18 = vld [vmem:[%s0 + $0xc] sm:$0xf]
  %v19 = vld [vmem:[%s0 + $0x10] sm:$0xf]
  %v20 = vld [vmem:[%s0 + $0x14] sm:$0xf]
  %v21 = vld [vmem:[%s0 + $0x18] sm:$0xf]
  %v22 = vld [vmem:[%s0 + $0x1c] sm:$0xf]
  %v23 = vld [vmem:[%s0 + $0x20] sm:$0xf]
  %v24 = vld [vmem:[%s0 + $0x24] sm:$0xf]
  %v25 = vld [vmem:[%s0 + $0x28] sm:$0xf]
  %v26 = vld [vmem:[%s0 + $0x2c] sm:$0xf]
  %v27 = vld [vmem:[%s0 + $0x30] sm:$0xf]
  %v28 = vld [vmem:[%s0 + $0x34] sm:$0xf]
  %v29 = vld [vmem:[%s0 + $0x38] sm:$0xf]
  %v30 = vld [vmem:[%s0 + $0x3c] sm:$0xf]
  %v31 = vld [vmem:[%s0 + $0x40] sm:$0xf]
  %v32 = vld [vmem:[%s0 + $0x44] sm:$0xf]
  %v33 = vld [vmem:[%s0 + $0x48] sm:$0xf]
  %v34 = vld [vmem:[%s0 + $0x4c] sm:$0xf]
  %v35 = vld [vmem:[%s0 + $0x50] sm:$0xf]
  %v36 = vld [vmem:[%s0 + $0x54] sm:$0xf]
  %v37 = vld [vmem:[%s0 + $0x58] sm:$0xf]
  %v38 = vld [vmem:[%s0 + $0x5c] sm:$0xf]
  %v39 = vld [vmem:[%s0 + $0x60] sm:$0xf]
  %v40 = vld [vmem:[%s0 + $0x64] sm:$0xf]
  %v41 = vld [vmem:[%s0 + $0x68] sm:$0xf]
  %v42 = vld [vmem:[%s0 + $0x6c] sm:$0xf]
  %v43 = vld [vmem:[%s0 + $0x70] sm:$0xf]
  %v44 = vld [vmem:[%s0 + $0x74] sm:$0xf]
  %v45 = vld [vmem:[%s0 + $0x78] sm:$0xf]
  %v46 = vld [vmem:[%s0 + $0x7c] sm:$0xf]
  %v47 = vld [vmem:[%s0 + $0x80] sm:$0xf]
  %v48 = vld [vmem:[%s0 + $0x84] sm:$0xf]
  %v49 = vld [vmem:[%s0 + $0x88] sm:$0xf]
  %v50 = vld [vmem:[%s0 + $0x8c] sm:$0xf]
  %v51 = vld [vmem:[%s0 + $0x90] sm:$0xf]
  %v52 = vld [vmem:[%s0 + $0x94] sm:$0xf]
  %v53 = vld [vmem:[%s0 + $0x98] sm:$0xf]
  %v54 = vld [vmem:[%s0 + $0x9c] sm:$0xf]
  %v55 = vld [vmem:[%s0 + $0xa0] sm:$0xf]
  %v56 = vld [vmem:[%s0 + $0xa4] sm:$0xf]
  %v57 = vld [vmem:[%s0 + $0xa8] sm:$0xf]
  %v58 = vld [vmem:[%s0 + $0xac] sm:$0xf]
  %v59 = vld [vmem:[%s0 + $0xb0] sm:$0xf]
  %v60 = vld [vmem:[%s0 + $0xb4] sm:$0xf]
  %v61 = vld [vmem:[%s0 + $0xb8] sm:$0xf]
  %v62 = vld [vmem:[%s0 + $0xbc] sm:$0xf]
  %v63 = vld [vmem:[%s0 + $0xc0] sm:$0xf]
  %v64 = vld [vmem:[%s0 + $0xc4] sm:$0xf]
  %v65 = vld [vmem:[%s0 + $0xc8] sm:$0xf]
  %v66 = vld [vmem:[%s0 + $0xcc] sm:$0xf]
  %v67 = vld [vmem:[%s0 + $0xd0] sm:$0xf]
  %v68 = vld [vmem:[%s0 + $0xd4] sm:$0xf]
  %v69 = vld [vmem:[%s0 + $0xd8] sm:$0xf]
  %v70 = vld [vmem:[%s0 + $0xdc] sm:$0xf]
  %v71 = vld [vmem:[%s0 + $0xe0] sm:$0xf]
  %v72 = vld [vmem:[%s0 + $0xe4] sm:$0xf]
  %v73 = vld [vmem:[%s0 + $0xe8] sm:$0xf]
  %v74 = vld [vmem:[%s0 + $0xec] sm:$0xf]
  %v75 = vld [vmem:[%s0 + $0xf0] sm:$0xf]
  %v76 = vld [vmem:[%s0 + $0xf4] sm:$0xf]
  %v77 = vld [vmem:[%s0 + $0xf8] sm:$0xf]
  %v78 = vld [vmem:[%s0 + $0xfc] sm:$0xf]
  %v79 = vld [vmem:[%s1] sm:$0xf]
  %v80 = vld [vmem:[%s1 + $0x4] sm:$0xf]
  %v81 = vld [vmem:[%s1 + $0x8] sm:$0xf]
  %v82 = vld [vmem:[%s1 + $0xc] sm:$0xf]
  %v83 = vld [vmem:[%s1 + $0x10] sm:$0xf]
  %v84 = vld [vmem:[%s1 + $0x14] sm:$0xf]
  %v85 = vld [vmem:[%s2] sm:$0x1]
  %v87 = vlaneseq
  %v88 = vshrl.u32 %v87, 7
  %v89 = vsub.s32 0, %v88
  %v90 = vrot.slane %v85, %v89
  %v156 = vunpack.c.l.b16 %v15
  %v157 = vunpack.c.l.b16 %v16
  %v158 = vunpack.c.l.b16 %v17
  %v159 = vunpack.c.l.b16 %v18
  %v160 = vunpack.c.l.b16 %v19
  %v161 = vunpack.c.l.b16 %v20
  %v162 = vunpack.c.l.b16 %v21
  %v163 = vunpack.c.l.b16 %v22
  %v164 = vunpack.c.l.b16 %v23
  %v165 = vunpack.c.l.b16 %v24
  %v166 = vunpack.c.l.b16 %v25
  %v167 = vunpack.c.l.b16 %v26
  %v168 = vunpack.c.l.b16 %v27
  %v169 = vunpack.c.l.b16 %v28
  %v170 = vunpack.c.l.b16 %v29
  %v171 = vunpack.c.l.b16 %v30
  %v172 = vunpack.c.l.b16 %v31
  %v173 = vunpack.c.l.b16 %v32
  %v174 = vunpack.c.l.b16 %v33
  %v175 = vunpack.c.l.b16 %v34
  %v176 = vunpack.c.l.b16 %v35
  %v177 = vunpack.c.l.b16 %v36
  %v178 = vunpack.c.l.b16 %v37
  %v179 = vunpack.c.l.b16 %v38
  %v180 = vunpack.c.l.b16 %v39
  %v181 = vunpack.c.l.b16 %v40
  %v182 = vunpack.c.l.b16 %v41
  %v183 = vunpack.c.l.b16 %v42
  %v184 = vunpack.c.l.b16 %v43
  %v185 = vunpack.c.l.b16 %v44
  %v186 = vunpack.c.l.b16 %v45
  %v187 = vunpack.c.l.b16 %v46
  %v188 = vunpack.c.l.b16 %v47
  %v189 = vunpack.c.l.b16 %v48
  %v190 = vunpack.c.l.b16 %v49
  %v191 = vunpack.c.l.b16 %v50
  %v192 = vunpack.c.l.b16 %v51
  %v193 = vunpack.c.l.b16 %v52
  %v194 = vunpack.c.l.b16 %v53
  %v195 = vunpack.c.l.b16 %v54
  %v196 = vunpack.c.l.b16 %v55
  %v197 = vunpack.c.l.b16 %v56
  %v198 = vunpack.c.l.b16 %v57
  %v199 = vunpack.c.l.b16 %v58
  %v200 = vunpack.c.l.b16 %v59
  %v201 = vunpack.c.l.b16 %v60
  %v202 = vunpack.c.l.b16 %v61
  %v203 = vunpack.c.l.b16 %v62
  %v204 = vunpack.c.l.b16 %v63
  %v205 = vunpack.c.l.b16 %v64
  %v206 = vunpack.c.l.b16 %v65
  %v207 = vunpack.c.l.b16 %v66
  %v208 = vunpack.c.l.b16 %v67
  %v209 = vunpack.c.l.b16 %v68
  %v210 = vunpack.c.l.b16 %v69
  %v211 = vunpack.c.l.b16 %v70
  %v212 = vunpack.c.l.b16 %v71
  %v213 = vunpack.c.l.b16 %v72
  %v214 = vunpack.c.l.b16 %v73
  %v215 = vunpack.c.l.b16 %v74
  %v216 = vunpack.c.l.b16 %v75
  %v217 = vunpack.c.l.b16 %v76
  %v218 = vunpack.c.l.b16 %v77
  %v219 = vunpack.c.l.b16 %v78
  %v220 = vpack.c.b16 %v157, %v156
  %v221 = vpack.c.b16 %v159, %v158
  %v222 = vpack.c.b16 %v161, %v160
  %v223 = vpack.c.b16 %v163, %v162
  %v224 = vpack.c.b16 %v165, %v164
  %v225 = vpack.c.b16 %v167, %v166
  %v226 = vpack.c.b16 %v169, %v168
  %v227 = vpack.c.b16 %v171, %v170
  %v228 = vpack.c.b16 %v173, %v172
  %v229 = vpack.c.b16 %v175, %v174
  %v230 = vpack.c.b16 %v177, %v176
  %v231 = vpack.c.b16 %v179, %v178
  %v232 = vpack.c.b16 %v181, %v180
  %v233 = vpack.c.b16 %v183, %v182
  %v234 = vpack.c.b16 %v185, %v184
  %v235 = vpack.c.b16 %v187, %v186
  %v236 = vpack.c.b16 %v189, %v188
  %v237 = vpack.c.b16 %v191, %v190
  %v238 = vpack.c.b16 %v193, %v192
  %v239 = vpack.c.b16 %v195, %v194
  %v240 = vpack.c.b16 %v197, %v196
  %v241 = vpack.c.b16 %v199, %v198
  %v242 = vpack.c.b16 %v201, %v200
  %v243 = vpack.c.b16 %v203, %v202
  %v244 = vpack.c.b16 %v205, %v204
  %v245 = vpack.c.b16 %v207, %v206
  %v246 = vpack.c.b16 %v209, %v208
  %v247 = vpack.c.b16 %v211, %v210
  %v248 = vpack.c.b16 %v213, %v212
  %v249 = vpack.c.b16 %v215, %v214
  %v250 = vpack.c.b16 %v217, %v216
  %v251 = vpack.c.b16 %v219, %v218
  %v258 = vunpack.c.l.b16 %v79
  %v259 = vunpack.c.l.b16 %v80
  %v260 = vunpack.c.l.b16 %v81
  %v261 = vunpack.c.l.b16 %v82
  %v262 = vunpack.c.l.b16 %v83
  %v263 = vunpack.c.l.b16 %v84
  %v264 = vpack.c.b16 %v259, %v258
  %v265 = vpack.c.b16 %v261, %v260
  %v266 = vpack.c.b16 %v263, %v262
  %vm270 = vcmask 392192
  %v272 = vsel %vm270, %v220, 0
  %v275 = vsel %vm270, %v221, 0
  %v278 = vsel %vm270, %v222, 0
  %v281 = vsel %vm270, %v223, 0
  %v284 = vsel %vm270, %v224, 0
  %v287 = vsel %vm270, %v225, 0
  %v290 = vsel %vm270, %v226, 0
  %v293 = vsel %vm270, %v227, 0
  %v296 = vsel %vm270, %v228, 0
  %v299 = vsel %vm270, %v229, 0
  %v302 = vsel %vm270, %v230, 0
  %v305 = vsel %vm270, %v231, 0
  %v308 = vsel %vm270, %v232, 0
  %v311 = vsel %vm270, %v233, 0
  %v314 = vsel %vm270, %v234, 0
  %v317 = vsel %vm270, %v235, 0
  %v320 = vsel %vm270, %v236, 0
  %v323 = vsel %vm270, %v237, 0
  %v326 = vsel %vm270, %v238, 0
  %v329 = vsel %vm270, %v239, 0
  %v332 = vsel %vm270, %v240, 0
  %v335 = vsel %vm270, %v241, 0
  %v338 = vsel %vm270, %v242, 0
  %v341 = vsel %vm270, %v243, 0
  %v344 = vsel %vm270, %v244, 0
  %v347 = vsel %vm270, %v245, 0
  %v350 = vsel %vm270, %v246, 0
  %v353 = vsel %vm270, %v247, 0
  %v356 = vsel %vm270, %v248, 0
  %v359 = vsel %vm270, %v249, 0
  %v362 = vsel %vm270, %v250, 0
  %v365 = vsel %vm270, %v251, 0
  %367 = vmatprep.subr.bf16.mxu0 0
  %368 = vmatpush1.bf16.msra.mxu0 %v264
  %369 = vmatprep.subr.bf16.mxu0 0
  %370 = vmatpush1.bf16.msra.mxu0 %v265
  %371 = vmatprep.subr.bf16.mxu0 0
  %372 = vmatpush1.bf16.msra.mxu0 %v266
  %373 = vmatprep.subr.bf16.mxu0 0
  %374 = vmatpush1.bf16.msra.mxu0 0
  %375 = vmatprep.subr.bf16.mxu0 0
  %376 = vmatpush1.bf16.msra.mxu0 0
  %377 = vmatprep.subr.bf16.mxu0 0
  %378 = vmatpush1.bf16.msra.mxu0 0
  %379 = vmatprep.subr.bf16.mxu0 0
  %380 = vmatpush1.bf16.msra.mxu0 0
  %381 = vmatprep.subr.bf16.mxu0 0
  %382 = vmatpush1.bf16.msra.mxu0 0
  %383 = vmatprep.subr.bf16.mxu0 0
  %384 = vmatpush1.bf16.msra.mxu0 0
  %385 = vmatprep.subr.bf16.mxu0 0
  %386 = vmatpush1.bf16.msra.mxu0 0
  %387 = vmatprep.subr.bf16.mxu0 0
  %388 = vmatpush1.bf16.msra.mxu0 0
  %389 = vmatprep.subr.bf16.mxu0 0
  %390 = vmatpush1.bf16.msra.mxu0 0
  %391 = vmatprep.subr.bf16.mxu0 0
  %392 = vmatpush1.bf16.msra.mxu0 0
  %393 = vmatprep.subr.bf16.mxu0 0
  %394 = vmatpush1.bf16.msra.mxu0 0
  %395 = vmatprep.subr.bf16.mxu0 0
  %396 = vmatpush1.bf16.msra.mxu0 0
  %397 = vmatprep.subr.bf16.mxu0 0
  %398 = vmatpush1.bf16.msra.mxu0 0
  %399 = vmatprep.mubr.bf16.mxu0 0
  %400 = vmatmul.mubr.bf16.gmra.mrb[0].mxu0 %v272
  %v401 = vpop.f32.mrb[0].mxu0
  %v402 = vadd.f32 %v90, %v401
  %v403 = vpop.f32.mrb[0].mxu0
  %v404 = vpop.f32.mrb[0].mxu0
  %v405 = vadd.f32 %v90, %v404
  %v406 = vpop.f32.mrb[0].mxu0
  %407 = vmatprep.mubr.bf16.mxu0 0
  %408 = vmatmul.mubr.bf16.gmra.mrb[0].mxu0 %v275
  %v409 = vpop.f32.mrb[0].mxu0
  %v410 = vadd.f32 %v90, %v409
  %v411 = vpop.f32.mrb[0].mxu0
  %v412 = vpop.f32.mrb[0].mxu0
  %v413 = vadd.f32 %v90, %v412
  %v414 = vpop.f32.mrb[0].mxu0
  %415 = vmatprep.mubr.bf16.mxu0 0
  %416 = vmatmul.mubr.bf16.gmra.mrb[0].mxu0 %v278
  %v417 = vpop.f32.mrb[0].mxu0
  %v418 = vadd.f32 %v90, %v417
  %v419 = vpop.f32.mrb[0].mxu0
  %v420 = vpop.f32.mrb[0].mxu0
  %v421 = vadd.f32 %v90, %v420
  %v422 = vpop.f32.mrb[0].mxu0
  %423 = vmatprep.mubr.bf16.mxu0 0
  %424 = vmatmul.mubr.bf16.gmra.mrb[0].mxu0 %v281
  %v425 = vpop.f32.mrb[0].mxu0
  %v426 = vadd.f32 %v90, %v425
  %v427 = vpop.f32.mrb[0].mxu0
  %v428 = vpop.f32.mrb[0].mxu0
  %v429 = vadd.f32 %v90, %v428
  %v430 = vpop.f32.mrb[0].mxu0
  %431 = vmatprep.mubr.bf16.mxu0 0
  %432 = vmatmul.mubr.bf16.gmra.mrb[0].mxu0 %v284
  %v433 = vpop.f32.mrb[0].mxu0
  %v434 = vadd.f32 %v90, %v433
  %v435 = vpop.f32.mrb[0].mxu0
  %v436 = vpop.f32.mrb[0].mxu0
  %v437 = vadd.f32 %v90, %v436
  %v438 = vpop.f32.mrb[0].mxu0
  %439 = vmatprep.mubr.bf16.mxu0 0
  %440 = vmatmul.mubr.bf16.gmra.mrb[0].mxu0 %v287
  %v441 = vpop.f32.mrb[0].mxu0
  %v442 = vadd.f32 %v90, %v441
  %v443 = vpop.f32.mrb[0].mxu0
  %v444 = vpop.f32.mrb[0].mxu0
  %v445 = vadd.f32 %v90, %v444
  %v446 = vpop.f32.mrb[0].mxu0
  %447 = vmatprep.mubr.bf16.mxu0 0
  %448 = vmatmul.mubr.bf16.gmra.mrb[0].mxu0 %v290
  %v449 = vpop.f32.mrb[0].mxu0
  %v450 = vadd.f32 %v90, %v449
  %v451 = vpop.f32.mrb[0].mxu0
  %v452 = vpop.f32.mrb[0].mxu0
  %v453 = vadd.f32 %v90, %v452
  %v454 = vpop.f32.mrb[0].mxu0
  %455 = vmatprep.mubr.bf16.mxu0 0
  %456 = vmatmul.mubr.bf16.gmra.mrb[0].mxu0 %v293
  %v457 = vpop.f32.mrb[0].mxu0
  %v458 = vadd.f32 %v90, %v457
  %v459 = vpop.f32.mrb[0].mxu0
  %v460 = vpop.f32.mrb[0].mxu0
  %v461 = vadd.f32 %v90, %v460
  %v462 = vpop.f32.mrb[0].mxu0
  %463 = vmatprep.mubr.bf16.mxu0 0
  %464 = vmatmul.mubr.bf16.gmra.mrb[0].mxu0 %v296
  %v465 = vpop.f32.mrb[0].mxu0
  %v466 = vadd.f32 %v90, %v465
  %v467 = vpop.f32.mrb[0].mxu0
  %v468 = vpop.f32.mrb[0].mxu0
  %v469 = vadd.f32 %v90, %v468
  %v470 = vpop.f32.mrb[0].mxu0
  %471 = vmatprep.mubr.bf16.mxu0 0
  %472 = vmatmul.mubr.bf16.gmra.mrb[0].mxu0 %v299
  %v473 = vpop.f32.mrb[0].mxu0
  %v474 = vadd.f32 %v90, %v473
  %v475 = vpop.f32.mrb[0].mxu0
  %v476 = vpop.f32.mrb[0].mxu0
  %v477 = vadd.f32 %v90, %v476
  %v478 = vpop.f32.mrb[0].mxu0
  %479 = vmatprep.mubr.bf16.mxu0 0
  %480 = vmatmul.mubr.bf16.gmra.mrb[0].mxu0 %v302
  %v481 = vpop.f32.mrb[0].mxu0
  %v482 = vadd.f32 %v90, %v481
  %v483 = vpop.f32.mrb[0].mxu0
  %v484 = vpop.f32.mrb[0].mxu0
  %v485 = vadd.f32 %v90, %v484
  %v486 = vpop.f32.mrb[0].mxu0
  %487 = vmatprep.mubr.bf16.mxu0 0
  %488 = vmatmul.mubr.bf16.gmra.mrb[0].mxu0 %v305
  %v489 = vpop.f32.mrb[0].mxu0
  %v490 = vadd.f32 %v90, %v489
  %v491 = vpop.f32.mrb[0].mxu0
  %v492 = vpop.f32.mrb[0].mxu0
  %v493 = vadd.f32 %v90, %v492
  %v494 = vpop.f32.mrb[0].mxu0
  %495 = vmatprep.mubr.bf16.mxu0 0
  %496 = vmatmul.mubr.bf16.gmra.mrb[0].mxu0 %v308
  %v497 = vpop.f32.mrb[0].mxu0
  %v498 = vadd.f32 %v90, %v497
  %v499 = vpop.f32.mrb[0].mxu0
  %v500 = vpop.f32.mrb[0].mxu0
  %v501 = vadd.f32 %v90, %v500
  %v502 = vpop.f32.mrb[0].mxu0
  %503 = vmatprep.mubr.bf16.mxu0 0
  %504 = vmatmul.mubr.bf16.gmra.mrb[0].mxu0 %v311
  %v505 = vpop.f32.mrb[0].mxu0
  %v506 = vadd.f32 %v90, %v505
  %v507 = vpop.f32.mrb[0].mxu0
  %v508 = vpop.f32.mrb[0].mxu0
  %v509 = vadd.f32 %v90, %v508
  %v510 = vpop.f32.mrb[0].mxu0
  %511 = vmatprep.mubr.bf16.mxu0 0
  %512 = vmatmul.mubr.bf16.gmra.mrb[0].mxu0 %v314
  %v513 = vpop.f32.mrb[0].mxu0
  %v514 = vadd.f32 %v90, %v513
  %v515 = vpop.f32.mrb[0].mxu0
  %v516 = vpop.f32.mrb[0].mxu0
  %v517 = vadd.f32 %v90, %v516
  %v518 = vpop.f32.mrb[0].mxu0
  %519 = vmatprep.mubr.bf16.mxu0 0
  %520 = vmatmul.mubr.bf16.gmra.mrb[0].mxu0 %v317
  %v521 = vpop.f32.mrb[0].mxu0
  %v522 = vadd.f32 %v90, %v521
  %v523 = vpop.f32.mrb[0].mxu0
  %v524 = vpop.f32.mrb[0].mxu0
  %v525 = vadd.f32 %v90, %v524
  %v526 = vpop.f32.mrb[0].mxu0
  %527 = vmatprep.mubr.bf16.mxu0 0
  %528 = vmatmul.mubr.bf16.gmra.mrb[0].mxu0 %v320
  %v529 = vpop.f32.mrb[0].mxu0
  %v530 = vadd.f32 %v90, %v529
  %v531 = vpop.f32.mrb[0].mxu0
  %v532 = vpop.f32.mrb[0].mxu0
  %v533 = vadd.f32 %v90, %v532
  %v534 = vpop.f32.mrb[0].mxu0
  %535 = vmatprep.mubr.bf16.mxu0 0
  %536 = vmatmul.mubr.bf16.gmra.mrb[0].mxu0 %v323
  %v537 = vpop.f32.mrb[0].mxu0
  %v538 = vadd.f32 %v90, %v537
  %v539 = vpop.f32.mrb[0].mxu0
  %v540 = vpop.f32.mrb[0].mxu0
  %v541 = vadd.f32 %v90, %v540
  %v542 = vpop.f32.mrb[0].mxu0
  %543 = vmatprep.mubr.bf16.mxu0 0
  %544 = vmatmul.mubr.bf16.gmra.mrb[0].mxu0 %v326
  %v545 = vpop.f32.mrb[0].mxu0
  %v546 = vadd.f32 %v90, %v545
  %v547 = vpop.f32.mrb[0].mxu0
  %v548 = vpop.f32.mrb[0].mxu0
  %v549 = vadd.f32 %v90, %v548
  %v550 = vpop.f32.mrb[0].mxu0
  %551 = vmatprep.mubr.bf16.mxu0 0
  %552 = vmatmul.mubr.bf16.gmra.mrb[0].mxu0 %v329
  %v553 = vpop.f32.mrb[0].mxu0
  %v554 = vadd.f32 %v90, %v553
  %v555 = vpop.f32.mrb[0].mxu0
  %v556 = vpop.f32.mrb[0].mxu0
  %v557 = vadd.f32 %v90, %v556
  %v558 = vpop.f32.mrb[0].mxu0
  %559 = vmatprep.mubr.bf16.mxu0 0
  %560 = vmatmul.mubr.bf16.gmra.mrb[0].mxu0 %v332
  %v561 = vpop.f32.mrb[0].mxu0
  %v562 = vadd.f32 %v90, %v561
  %v563 = vpop.f32.mrb[0].mxu0
  %v564 = vpop.f32.mrb[0].mxu0
  %v565 = vadd.f32 %v90, %v564
  %v566 = vpop.f32.mrb[0].mxu0
  %567 = vmatprep.mubr.bf16.mxu0 0
  %568 = vmatmul.mubr.bf16.gmra.mrb[0].mxu0 %v335
  %v569 = vpop.f32.mrb[0].mxu0
  %v570 = vadd.f32 %v90, %v569
  %v571 = vpop.f32.mrb[0].mxu0
  %v572 = vpop.f32.mrb[0].mxu0
  %v573 = vadd.f32 %v90, %v572
  %v574 = vpop.f32.mrb[0].mxu0
  %575 = vmatprep.mubr.bf16.mxu0 0
  %576 = vmatmul.mubr.bf16.gmra.mrb[0].mxu0 %v338
  %v577 = vpop.f32.mrb[0].mxu0
  %v578 = vadd.f32 %v90, %v577
  %v579 = vpop.f32.mrb[0].mxu0
  %v580 = vpop.f32.mrb[0].mxu0
  %v581 = vadd.f32 %v90, %v580
  %v582 = vpop.f32.mrb[0].mxu0
  %583 = vmatprep.mubr.bf16.mxu0 0
  %584 = vmatmul.mubr.bf16.gmra.mrb[0].mxu0 %v341
  %v585 = vpop.f32.mrb[0].mxu0
  %v586 = vadd.f32 %v90, %v585
  %v587 = vpop.f32.mrb[0].mxu0
  %v588 = vpop.f32.mrb[0].mxu0
  %v589 = vadd.f32 %v90, %v588
  %v590 = vpop.f32.mrb[0].mxu0
  %591 = vmatprep.mubr.bf16.mxu0 0
  %592 = vmatmul.mubr.bf16.gmra.mrb[0].mxu0 %v344
  %v593 = vpop.f32.mrb[0].mxu0
  %v594 = vadd.f32 %v90, %v593
  %v595 = vpop.f32.mrb[0].mxu0
  %v596 = vpop.f32.mrb[0].mxu0
  %v597 = vadd.f32 %v90, %v596
  %v598 = vpop.f32.mrb[0].mxu0
  %599 = vmatprep.mubr.bf16.mxu0 0
  %600 = vmatmul.mubr.bf16.gmra.mrb[0].mxu0 %v347
  %v601 = vpop.f32.mrb[0].mxu0
  %v602 = vadd.f32 %v90, %v601
  %v603 = vpop.f32.mrb[0].mxu0
  %v604 = vpop.f32.mrb[0].mxu0
  %v605 = vadd.f32 %v90, %v604
  %v606 = vpop.f32.mrb[0].mxu0
  %607 = vmatprep.mubr.bf16.mxu0 0
  %608 = vmatmul.mubr.bf16.gmra.mrb[0].mxu0 %v350
  %v609 = vpop.f32.mrb[0].mxu0
  %v610 = vadd.f32 %v90, %v609
  %v611 = vpop.f32.mrb[0].mxu0
  %v612 = vpop.f32.mrb[0].mxu0
  %v613 = vadd.f32 %v90, %v612
  %v614 = vpop.f32.mrb[0].mxu0
  %615 = vmatprep.mubr.bf16.mxu0 0
  %616 = vmatmul.mubr.bf16.gmra.mrb[0].mxu0 %v353
  %v617 = vpop.f32.mrb[0].mxu0
  %v618 = vadd.f32 %v90, %v617
  %v619 = vpop.f32.mrb[0].mxu0
  %v620 = vpop.f32.mrb[0].mxu0
  %v621 = vadd.f32 %v90, %v620
  %v622 = vpop.f32.mrb[0].mxu0
  %623 = vmatprep.mubr.bf16.mxu0 0
  %624 = vmatmul.mubr.bf16.gmra.mrb[0].mxu0 %v356
  %v625 = vpop.f32.mrb[0].mxu0
  %v626 = vadd.f32 %v90, %v625
  %v627 = vpop.f32.mrb[0].mxu0
  %v628 = vpop.f32.mrb[0].mxu0
  %v629 = vadd.f32 %v90, %v628
  %v630 = vpop.f32.mrb[0].mxu0
  %631 = vmatprep.mubr.bf16.mxu0 0
  %632 = vmatmul.mubr.bf16.gmra.mrb[0].mxu0 %v359
  %v633 = vpop.f32.mrb[0].mxu0
  %v634 = vadd.f32 %v90, %v633
  %v635 = vpop.f32.mrb[0].mxu0
  %v636 = vpop.f32.mrb[0].mxu0
  %v637 = vadd.f32 %v90, %v636
  %v638 = vpop.f32.mrb[0].mxu0
  %639 = vmatprep.mubr.bf16.mxu0 0
  %640 = vmatmul.mubr.bf16.gmra.mrb[0].mxu0 %v362
  %v641 = vpop.f32.mrb[0].mxu0
  %v642 = vadd.f32 %v90, %v641
  %v643 = vpop.f32.mrb[0].mxu0
  %v644 = vpop.f32.mrb[0].mxu0
  %v645 = vadd.f32 %v90, %v644
  %v646 = vpop.f32.mrb[0].mxu0
  %647 = vmatprep.mubr.bf16.mxu0 0
  %648 = vmatmul.mubr.bf16.gmra.mrb[0].mxu0 %v365
  %v649 = vpop.f32.mrb[0].mxu0
  %v650 = vadd.f32 %v90, %v649
  %v651 = vpop.f32.mrb[0].mxu0
  %v652 = vpop.f32.mrb[0].mxu0
  %v653 = vadd.f32 %v90, %v652
  %v654 = vpop.f32.mrb[0].mxu0
  %655 = vdwg.mxu0
  %vm656 = vcmp.ge.f32.partialorder %v402, 0.0
  %vm657 = vcmp.ge.f32.partialorder %v405, 0.0
  %vm658 = vcmp.ge.f32.partialorder %v410, 0.0
  %vm659 = vcmp.ge.f32.partialorder %v413, 0.0
  %vm660 = vcmp.ge.f32.partialorder %v418, 0.0
  %vm661 = vcmp.ge.f32.partialorder %v421, 0.0
  %vm662 = vcmp.ge.f32.partialorder %v426, 0.0
  %vm663 = vcmp.ge.f32.partialorder %v429, 0.0
  %vm664 = vcmp.ge.f32.partialorder %v434, 0.0
  %vm665 = vcmp.ge.f32.partialorder %v437, 0.0
  %vm666 = vcmp.ge.f32.partialorder %v442, 0.0
  %vm667 = vcmp.ge.f32.partialorder %v445, 0.0
  %vm668 = vcmp.ge.f32.partialorder %v450, 0.0
  %vm669 = vcmp.ge.f32.partialorder %v453, 0.0
  %vm670 = vcmp.ge.f32.partialorder %v458, 0.0
  %vm671 = vcmp.ge.f32.partialorder %v461, 0.0
  %vm672 = vcmp.ge.f32.partialorder %v466, 0.0
  %vm673 = vcmp.ge.f32.partialorder %v469, 0.0
  %vm674 = vcmp.ge.f32.partialorder %v474, 0.0
  %vm675 = vcmp.ge.f32.partialorder %v477, 0.0
  %vm676 = vcmp.ge.f32.partialorder %v482, 0.0
  %vm677 = vcmp.ge.f32.partialorder %v485, 0.0
  %vm678 = vcmp.ge.f32.partialorder %v490, 0.0
  %vm679 = vcmp.ge.f32.partialorder %v493, 0.0
  %vm680 = vcmp.ge.f32.partialorder %v498, 0.0
  %vm681 = vcmp.ge.f32.partialorder %v501, 0.0
  %vm682 = vcmp.ge.f32.partialorder %v506, 0.0
  %vm683 = vcmp.ge.f32.partialorder %v509, 0.0
  %vm684 = vcmp.ge.f32.partialorder %v514, 0.0
  %vm685 = vcmp.ge.f32.partialorder %v517, 0.0
  %vm686 = vcmp.ge.f32.partialorder %v522, 0.0
  %vm687 = vcmp.ge.f32.partialorder %v525, 0.0
  %vm688 = vcmp.ge.f32.partialorder %v530, 0.0
  %vm689 = vcmp.ge.f32.partialorder %v533, 0.0
  %vm690 = vcmp.ge.f32.partialorder %v538, 0.0
  %vm691 = vcmp.ge.f32.partialorder %v541, 0.0
  %vm692 = vcmp.ge.f32.partialorder %v546, 0.0
  %vm693 = vcmp.ge.f32.partialorder %v549, 0.0
  %vm694 = vcmp.ge.f32.partialorder %v554, 0.0
  %vm695 = vcmp.ge.f32.partialorder %v557, 0.0
  %vm696 = vcmp.ge.f32.partialorder %v562, 0.0
  %vm697 = vcmp.ge.f32.partialorder %v565, 0.0
  %vm698 = vcmp.ge.f32.partialorder %v570, 0.0
  %vm699 = vcmp.ge.f32.partialorder %v573, 0.0
  %vm700 = vcmp.ge.f32.partialorder %v578, 0.0
  %vm701 = vcmp.ge.f32.partialorder %v581, 0.0
  %vm702 = vcmp.ge.f32.partialorder %v586, 0.0
  %vm703 = vcmp.ge.f32.partialorder %v589, 0.0
  %vm704 = vcmp.ge.f32.partialorder %v594, 0.0
  %vm705 = vcmp.ge.f32.partialorder %v597, 0.0
  %vm706 = vcmp.ge.f32.partialorder %v602, 0.0
  %vm707 = vcmp.ge.f32.partialorder %v605, 0.0
  %vm708 = vcmp.ge.f32.partialorder %v610, 0.0
  %vm709 = vcmp.ge.f32.partialorder %v613, 0.0
  %vm710 = vcmp.ge.f32.partialorder %v618, 0.0
  %vm711 = vcmp.ge.f32.partialorder %v621, 0.0
  %vm712 = vcmp.ge.f32.partialorder %v626, 0.0
  %vm713 = vcmp.ge.f32.partialorder %v629, 0.0
  %vm714 = vcmp.ge.f32.partialorder %v634, 0.0
  %vm715 = vcmp.ge.f32.partialorder %v637, 0.0
  %vm716 = vcmp.ge.f32.partialorder %v642, 0.0
  %vm717 = vcmp.ge.f32.partialorder %v645, 0.0
  %vm718 = vcmp.ge.f32.partialorder %v650, 0.0
  %vm719 = vcmp.ge.f32.partialorder %v653, 0.0
  %v720 = vmul.f32 %v402, 0.2
  %v721 = vmul.f32 %v405, 0.2
  %v722 = vmul.f32 %v410, 0.2
  %v723 = vmul.f32 %v413, 0.2
  %v724 = vmul.f32 %v418, 0.2
  %v725 = vmul.f32 %v421, 0.2
  %v726 = vmul.f32 %v426, 0.2
  %v727 = vmul.f32 %v429, 0.2
  %v728 = vmul.f32 %v434, 0.2
  %v729 = vmul.f32 %v437, 0.2
  %v730 = vmul.f32 %v442, 0.2
  %v731 = vmul.f32 %v445, 0.2
  %v732 = vmul.f32 %v450, 0.2
  %v733 = vmul.f32 %v453, 0.2
  %v734 = vmul.f32 %v458, 0.2
  %v735 = vmul.f32 %v461, 0.2
  %v736 = vmul.f32 %v466, 0.2
  %v737 = vmul.f32 %v469, 0.2
  %v738 = vmul.f32 %v474, 0.2
  %v739 = vmul.f32 %v477, 0.2
  %v740 = vmul.f32 %v482, 0.2
  %v741 = vmul.f32 %v485, 0.2
  %v742 = vmul.f32 %v490, 0.2
  %v743 = vmul.f32 %v493, 0.2
  %v744 = vmul.f32 %v498, 0.2
  %v745 = vmul.f32 %v501, 0.2
  %v746 = vmul.f32 %v506, 0.2
  %v747 = vmul.f32 %v509, 0.2
  %v748 = vmul.f32 %v514, 0.2
  %v749 = vmul.f32 %v517, 0.2
  %v750 = vmul.f32 %v522, 0.2
  %v751 = vmul.f32 %v525, 0.2
  %v752 = vmul.f32 %v530, 0.2
  %v753 = vmul.f32 %v533, 0.2
  %v754 = vmul.f32 %v538, 0.2
  %v755 = vmul.f32 %v541, 0.2
  %v756 = vmul.f32 %v546, 0.2
  %v757 = vmul.f32 %v549, 0.2
  %v758 = vmul.f32 %v554, 0.2
  %v759 = vmul.f32 %v557, 0.2
  %v760 = vmul.f32 %v562, 0.2
  %v761 = vmul.f32 %v565, 0.2
  %v762 = vmul.f32 %v570, 0.2
  %v763 = vmul.f32 %v573, 0.2
  %v764 = vmul.f32 %v578, 0.2
  %v765 = vmul.f32 %v581, 0.2
  %v766 = vmul.f32 %v586, 0.2
  %v767 = vmul.f32 %v589, 0.2
  %v768 = vmul.f32 %v594, 0.2
  %v769 = vmul.f32 %v597, 0.2
  %v770 = vmul.f32 %v602, 0.2
  %v771 = vmul.f32 %v605, 0.2
  %v772 = vmul.f32 %v610, 0.2
  %v773 = vmul.f32 %v613, 0.2
  %v774 = vmul.f32 %v618, 0.2
  %v775 = vmul.f32 %v621, 0.2
  %v776 = vmul.f32 %v626, 0.2
  %v777 = vmul.f32 %v629, 0.2
  %v778 = vmul.f32 %v634, 0.2
  %v779 = vmul.f32 %v637, 0.2
  %v780 = vmul.f32 %v642, 0.2
  %v781 = vmul.f32 %v645, 0.2
  %v782 = vmul.f32 %v650, 0.2
  %v783 = vmul.f32 %v653, 0.2
  %v784 = vsel %vm656, %v402, %v720
  %v785 = vsel %vm657, %v405, %v721
  %v786 = vsel %vm658, %v410, %v722
  %v787 = vsel %vm659, %v413, %v723
  %v788 = vsel %vm660, %v418, %v724
  %v789 = vsel %vm661, %v421, %v725
  %v790 = vsel %vm662, %v426, %v726
  %v791 = vsel %vm663, %v429, %v727
  %v792 = vsel %vm664, %v434, %v728
  %v793 = vsel %vm665, %v437, %v729
  %v794 = vsel %vm666, %v442, %v730
  %v795 = vsel %vm667, %v445, %v731
  %v796 = vsel %vm668, %v450, %v732
  %v797 = vsel %vm669, %v453, %v733
  %v798 = vsel %vm670, %v458, %v734
  %v799 = vsel %vm671, %v461, %v735
  %v800 = vsel %vm672, %v466, %v736
  %v801 = vsel %vm673, %v469, %v737
  %v802 = vsel %vm674, %v474, %v738
  %v803 = vsel %vm675, %v477, %v739
  %v804 = vsel %vm676, %v482, %v740
  %v805 = vsel %vm677, %v485, %v741
  %v806 = vsel %vm678, %v490, %v742
  %v807 = vsel %vm679, %v493, %v743
  %v808 = vsel %vm680, %v498, %v744
  %v809 = vsel %vm681, %v501, %v745
  %v810 = vsel %vm682, %v506, %v746
  %v811 = vsel %vm683, %v509, %v747
  %v812 = vsel %vm684, %v514, %v748
  %v813 = vsel %vm685, %v517, %v749
  %v814 = vsel %vm686, %v522, %v750
  %v815 = vsel %vm687, %v525, %v751
  %v816 = vsel %vm688, %v530, %v752
  %v817 = vsel %vm689, %v533, %v753
  %v818 = vsel %vm690, %v538, %v754
  %v819 = vsel %vm691, %v541, %v755
  %v820 = vsel %vm692, %v546, %v756
  %v821 = vsel %vm693, %v549, %v757
  %v822 = vsel %vm694, %v554, %v758
  %v823 = vsel %vm695, %v557, %v759
  %v824 = vsel %vm696, %v562, %v760
  %v825 = vsel %vm697, %v565, %v761
  %v826 = vsel %vm698, %v570, %v762
  %v827 = vsel %vm699, %v573, %v763
  %v828 = vsel %vm700, %v578, %v764
  %v829 = vsel %vm701, %v581, %v765
  %v830 = vsel %vm702, %v586, %v766
  %v831 = vsel %vm703, %v589, %v767
  %v832 = vsel %vm704, %v594, %v768
  %v833 = vsel %vm705, %v597, %v769
  %v834 = vsel %vm706, %v602, %v770
  %v835 = vsel %vm707, %v605, %v771
  %v836 = vsel %vm708, %v610, %v772
  %v837 = vsel %vm709, %v613, %v773
  %v838 = vsel %vm710, %v618, %v774
  %v839 = vsel %vm711, %v621, %v775
  %v840 = vsel %vm712, %v626, %v776
  %v841 = vsel %vm713, %v629, %v777
  %v842 = vsel %vm714, %v634, %v778
  %v843 = vsel %vm715, %v637, %v779
  %v844 = vsel %vm716, %v642, %v780
  %v845 = vsel %vm717, %v645, %v781
  %v846 = vsel %vm718, %v650, %v782
  %v847 = vsel %vm719, %v653, %v783
  %v848 = vpack.c.bf16 %v785, %v784
  %v849 = vpack.c.bf16 %v787, %v786
  %v850 = vpack.c.bf16 %v789, %v788
  %v851 = vpack.c.bf16 %v791, %v790
  %v852 = vpack.c.bf16 %v793, %v792
  %v853 = vpack.c.bf16 %v795, %v794
  %v854 = vpack.c.bf16 %v797, %v796
  %v855 = vpack.c.bf16 %v799, %v798
  %v856 = vpack.c.bf16 %v801, %v800
  %v857 = vpack.c.bf16 %v803, %v802
  %v858 = vpack.c.bf16 %v805, %v804
  %v859 = vpack.c.bf16 %v807, %v806
  %v860 = vpack.c.bf16 %v809, %v808
  %v861 = vpack.c.bf16 %v811, %v810
  %v862 = vpack.c.bf16 %v813, %v812
  %v863 = vpack.c.bf16 %v815, %v814
  %v864 = vpack.c.bf16 %v817, %v816
  %v865 = vpack.c.bf16 %v819, %v818
  %v866 = vpack.c.bf16 %v821, %v820
  %v867 = vpack.c.bf16 %v823, %v822
  %v868 = vpack.c.bf16 %v825, %v824
  %v869 = vpack.c.bf16 %v827, %v826
  %v870 = vpack.c.bf16 %v829, %v828
  %v871 = vpack.c.bf16 %v831, %v830
  %v872 = vpack.c.bf16 %v833, %v832
  %v873 = vpack.c.bf16 %v835, %v834
  %v874 = vpack.c.bf16 %v837, %v836
  %v875 = vpack.c.bf16 %v839, %v838
  %v876 = vpack.c.bf16 %v841, %v840
  %v877 = vpack.c.bf16 %v843, %v842
  %v878 = vpack.c.bf16 %v845, %v844
  %v879 = vpack.c.bf16 %v847, %v846
  %v912 = vunpack.c.l.b16 %v848
  %v913 = vunpack.c.h.b16 %v848
  %v914 = vunpack.c.l.b16 %v849
  %v915 = vunpack.c.h.b16 %v849
  %v916 = vunpack.c.l.b16 %v850
  %v917 = vunpack.c.h.b16 %v850
  %v918 = vunpack.c.l.b16 %v851
  %v919 = vunpack.c.h.b16 %v851
  %v920 = vunpack.c.l.b16 %v852
  %v921 = vunpack.c.h.b16 %v852
  %v922 = vunpack.c.l.b16 %v853
  %v923 = vunpack.c.h.b16 %v853
  %v924 = vunpack.c.l.b16 %v854
  %v925 = vunpack.c.h.b16 %v854
  %v926 = vunpack.c.l.b16 %v855
  %v927 = vunpack.c.h.b16 %v855
  %v928 = vunpack.c.l.b16 %v856
  %v929 = vunpack.c.h.b16 %v856
  %v930 = vunpack.c.l.b16 %v857
  %v931 = vunpack.c.h.b16 %v857
  %v932 = vunpack.c.l.b16 %v858
  %v933 = vunpack.c.h.b16 %v858
  %v934 = vunpack.c.l.b16 %v859
  %v935 = vunpack.c.h.b16 %v859
  %v936 = vunpack.c.l.b16 %v860
  %v937 = vunpack.c.h.b16 %v860
  %v938 = vunpack.c.l.b16 %v861
  %v939 = vunpack.c.h.b16 %v861
  %v940 = vunpack.c.l.b16 %v862
  %v941 = vunpack.c.h.b16 %v862
  %v942 = vunpack.c.l.b16 %v863
  %v943 = vunpack.c.h.b16 %v863
  %v944 = vunpack.c.l.b16 %v864
  %v945 = vunpack.c.h.b16 %v864
  %v946 = vunpack.c.l.b16 %v865
  %v947 = vunpack.c.h.b16 %v865
  %v948 = vunpack.c.l.b16 %v866
  %v949 = vunpack.c.h.b16 %v866
  %v950 = vunpack.c.l.b16 %v867
  %v951 = vunpack.c.h.b16 %v867
  %v952 = vunpack.c.l.b16 %v868
  %v953 = vunpack.c.h.b16 %v868
  %v954 = vunpack.c.l.b16 %v869
  %v955 = vunpack.c.h.b16 %v869
  %v956 = vunpack.c.l.b16 %v870
  %v957 = vunpack.c.h.b16 %v870
  %v958 = vunpack.c.l.b16 %v871
  %v959 = vunpack.c.h.b16 %v871
  %v960 = vunpack.c.l.b16 %v872
  %v961 = vunpack.c.h.b16 %v872
  %v962 = vunpack.c.l.b16 %v873
  %v963 = vunpack.c.h.b16 %v873
  %v964 = vunpack.c.l.b16 %v874
  %v965 = vunpack.c.h.b16 %v874
  %v966 = vunpack.c.l.b16 %v875
  %v967 = vunpack.c.h.b16 %v875
  %v968 = vunpack.c.l.b16 %v876
  %v969 = vunpack.c.h.b16 %v876
  %v970 = vunpack.c.l.b16 %v877
  %v971 = vunpack.c.h.b16 %v877
  %v972 = vunpack.c.l.b16 %v878
  %v973 = vunpack.c.h.b16 %v878
  %v974 = vunpack.c.l.b16 %v879
  %v975 = vunpack.c.h.b16 %v879
  %v976 = vpack.c.b16 %v912, %v912
  %v977 = vpack.c.b16 %v913, %v913
  %v978 = vpack.c.b16 %v914, %v914
  %v979 = vpack.c.b16 %v915, %v915
  %v980 = vpack.c.b16 %v916, %v916
  %v981 = vpack.c.b16 %v917, %v917
  %v982 = vpack.c.b16 %v918, %v918
  %v983 = vpack.c.b16 %v919, %v919
  %v984 = vpack.c.b16 %v920, %v920
  %v985 = vpack.c.b16 %v921, %v921
  %v986 = vpack.c.b16 %v922, %v922
  %v987 = vpack.c.b16 %v923, %v923
  %v988 = vpack.c.b16 %v924, %v924
  %v989 = vpack.c.b16 %v925, %v925
  %v990 = vpack.c.b16 %v926, %v926
  %v991 = vpack.c.b16 %v927, %v927
  %v992 = vpack.c.b16 %v928, %v928
  %v993 = vpack.c.b16 %v929, %v929
  %v994 = vpack.c.b16 %v930, %v930
  %v995 = vpack.c.b16 %v931, %v931
  %v996 = vpack.c.b16 %v932, %v932
  %v997 = vpack.c.b16 %v933, %v933
  %v998 = vpack.c.b16 %v934, %v934
  %v999 = vpack.c.b16 %v935, %v935
  %v1000 = vpack.c.b16 %v936, %v936
  %v1001 = vpack.c.b16 %v937, %v937
  %v1002 = vpack.c.b16 %v938, %v938
  %v1003 = vpack.c.b16 %v939, %v939
  %v1004 = vpack.c.b16 %v940, %v940
  %v1005 = vpack.c.b16 %v941, %v941
  %v1006 = vpack.c.b16 %v942, %v942
  %v1007 = vpack.c.b16 %v943, %v943
  %v1008 = vpack.c.b16 %v944, %v944
  %v1009 = vpack.c.b16 %v945, %v945
  %v1010 = vpack.c.b16 %v946, %v946
  %v1011 = vpack.c.b16 %v947, %v947
  %v1012 = vpack.c.b16 %v948, %v948
  %v1013 = vpack.c.b16 %v949, %v949
  %v1014 = vpack.c.b16 %v950, %v950
  %v1015 = vpack.c.b16 %v951, %v951
  %v1016 = vpack.c.b16 %v952, %v952
  %v1017 = vpack.c.b16 %v953, %v953
  %v1018 = vpack.c.b16 %v954, %v954
  %v1019 = vpack.c.b16 %v955, %v955
  %v1020 = vpack.c.b16 %v956, %v956
  %v1021 = vpack.c.b16 %v957, %v957
  %v1022 = vpack.c.b16 %v958, %v958
  %v1023 = vpack.c.b16 %v959, %v959
  %v1024 = vpack.c.b16 %v960, %v960
  %v1025 = vpack.c.b16 %v961, %v961
  %v1026 = vpack.c.b16 %v962, %v962
  %v1027 = vpack.c.b16 %v963, %v963
  %v1028 = vpack.c.b16 %v964, %v964
  %v1029 = vpack.c.b16 %v965, %v965
  %v1030 = vpack.c.b16 %v966, %v966
  %v1031 = vpack.c.b16 %v967, %v967
  %v1032 = vpack.c.b16 %v968, %v968
  %v1033 = vpack.c.b16 %v969, %v969
  %v1034 = vpack.c.b16 %v970, %v970
  %v1035 = vpack.c.b16 %v971, %v971
  %v1036 = vpack.c.b16 %v972, %v972
  %v1037 = vpack.c.b16 %v973, %v973
  %v1038 = vpack.c.b16 %v974, %v974
  %v1039 = vpack.c.b16 %v975, %v975
  %1104 = vst [vmem:[%s3] sm:$0xf] %v976
  %1105 = vst [vmem:[%s3 + $0x4] sm:$0xf] %v977
  %1106 = vst [vmem:[%s3 + $0x8] sm:$0xf] %v978
  %1107 = vst [vmem:[%s3 + $0xc] sm:$0xf] %v979
  %1108 = vst [vmem:[%s3 + $0x10] sm:$0xf] %v980
  %1109 = vst [vmem:[%s3 + $0x14] sm:$0xf] %v981
  %1110 = vst [vmem:[%s3 + $0x18] sm:$0xf] %v982
  %1111 = vst [vmem:[%s3 + $0x1c] sm:$0xf] %v983
  %1112 = vst [vmem:[%s3 + $0x20] sm:$0xf] %v984
  %1113 = vst [vmem:[%s3 + $0x24] sm:$0xf] %v985
  %1114 = vst [vmem:[%s3 + $0x28] sm:$0xf] %v986
  %1115 = vst [vmem:[%s3 + $0x2c] sm:$0xf] %v987
  %1116 = vst [vmem:[%s3 + $0x30] sm:$0xf] %v988
  %1117 = vst [vmem:[%s3 + $0x34] sm:$0xf] %v989
  %1118 = vst [vmem:[%s3 + $0x38] sm:$0xf] %v990
  %1119 = vst [vmem:[%s3 + $0x3c] sm:$0xf] %v991
  %1120 = vst [vmem:[%s3 + $0x40] sm:$0xf] %v992
  %1121 = vst [vmem:[%s3 + $0x44] sm:$0xf] %v993
  %1122 = vst [vmem:[%s3 + $0x48] sm:$0xf] %v994
  %1123 = vst [vmem:[%s3 + $0x4c] sm:$0xf] %v995
  %1124 = vst [vmem:[%s3 + $0x50] sm:$0xf] %v996
  %1125 = vst [vmem:[%s3 + $0x54] sm:$0xf] %v997
  %1126 = vst [vmem:[%s3 + $0x58] sm:$0xf] %v998
  %1127 = vst [vmem:[%s3 + $0x5c] sm:$0xf] %v999
  %1128 = vst [vmem:[%s3 + $0x60] sm:$0xf] %v1000
  %1129 = vst [vmem:[%s3 + $0x64] sm:$0xf] %v1001
  %1130 = vst [vmem:[%s3 + $0x68] sm:$0xf] %v1002
  %1131 = vst [vmem:[%s3 + $0x6c] sm:$0xf] %v1003
  %1132 = vst [vmem:[%s3 + $0x70] sm:$0xf] %v1004
  %1133 = vst [vmem:[%s3 + $0x74] sm:$0xf] %v1005
  %1134 = vst [vmem:[%s3 + $0x78] sm:$0xf] %v1006
  %1135 = vst [vmem:[%s3 + $0x7c] sm:$0xf] %v1007
  %1136 = vst [vmem:[%s3 + $0x80] sm:$0xf] %v1008
  %1137 = vst [vmem:[%s3 + $0x84] sm:$0xf] %v1009
  %1138 = vst [vmem:[%s3 + $0x88] sm:$0xf] %v1010
  %1139 = vst [vmem:[%s3 + $0x8c] sm:$0xf] %v1011
  %1140 = vst [vmem:[%s3 + $0x90] sm:$0xf] %v1012
  %1141 = vst [vmem:[%s3 + $0x94] sm:$0xf] %v1013
  %1142 = vst [vmem:[%s3 + $0x98] sm:$0xf] %v1014
  %1143 = vst [vmem:[%s3 + $0x9c] sm:$0xf] %v1015
  %1144 = vst [vmem:[%s3 + $0xa0] sm:$0xf] %v1016
  %1145 = vst [vmem:[%s3 + $0xa4] sm:$0xf] %v1017
  %1146 = vst [vmem:[%s3 + $0xa8] sm:$0xf] %v1018
  %1147 = vst [vmem:[%s3 + $0xac] sm:$0xf] %v1019
  %1148 = vst [vmem:[%s3 + $0xb0] sm:$0xf] %v1020
  %1149 = vst [vmem:[%s3 + $0xb4] sm:$0xf] %v1021
  %1150 = vst [vmem:[%s3 + $0xb8] sm:$0xf] %v1022
  %1151 = vst [vmem:[%s3 + $0xbc] sm:$0xf] %v1023
  %1152 = vst [vmem:[%s3 + $0xc0] sm:$0xf] %v1024
  %1153 = vst [vmem:[%s3 + $0xc4] sm:$0xf] %v1025
  %1154 = vst [vmem:[%s3 + $0xc8] sm:$0xf] %v1026
  %1155 = vst [vmem:[%s3 + $0xcc] sm:$0xf] %v1027
  %1156 = vst [vmem:[%s3 + $0xd0] sm:$0xf] %v1028
  %1157 = vst [vmem:[%s3 + $0xd4] sm:$0xf] %v1029
  %1158 = vst [vmem:[%s3 + $0xd8] sm:$0xf] %v1030
  %1159 = vst [vmem:[%s3 + $0xdc] sm:$0xf] %v1031
  %1160 = vst [vmem:[%s3 + $0xe0] sm:$0xf] %v1032
  %1161 = vst [vmem:[%s3 + $0xe4] sm:$0xf] %v1033
  %1162 = vst [vmem:[%s3 + $0xe8] sm:$0xf] %v1034
  %1163 = vst [vmem:[%s3 + $0xec] sm:$0xf] %v1035
  %1164 = vst [vmem:[%s3 + $0xf0] sm:$0xf] %v1036
  %1165 = vst [vmem:[%s3 + $0xf4] sm:$0xf] %v1037
  %1166 = vst [vmem:[%s3 + $0xf8] sm:$0xf] %v1038
  %1167 = vst [vmem:[%s3 + $0xfc] sm:$0xf] %v1039
  // Predicated region
  $region14: #{_lambda_.8} parent=0 // pred_check
    _
  $region15: #{_lambda_.8} parent=0 // pred_check_branch
    %1169 = sbr.rel (0) target = $region17
  $region16: #{_lambda_.8} parent=0 // pred_region
    _
  $region17: #{_lambda_.8} parent=0 // pred_fallthru
    _
  // Predicated region
  $region18: #{_lambda_.8} parent=0 // pred_check
    _
  $region19: #{_lambda_.8} parent=0 // pred_check_branch
    %1171 = sbr.rel (0) target = $region21
  $region20: #{_lambda_.8} parent=0 // pred_region
    _
  $region21: #{_lambda_.8} parent=0 // pred_fallthru
    _

// kernel: _lambda_.9
$region0: #{_lambda_.9}
  #allocation0 [shape = 'u32[]', space=smem, size = 0x4, offset = 0x4, fixed_abs, tag = 'smem constant byte address 0x4 - core index']
  #allocation1 [shape = 'u32[144,128]{1,0:T(1,128)}', space=vmem, size = 0x12000, scoped, tag = 'internal scratch']
  %s0 = inlined_call_operand.vmem [shape: bf16[128,256], index: 0, kind: input, shape index: {}]
  %s1 = inlined_call_operand.vmem [shape: bf16[256,128], index: 1, kind: input, shape index: {}]
  %s2 = inlined_call_operand.vmem [shape: bf16[128,128], index: 2, kind: output, shape index: {0}]
  %s3 = inlined_call_operand.vmem [shape: f32[1,2,128], index: 3, kind: output, shape index: {1}]
  %4 = xla_tuple %s2, %s3
  %s5 = sld [smem:[#allocation0]]
  $region26: #{_lambda_.9} parent=0
    _
  %s7 = ssub.s32 1, %s5
  %s8 = scalar_select 0, %s7, %s5
  // Predicated region
  $region2: #{_lambda_.9} parent=0 // pred_check
    _
  $region3: #{_lambda_.9} parent=0 // pred_check_branch
    %10 = sbr.rel (0) target = $region5
  $region4: #{_lambda_.9} parent=0 // pred_region
    _
  $region5: #{_lambda_.9} parent=0 // pred_fallthru
    _
  // Predicated region
  $region6: #{_lambda_.9} parent=0 // pred_check
    _
  $region7: #{_lambda_.9} parent=0 // pred_check_branch
    %12 = sbr.rel (0) target = $region9
  $region8: #{_lambda_.9} parent=0 // pred_region
    _
  $region9: #{_lambda_.9} parent=0 // pred_fallthru
    _
  %v14 = vld [vmem:[%s0] sm:$0xff]
  %v15 = vld [vmem:[%s0 + $0x8] sm:$0xff]
  %v16 = vld [vmem:[%s0 + $0x10] sm:$0xff]
  %v17 = vld [vmem:[%s0 + $0x18] sm:$0xff]
  %v18 = vld [vmem:[%s0 + $0x20] sm:$0xff]
  %v19 = vld [vmem:[%s0 + $0x28] sm:$0xff]
  %v20 = vld [vmem:[%s0 + $0x30] sm:$0xff]
  %v21 = vld [vmem:[%s0 + $0x38] sm:$0xff]
  %v22 = vld [vmem:[%s0 + $0x40] sm:$0xff]
  %v23 = vld [vmem:[%s0 + $0x48] sm:$0xff]
  %v24 = vld [vmem:[%s0 + $0x50] sm:$0xff]
  %v25 = vld [vmem:[%s0 + $0x58] sm:$0xff]
  %v26 = vld [vmem:[%s0 + $0x60] sm:$0xff]
  %v27 = vld [vmem:[%s0 + $0x68] sm:$0xff]
  %v28 = vld [vmem:[%s0 + $0x70] sm:$0xff]
  %v29 = vld [vmem:[%s0 + $0x78] sm:$0xff]
  %v30 = vld [vmem:[%s1] sm:$0xf]
  %v31 = vld [vmem:[%s1 + $0x4] sm:$0xf]
  %v32 = vld [vmem:[%s1 + $0x8] sm:$0xf]
  %v33 = vld [vmem:[%s1 + $0xc] sm:$0xf]
  %v34 = vld [vmem:[%s1 + $0x10] sm:$0xf]
  %v35 = vld [vmem:[%s1 + $0x14] sm:$0xf]
  %v36 = vld [vmem:[%s1 + $0x18] sm:$0xf]
  %v37 = vld [vmem:[%s1 + $0x1c] sm:$0xf]
  %v38 = vld [vmem:[%s1 + $0x20] sm:$0xf]
  %v39 = vld [vmem:[%s1 + $0x24] sm:$0xf]
  %v40 = vld [vmem:[%s1 + $0x28] sm:$0xf]
  %v41 = vld [vmem:[%s1 + $0x2c] sm:$0xf]
  %v42 = vld [vmem:[%s1 + $0x30] sm:$0xf]
  %v43 = vld [vmem:[%s1 + $0x34] sm:$0xf]
  %v44 = vld [vmem:[%s1 + $0x38] sm:$0xf]
  %v45 = vld [vmem:[%s1 + $0x3c] sm:$0xf]
  %v46 = vld [vmem:[%s1 + $0x40] sm:$0xf]
  %v47 = vld [vmem:[%s1 + $0x44] sm:$0xf]
  %v48 = vld [vmem:[%s1 + $0x48] sm:$0xf]
  %v49 = vld [vmem:[%s1 + $0x4c] sm:$0xf]
  %v50 = vld [vmem:[%s1 + $0x50] sm:$0xf]
  %v51 = vld [vmem:[%s1 + $0x54] sm:$0xf]
  %v52 = vld [vmem:[%s1 + $0x58] sm:$0xf]
  %v53 = vld [vmem:[%s1 + $0x5c] sm:$0xf]
  %v54 = vld [vmem:[%s1 + $0x60] sm:$0xf]
  %v55 = vld [vmem:[%s1 + $0x64] sm:$0xf]
  %v56 = vld [vmem:[%s1 + $0x68] sm:$0xf]
  %v57 = vld [vmem:[%s1 + $0x6c] sm:$0xf]
  %v58 = vld [vmem:[%s1 + $0x70] sm:$0xf]
  %v59 = vld [vmem:[%s1 + $0x74] sm:$0xf]
  %v60 = vld [vmem:[%s1 + $0x78] sm:$0xf]
  %v61 = vld [vmem:[%s1 + $0x7c] sm:$0xf]
  %v78 = vunpack.c.l.b16 %v14
  %v79 = vunpack.c.h.b16 %v14
  %v80 = vunpack.c.l.b16 %v15
  %v81 = vunpack.c.h.b16 %v15
  %v82 = vunpack.c.l.b16 %v16
  %v83 = vunpack.c.h.b16 %v16
  %v84 = vunpack.c.l.b16 %v17
  %v85 = vunpack.c.h.b16 %v17
  %v86 = vunpack.c.l.b16 %v18
  %v87 = vunpack.c.h.b16 %v18
  %v88 = vunpack.c.l.b16 %v19
  %v89 = vunpack.c.h.b16 %v19
  %v90 = vunpack.c.l.b16 %v20
  %v91 = vunpack.c.h.b16 %v20
  %v92 = vunpack.c.l.b16 %v21
  %v93 = vunpack.c.h.b16 %v21
  %v94 = vunpack.c.l.b16 %v22
  %v95 = vunpack.c.h.b16 %v22
  %v96 = vunpack.c.l.b16 %v23
  %v97 = vunpack.c.h.b16 %v23
  %v98 = vunpack.c.l.b16 %v24
  %v99 = vunpack.c.h.b16 %v24
  %v100 = vunpack.c.l.b16 %v25
  %v101 = vunpack.c.h.b16 %v25
  %v102 = vunpack.c.l.b16 %v26
  %v103 = vunpack.c.h.b16 %v26
  %v104 = vunpack.c.l.b16 %v27
  %v105 = vunpack.c.h.b16 %v27
  %v106 = vunpack.c.l.b16 %v28
  %v107 = vunpack.c.h.b16 %v28
  %v108 = vunpack.c.l.b16 %v29
  %v109 = vunpack.c.h.b16 %v29
  %v110 = vpack.c.b16 %v80, %v78
  %v111 = vpack.c.b16 %v81, %v79
  %v112 = vpack.c.b16 %v84, %v82
  %v113 = vpack.c.b16 %v85, %v83
  %v114 = vpack.c.b16 %v88, %v86
  %v115 = vpack.c.b16 %v89, %v87
  %v116 = vpack.c.b16 %v92, %v90
  %v117 = vpack.c.b16 %v93, %v91
  %v118 = vpack.c.b16 %v96, %v94
  %v119 = vpack.c.b16 %v97, %v95
  %v120 = vpack.c.b16 %v100, %v98
  %v121 = vpack.c.b16 %v101, %v99
  %v122 = vpack.c.b16 %v104, %v102
  %v123 = vpack.c.b16 %v105, %v103
  %v124 = vpack.c.b16 %v108, %v106
  %v125 = vpack.c.b16 %v109, %v107
  %v174 = vunpack.c.l.b16 %v30
  %v175 = vunpack.c.l.b16 %v31
  %v176 = vunpack.c.l.b16 %v32
  %v177 = vunpack.c.l.b16 %v33
  %v178 = vunpack.c.l.b16 %v34
  %v179 = vunpack.c.l.b16 %v35
  %v180 = vunpack.c.l.b16 %v36
  %v181 = vunpack.c.l.b16 %v37
  %v182 = vunpack.c.l.b16 %v38
  %v183 = vunpack.c.l.b16 %v39
  %v184 = vunpack.c.l.b16 %v40
  %v185 = vunpack.c.l.b16 %v41
  %v186 = vunpack.c.l.b16 %v42
  %v187 = vunpack.c.l.b16 %v43
  %v188 = vunpack.c.l.b16 %v44
  %v189 = vunpack.c.l.b16 %v45
  %v190 = vunpack.c.l.b16 %v46
  %v191 = vunpack.c.l.b16 %v47
  %v192 = vunpack.c.l.b16 %v48
  %v193 = vunpack.c.l.b16 %v49
  %v194 = vunpack.c.l.b16 %v50
  %v195 = vunpack.c.l.b16 %v51
  %v196 = vunpack.c.l.b16 %v52
  %v197 = vunpack.c.l.b16 %v53
  %v198 = vunpack.c.l.b16 %v54
  %v199 = vunpack.c.l.b16 %v55
  %v200 = vunpack.c.l.b16 %v56
  %v201 = vunpack.c.l.b16 %v57
  %v202 = vunpack.c.l.b16 %v58
  %v203 = vunpack.c.l.b16 %v59
  %v204 = vunpack.c.l.b16 %v60
  %v205 = vunpack.c.l.b16 %v61
  %v206 = vpack.c.b16 %v175, %v174
  %v207 = vpack.c.b16 %v177, %v176
  %v208 = vpack.c.b16 %v179, %v178
  %v209 = vpack.c.b16 %v181, %v180
  %v210 = vpack.c.b16 %v183, %v182
  %v211 = vpack.c.b16 %v185, %v184
  %v212 = vpack.c.b16 %v187, %v186
  %v213 = vpack.c.b16 %v189, %v188
  %v214 = vpack.c.b16 %v191, %v190
  %v215 = vpack.c.b16 %v193, %v192
  %v216 = vpack.c.b16 %v195, %v194
  %v217 = vpack.c.b16 %v197, %v196
  %v218 = vpack.c.b16 %v199, %v198
  %v219 = vpack.c.b16 %v201, %v200
  %v220 = vpack.c.b16 %v203, %v202
  %v221 = vpack.c.b16 %v205, %v204
  %238 = vmatprep.subr.bf16.mxu0 0
  %239 = vmatpush1.bf16.msra.mxu0 %v206
  %240 = vmatprep.subr.bf16.mxu0 0
  %241 = vmatpush1.bf16.msra.mxu0 %v207
  %242 = vmatprep.subr.bf16.mxu0 0
  %243 = vmatpush1.bf16.msra.mxu0 %v208
  %244 = vmatprep.subr.bf16.mxu0 0
  %245 = vmatpush1.bf16.msra.mxu0 %v209
  %246 = vmatprep.subr.bf16.mxu0 0
  %247 = vmatpush1.bf16.msra.mxu0 %v210
  %248 = vmatprep.subr.bf16.mxu0 0
  %249 = vmatpush1.bf16.msra.mxu0 %v211
  %250 = vmatprep.subr.bf16.mxu0 0
  %251 = vmatpush1.bf16.msra.mxu0 %v212
  %252 = vmatprep.subr.bf16.mxu0 0
  %253 = vmatpush1.bf16.msra.mxu0 %v213
  %254 = vmatprep.subr.bf16.mxu0 0
  %255 = vmatpush1.bf16.msra.mxu0 %v214
  %256 = vmatprep.subr.bf16.mxu0 0
  %257 = vmatpush1.bf16.msra.mxu0 %v215
  %258 = vmatprep.subr.bf16.mxu0 0
  %259 = vmatpush1.bf16.msra.mxu0 %v216
  %260 = vmatprep.subr.bf16.mxu0 0
  %261 = vmatpush1.bf16.msra.mxu0 %v217
  %262 = vmatprep.subr.bf16.mxu0 0
  %263 = vmatpush1.bf16.msra.mxu0 %v218
  %264 = vmatprep.subr.bf16.mxu0 0
  %265 = vmatpush1.bf16.msra.mxu0 %v219
  %266 = vmatprep.subr.bf16.mxu0 0
  %267 = vmatpush1.bf16.msra.mxu0 %v220
  %268 = vmatprep.subr.bf16.mxu0 0
  %269 = vmatpush1.bf16.msra.mxu0 %v221
  %270 = vmatprep.mubr.bf16.mxu0 %v111
  %271 = vmatmul.mubr.bf16.gmra.mrb[0].mxu0 %v110
  %v272 = vpop.f32.mrb[0].mxu0
  %v273 = vadd.f32 0.0, %v272
  %v274 = vpop.f32.mrb[0].mxu0
  %v275 = vpop.f32.mrb[0].mxu0
  %v276 = vadd.f32 0.0, %v275
  %v277 = vpop.f32.mrb[0].mxu0
  %278 = vmatprep.mubr.bf16.mxu0 %v113
  %279 = vmatmul.mubr.bf16.gmra.mrb[0].mxu0 %v112
  %v280 = vpop.f32.mrb[0].mxu0
  %v281 = vadd.f32 0.0, %v280
  %v282 = vpop.f32.mrb[0].mxu0
  %v283 = vpop.f32.mrb[0].mxu0
  %v284 = vadd.f32 0.0, %v283
  %v285 = vpop.f32.mrb[0].mxu0
  %286 = vmatprep.mubr.bf16.mxu0 %v115
  %287 = vmatmul.mubr.bf16.gmra.mrb[0].mxu0 %v114
  %v288 = vpop.f32.mrb[0].mxu0
  %v289 = vadd.f32 0.0, %v288
  %v290 = vpop.f32.mrb[0].mxu0
  %v291 = vpop.f32.mrb[0].mxu0
  %v292 = vadd.f32 0.0, %v291
  %v293 = vpop.f32.mrb[0].mxu0
  %294 = vmatprep.mubr.bf16.mxu0 %v117
  %295 = vmatmul.mubr.bf16.gmra.mrb[0].mxu0 %v116
  %v296 = vpop.f32.mrb[0].mxu0
  %v297 = vadd.f32 0.0, %v296
  %v298 = vpop.f32.mrb[0].mxu0
  %v299 = vpop.f32.mrb[0].mxu0
  %v300 = vadd.f32 0.0, %v299
  %v301 = vpop.f32.mrb[0].mxu0
  %302 = vmatprep.mubr.bf16.mxu0 %v119
  %303 = vmatmul.mubr.bf16.gmra.mrb[0].mxu0 %v118
  %v304 = vpop.f32.mrb[0].mxu0
  %v305 = vadd.f32 0.0, %v304
  %v306 = vpop.f32.mrb[0].mxu0
  %v307 = vpop.f32.mrb[0].mxu0
  %v308 = vadd.f32 0.0, %v307
  %v309 = vpop.f32.mrb[0].mxu0
  %310 = vmatprep.mubr.bf16.mxu0 %v121
  %311 = vmatmul.mubr.bf16.gmra.mrb[0].mxu0 %v120
  %v312 = vpop.f32.mrb[0].mxu0
  %v313 = vadd.f32 0.0, %v312
  %v314 = vpop.f32.mrb[0].mxu0
  %v315 = vpop.f32.mrb[0].mxu0
  %v316 = vadd.f32 0.0, %v315
  %v317 = vpop.f32.mrb[0].mxu0
  %318 = vmatprep.mubr.bf16.mxu0 %v123
  %319 = vmatmul.mubr.bf16.gmra.mrb[0].mxu0 %v122
  %v320 = vpop.f32.mrb[0].mxu0
  %v321 = vadd.f32 0.0, %v320
  %v322 = vpop.f32.mrb[0].mxu0
  %v323 = vpop.f32.mrb[0].mxu0
  %v324 = vadd.f32 0.0, %v323
  %v325 = vpop.f32.mrb[0].mxu0
  %326 = vmatprep.mubr.bf16.mxu0 %v125
  %327 = vmatmul.mubr.bf16.gmra.mrb[0].mxu0 %v124
  %v328 = vpop.f32.mrb[0].mxu0
  %v329 = vadd.f32 0.0, %v328
  %v330 = vpop.f32.mrb[0].mxu0
  %v331 = vpop.f32.mrb[0].mxu0
  %v332 = vadd.f32 0.0, %v331
  %v333 = vpop.f32.mrb[0].mxu0
  %334 = vdwg.mxu0
  %v335 = vpack.c.bf16 %v276, %v273
  %v336 = vpack.c.bf16 %v284, %v281
  %v337 = vpack.c.bf16 %v292, %v289
  %v338 = vpack.c.bf16 %v300, %v297
  %v339 = vpack.c.bf16 %v308, %v305
  %v340 = vpack.c.bf16 %v316, %v313
  %v341 = vpack.c.bf16 %v324, %v321
  %v342 = vpack.c.bf16 %v332, %v329
  %v351 = vunpack.c.l.b16 %v335
  %v352 = vunpack.c.h.b16 %v335
  %v353 = vunpack.c.l.b16 %v336
  %v354 = vunpack.c.h.b16 %v336
  %v355 = vunpack.c.l.b16 %v337
  %v356 = vunpack.c.h.b16 %v337
  %v357 = vunpack.c.l.b16 %v338
  %v358 = vunpack.c.h.b16 %v338
  %v359 = vunpack.c.l.b16 %v339
  %v360 = vunpack.c.h.b16 %v339
  %v361 = vunpack.c.l.b16 %v340
  %v362 = vunpack.c.h.b16 %v340
  %v363 = vunpack.c.l.b16 %v341
  %v364 = vunpack.c.h.b16 %v341
  %v365 = vunpack.c.l.b16 %v342
  %v366 = vunpack.c.h.b16 %v342
  %v367 = vpack.c.b16 %v351, %v351
  %v368 = vpack.c.b16 %v352, %v352
  %v369 = vpack.c.b16 %v353, %v353
  %v370 = vpack.c.b16 %v354, %v354
  %v371 = vpack.c.b16 %v355, %v355
  %v372 = vpack.c.b16 %v356, %v356
  %v373 = vpack.c.b16 %v357, %v357
  %v374 = vpack.c.b16 %v358, %v358
  %v375 = vpack.c.b16 %v359, %v359
  %v376 = vpack.c.b16 %v360, %v360
  %v377 = vpack.c.b16 %v361, %v361
  %v378 = vpack.c.b16 %v362, %v362
  %v379 = vpack.c.b16 %v363, %v363
  %v380 = vpack.c.b16 %v364, %v364
  %v381 = vpack.c.b16 %v365, %v365
  %v382 = vpack.c.b16 %v366, %v366
  %399 = vst [vmem:[%s2] sm:$0xf] %v367
  %400 = vst [vmem:[%s2 + $0x4] sm:$0xf] %v368
  %401 = vst [vmem:[%s2 + $0x8] sm:$0xf] %v369
  %402 = vst [vmem:[%s2 + $0xc] sm:$0xf] %v370
  %403 = vst [vmem:[%s2 + $0x10] sm:$0xf] %v371
  %404 = vst [vmem:[%s2 + $0x14] sm:$0xf] %v372
  %405 = vst [vmem:[%s2 + $0x18] sm:$0xf] %v373
  %406 = vst [vmem:[%s2 + $0x1c] sm:$0xf] %v374
  %407 = vst [vmem:[%s2 + $0x20] sm:$0xf] %v375
  %408 = vst [vmem:[%s2 + $0x24] sm:$0xf] %v376
  %409 = vst [vmem:[%s2 + $0x28] sm:$0xf] %v377
  %410 = vst [vmem:[%s2 + $0x2c] sm:$0xf] %v378
  %411 = vst [vmem:[%s2 + $0x30] sm:$0xf] %v379
  %412 = vst [vmem:[%s2 + $0x34] sm:$0xf] %v380
  %413 = vst [vmem:[%s2 + $0x38] sm:$0xf] %v381
  %414 = vst [vmem:[%s2 + $0x3c] sm:$0xf] %v382
  %v415 = vadd.f32 %v273, %v276
  %v416 = vadd.f32 %v415, %v281
  %v417 = vadd.f32 %v416, %v284
  %v418 = vadd.f32 %v417, %v289
  %v419 = vadd.f32 %v418, %v292
  %v420 = vadd.f32 %v419, %v297
  %v421 = vadd.f32 %v420, %v300
  %v422 = vadd.f32 %v421, %v305
  %v423 = vadd.f32 %v422, %v308
  %v424 = vadd.f32 %v423, %v313
  %v425 = vadd.f32 %v424, %v316
  %v426 = vadd.f32 %v425, %v321
  %v427 = vadd.f32 %v426, %v324
  %v428 = vadd.f32 %v427, %v329
  %v429 = vadd.f32 %v428, %v332
  %v430 = vrot.slane %v429, 4
  %v431 = vadd.f32 %v429, %v430
  %v432 = vrot.slane %v431, 2
  %v433 = vadd.f32 %v431, %v432
  %v434 = vrot.slane %v433, 1
  %v435 = vadd.f32 %v433, %v434
  %436 = vst [vmem:[%s3] sm:$0x1] %v435
  %v437 = vmul.f32 %v273, %v273
  %v438 = vmul.f32 %v276, %v276
  %v439 = vmul.f32 %v281, %v281
  %v440 = vmul.f32 %v284, %v284
  %v441 = vmul.f32 %v289, %v289
  %v442 = vmul.f32 %v292, %v292
  %v443 = vmul.f32 %v297, %v297
  %v444 = vmul.f32 %v300, %v300
  %v445 = vmul.f32 %v305, %v305
  %v446 = vmul.f32 %v308, %v308
  %v447 = vmul.f32 %v313, %v313
  %v448 = vmul.f32 %v316, %v316
  %v449 = vmul.f32 %v321, %v321
  %v450 = vmul.f32 %v324, %v324
  %v451 = vmul.f32 %v329, %v329
  %v452 = vmul.f32 %v332, %v332
  %v453 = vadd.f32 %v437, %v438
  %v454 = vadd.f32 %v453, %v439
  %v455 = vadd.f32 %v454, %v440
  %v456 = vadd.f32 %v455, %v441
  %v457 = vadd.f32 %v456, %v442
  %v458 = vadd.f32 %v457, %v443
  %v459 = vadd.f32 %v458, %v444
  %v460 = vadd.f32 %v459, %v445
  %v461 = vadd.f32 %v460, %v446
  %v462 = vadd.f32 %v461, %v447
  %v463 = vadd.f32 %v462, %v448
  %v464 = vadd.f32 %v463, %v449
  %v465 = vadd.f32 %v464, %v450
  %v466 = vadd.f32 %v465, %v451
  %v467 = vadd.f32 %v466, %v452
  %v468 = vrot.slane %v467, 4
  %v469 = vadd.f32 %v467, %v468
  %v470 = vrot.slane %v469, 2
  %v471 = vadd.f32 %v469, %v470
  %v472 = vrot.slane %v471, 1
  %v473 = vadd.f32 %v471, %v472
  %474 = vst [vmem:[%s3 + $0x1] sm:$0x1] %v473
  // Predicated region
  $region10: #{_lambda_.9} parent=0 // pred_check
    _
  $region11: #{_lambda_.9} parent=0 // pred_check_branch
    %476 = sbr.rel (0) target = $region13
  $region12: #{_lambda_.9} parent=0 // pred_region
    _
  $region13: #{_lambda_.9} parent=0 // pred_fallthru
    _
  // Predicated region
  $region14: #{_lambda_.9} parent=0 // pred_check
    _
  $region15: #{_lambda_.9} parent=0 // pred_check_branch
    %478 = sbr.rel (0) target = $region17
  $region16: #{_lambda_.9} parent=0 // pred_region
    _
  $region17: #{_lambda_.9} parent=0 // pred_fallthru
    _
  // Predicated region
  $region18: #{_lambda_.9} parent=0 // pred_check
    _
  $region19: #{_lambda_.9} parent=0 // pred_check_branch
    %480 = sbr.rel (0) target = $region21
  $region20: #{_lambda_.9} parent=0 // pred_region
    _
  $region21: #{_lambda_.9} parent=0 // pred_fallthru
    _
  // Predicated region
  $region22: #{_lambda_.9} parent=0 // pred_check
    _
  $region23: #{_lambda_.9} parent=0 // pred_check_branch
    %482 = sbr.rel (0) target = $region25
  $region24: #{_lambda_.9} parent=0 // pred_region
    _
  $region25: #{_lambda_.9} parent=0 // pred_fallthru
    _

// kernel: _lambda_.10
$region0: #{_lambda_.10}
  #allocation0 [shape = 'u32[]', space=smem, size = 0x4, offset = 0x4, fixed_abs, tag = 'smem constant byte address 0x4 - core index']
  #allocation1 [shape = 'u32[144,128]{1,0:T(1,128)}', space=vmem, size = 0x12000, scoped, tag = 'internal scratch']
  %s0 = inlined_call_operand.vmem [shape: bf16[128,128], index: 0, kind: input, shape index: {}, may-alias: {0,5}]
  %s1 = inlined_call_operand.vmem [shape: f32[1,128], index: 1, kind: input, shape index: {}]
  %s2 = inlined_call_operand.vmem [shape: f32[1,128], index: 2, kind: input, shape index: {}]
  %s3 = inlined_call_operand.vmem [shape: f32[1,128], index: 3, kind: input, shape index: {}]
  %s4 = inlined_call_operand.vmem [shape: f32[1,128], index: 4, kind: input, shape index: {}]
  %s5 = inlined_call_operand.vmem [shape: bf16[128,128], index: 5, kind: output, shape index: {}, may-alias: {0,5}]
  %s6 = sld [smem:[#allocation0]]
  $region30: #{_lambda_.10} parent=0
    _
  %s8 = ssub.s32 1, %s6
  %s9 = scalar_select 0, %s8, %s6
  // Predicated region
  $region2: #{_lambda_.10} parent=0 // pred_check
    _
  $region3: #{_lambda_.10} parent=0 // pred_check_branch
    %11 = sbr.rel (0) target = $region5
  $region4: #{_lambda_.10} parent=0 // pred_region
    _
  $region5: #{_lambda_.10} parent=0 // pred_fallthru
    _
  // Predicated region
  $region6: #{_lambda_.10} parent=0 // pred_check
    _
  $region7: #{_lambda_.10} parent=0 // pred_check_branch
    %13 = sbr.rel (0) target = $region9
  $region8: #{_lambda_.10} parent=0 // pred_region
    _
  $region9: #{_lambda_.10} parent=0 // pred_fallthru
    _
  // Predicated region
  $region10: #{_lambda_.10} parent=0 // pred_check
    _
  $region11: #{_lambda_.10} parent=0 // pred_check_branch
    %15 = sbr.rel (0) target = $region13
  $region12: #{_lambda_.10} parent=0 // pred_region
    _
  $region13: #{_lambda_.10} parent=0 // pred_fallthru
    _
  // Predicated region
  $region14: #{_lambda_.10} parent=0 // pred_check
    _
  $region15: #{_lambda_.10} parent=0 // pred_check_branch
    %17 = sbr.rel (0) target = $region17
  $region16: #{_lambda_.10} parent=0 // pred_region
    _
  $region17: #{_lambda_.10} parent=0 // pred_fallthru
    _
  // Predicated region
  $region18: #{_lambda_.10} parent=0 // pred_check
    _
  $region19: #{_lambda_.10} parent=0 // pred_check_branch
    %19 = sbr.rel (0) target = $region21
  $region20: #{_lambda_.10} parent=0 // pred_region
    _
  $region21: #{_lambda_.10} parent=0 // pred_fallthru
    _
  %v20 = vld [vmem:[%s1] sm:$0x1]
  %v21 = vmul.f32 %v20, 0.0078125
  %v22 = vld [vmem:[%s2] sm:$0x1]
  %v23 = vmul.f32 %v22, 0.0078125
  %v24 = vmul.f32 %v21, %v21
  %v25 = vsub.f32 %v23, %v24
  %v26 = vmax.f32 %v25, 0.0
  %v27 = vld [vmem:[%s3] sm:$0x1]
  %v28 = vadd.f32 %v26, 1e-05
  %v29 = vrsqrt.pop %v28
  %v30 = vmul.f32 %v27, %v29
  %v31 = vld [vmem:[%s4] sm:$0x1]
  %v32 = vmul.f32 %v21, %v30
  %v33 = vsub.f32 %v31, %v32
  %v34 = vld [vmem:[%s0] sm:$0xf]
  %v35 = vld [vmem:[%s0 + $0x4] sm:$0xf]
  %v36 = vld [vmem:[%s0 + $0x8] sm:$0xf]
  %v37 = vld [vmem:[%s0 + $0xc] sm:$0xf]
  %v38 = vld [vmem:[%s0 + $0x10] sm:$0xf]
  %v39 = vld [vmem:[%s0 + $0x14] sm:$0xf]
  %v40 = vld [vmem:[%s0 + $0x18] sm:$0xf]
  %v41 = vld [vmem:[%s0 + $0x1c] sm:$0xf]
  %v42 = vld [vmem:[%s0 + $0x20] sm:$0xf]
  %v43 = vld [vmem:[%s0 + $0x24] sm:$0xf]
  %v44 = vld [vmem:[%s0 + $0x28] sm:$0xf]
  %v45 = vld [vmem:[%s0 + $0x2c] sm:$0xf]
  %v46 = vld [vmem:[%s0 + $0x30] sm:$0xf]
  %v47 = vld [vmem:[%s0 + $0x34] sm:$0xf]
  %v48 = vld [vmem:[%s0 + $0x38] sm:$0xf]
  %v49 = vld [vmem:[%s0 + $0x3c] sm:$0xf]
  %v50 = vunpack.c.l.bf16 %v34
  %v51 = vunpack.c.l.bf16 %v35
  %v52 = vunpack.c.l.bf16 %v36
  %v53 = vunpack.c.l.bf16 %v37
  %v54 = vunpack.c.l.bf16 %v38
  %v55 = vunpack.c.l.bf16 %v39
  %v56 = vunpack.c.l.bf16 %v40
  %v57 = vunpack.c.l.bf16 %v41
  %v58 = vunpack.c.l.bf16 %v42
  %v59 = vunpack.c.l.bf16 %v43
  %v60 = vunpack.c.l.bf16 %v44
  %v61 = vunpack.c.l.bf16 %v45
  %v62 = vunpack.c.l.bf16 %v46
  %v63 = vunpack.c.l.bf16 %v47
  %v64 = vunpack.c.l.bf16 %v48
  %v65 = vunpack.c.l.bf16 %v49
  %v67 = vlaneseq
  %v68 = vshrl.u32 %v67, 7
  %v69 = vsub.s32 0, %v68
  %v70 = vrot.slane %v30, %v69
  %v72 = vmul.f32 %v50, %v70
  %v73 = vmul.f32 %v51, %v70
  %v74 = vmul.f32 %v52, %v70
  %v75 = vmul.f32 %v53, %v70
  %v76 = vmul.f32 %v54, %v70
  %v77 = vmul.f32 %v55, %v70
  %v78 = vmul.f32 %v56, %v70
  %v79 = vmul.f32 %v57, %v70
  %v80 = vmul.f32 %v58, %v70
  %v81 = vmul.f32 %v59, %v70
  %v82 = vmul.f32 %v60, %v70
  %v83 = vmul.f32 %v61, %v70
  %v84 = vmul.f32 %v62, %v70
  %v85 = vmul.f32 %v63, %v70
  %v86 = vmul.f32 %v64, %v70
  %v87 = vmul.f32 %v65, %v70
  %v89 = vlaneseq
  %v90 = vshrl.u32 %v89, 7
  %v91 = vsub.s32 0, %v90
  %v92 = vrot.slane %v33, %v91
  %v94 = vadd.f32 %v72, %v92
  %v95 = vadd.f32 %v73, %v92
  %v96 = vadd.f32 %v74, %v92
  %v97 = vadd.f32 %v75, %v92
  %v98 = vadd.f32 %v76, %v92
  %v99 = vadd.f32 %v77, %v92
  %v100 = vadd.f32 %v78, %v92
  %v101 = vadd.f32 %v79, %v92
  %v102 = vadd.f32 %v80, %v92
  %v103 = vadd.f32 %v81, %v92
  %v104 = vadd.f32 %v82, %v92
  %v105 = vadd.f32 %v83, %v92
  %v106 = vadd.f32 %v84, %v92
  %v107 = vadd.f32 %v85, %v92
  %v108 = vadd.f32 %v86, %v92
  %v109 = vadd.f32 %v87, %v92
  %vm110 = vcmp.ge.f32.partialorder %v94, 0.0
  %vm111 = vcmp.ge.f32.partialorder %v95, 0.0
  %vm112 = vcmp.ge.f32.partialorder %v96, 0.0
  %vm113 = vcmp.ge.f32.partialorder %v97, 0.0
  %vm114 = vcmp.ge.f32.partialorder %v98, 0.0
  %vm115 = vcmp.ge.f32.partialorder %v99, 0.0
  %vm116 = vcmp.ge.f32.partialorder %v100, 0.0
  %vm117 = vcmp.ge.f32.partialorder %v101, 0.0
  %vm118 = vcmp.ge.f32.partialorder %v102, 0.0
  %vm119 = vcmp.ge.f32.partialorder %v103, 0.0
  %vm120 = vcmp.ge.f32.partialorder %v104, 0.0
  %vm121 = vcmp.ge.f32.partialorder %v105, 0.0
  %vm122 = vcmp.ge.f32.partialorder %v106, 0.0
  %vm123 = vcmp.ge.f32.partialorder %v107, 0.0
  %vm124 = vcmp.ge.f32.partialorder %v108, 0.0
  %vm125 = vcmp.ge.f32.partialorder %v109, 0.0
  %v126 = vmul.f32 %v94, 0.2
  %v127 = vmul.f32 %v95, 0.2
  %v128 = vmul.f32 %v96, 0.2
  %v129 = vmul.f32 %v97, 0.2
  %v130 = vmul.f32 %v98, 0.2
  %v131 = vmul.f32 %v99, 0.2
  %v132 = vmul.f32 %v100, 0.2
  %v133 = vmul.f32 %v101, 0.2
  %v134 = vmul.f32 %v102, 0.2
  %v135 = vmul.f32 %v103, 0.2
  %v136 = vmul.f32 %v104, 0.2
  %v137 = vmul.f32 %v105, 0.2
  %v138 = vmul.f32 %v106, 0.2
  %v139 = vmul.f32 %v107, 0.2
  %v140 = vmul.f32 %v108, 0.2
  %v141 = vmul.f32 %v109, 0.2
  %v142 = vsel %vm110, %v94, %v126
  %v143 = vsel %vm111, %v95, %v127
  %v144 = vsel %vm112, %v96, %v128
  %v145 = vsel %vm113, %v97, %v129
  %v146 = vsel %vm114, %v98, %v130
  %v147 = vsel %vm115, %v99, %v131
  %v148 = vsel %vm116, %v100, %v132
  %v149 = vsel %vm117, %v101, %v133
  %v150 = vsel %vm118, %v102, %v134
  %v151 = vsel %vm119, %v103, %v135
  %v152 = vsel %vm120, %v104, %v136
  %v153 = vsel %vm121, %v105, %v137
  %v154 = vsel %vm122, %v106, %v138
  %v155 = vsel %vm123, %v107, %v139
  %v156 = vsel %vm124, %v108, %v140
  %v157 = vsel %vm125, %v109, %v141
  %v158 = vpack.c.bf16 %v143, %v142
  %v159 = vpack.c.bf16 %v145, %v144
  %v160 = vpack.c.bf16 %v147, %v146
  %v161 = vpack.c.bf16 %v149, %v148
  %v162 = vpack.c.bf16 %v151, %v150
  %v163 = vpack.c.bf16 %v153, %v152
  %v164 = vpack.c.bf16 %v155, %v154
  %v165 = vpack.c.bf16 %v157, %v156
  %v174 = vunpack.c.l.b16 %v158
  %v175 = vunpack.c.h.b16 %v158
  %v176 = vunpack.c.l.b16 %v159
  %v177 = vunpack.c.h.b16 %v159
  %v178 = vunpack.c.l.b16 %v160
  %v179 = vunpack.c.h.b16 %v160
  %v180 = vunpack.c.l.b16 %v161
  %v181 = vunpack.c.h.b16 %v161
  %v182 = vunpack.c.l.b16 %v162
  %v183 = vunpack.c.h.b16 %v162
  %v184 = vunpack.c.l.b16 %v163
  %v185 = vunpack.c.h.b16 %v163
  %v186 = vunpack.c.l.b16 %v164
  %v187 = vunpack.c.h.b16 %v164
  %v188 = vunpack.c.l.b16 %v165
  %v189 = vunpack.c.h.b16 %v165
  %v190 = vpack.c.b16 %v174, %v174
  %v191 = vpack.c.b16 %v175, %v175
  %v192 = vpack.c.b16 %v176, %v176
  %v193 = vpack.c.b16 %v177, %v177
  %v194 = vpack.c.b16 %v178, %v178
  %v195 = vpack.c.b16 %v179, %v179
  %v196 = vpack.c.b16 %v180, %v180
  %v197 = vpack.c.b16 %v181, %v181
  %v198 = vpack.c.b16 %v182, %v182
  %v199 = vpack.c.b16 %v183, %v183
  %v200 = vpack.c.b16 %v184, %v184
  %v201 = vpack.c.b16 %v185, %v185
  %v202 = vpack.c.b16 %v186, %v186
  %v203 = vpack.c.b16 %v187, %v187
  %v204 = vpack.c.b16 %v188, %v188
  %v205 = vpack.c.b16 %v189, %v189
  %222 = vst [vmem:[%s5] sm:$0xf] %v190
  %223 = vst [vmem:[%s5 + $0x4] sm:$0xf] %v191
  %224 = vst [vmem:[%s5 + $0x8] sm:$0xf] %v192
  %225 = vst [vmem:[%s5 + $0xc] sm:$0xf] %v193
  %226 = vst [vmem:[%s5 + $0x10] sm:$0xf] %v194
  %227 = vst [vmem:[%s5 + $0x14] sm:$0xf] %v195
  %228 = vst [vmem:[%s5 + $0x18] sm:$0xf] %v196
  %229 = vst [vmem:[%s5 + $0x1c] sm:$0xf] %v197
  %230 = vst [vmem:[%s5 + $0x20] sm:$0xf] %v198
  %231 = vst [vmem:[%s5 + $0x24] sm:$0xf] %v199
  %232 = vst [vmem:[%s5 + $0x28] sm:$0xf] %v200
  %233 = vst [vmem:[%s5 + $0x2c] sm:$0xf] %v201
  %234 = vst [vmem:[%s5 + $0x30] sm:$0xf] %v202
  %235 = vst [vmem:[%s5 + $0x34] sm:$0xf] %v203
  %236 = vst [vmem:[%s5 + $0x38] sm:$0xf] %v204
  %237 = vst [vmem:[%s5 + $0x3c] sm:$0xf] %v205
  // Predicated region
  $region22: #{_lambda_.10} parent=0 // pred_check
    _
  $region23: #{_lambda_.10} parent=0 // pred_check_branch
    %239 = sbr.rel (0) target = $region25
  $region24: #{_lambda_.10} parent=0 // pred_region
    _
  $region25: #{_lambda_.10} parent=0 // pred_fallthru
    _
  // Predicated region
  $region26: #{_lambda_.10} parent=0 // pred_check
    _
  $region27: #{_lambda_.10} parent=0 // pred_check_branch
    %241 = sbr.rel (0) target = $region29
  $region28: #{_lambda_.10} parent=0 // pred_region
    _
  $region29: #{_lambda_.10} parent=0 // pred_fallthru
    _

// kernel: _lambda_.11
$region0: #{_lambda_.11}
  #allocation0 [shape = 'u32[]', space=smem, size = 0x4, offset = 0x4, fixed_abs, tag = 'smem constant byte address 0x4 - core index']
  #allocation1 [shape = 'u32[144,128]{1,0:T(1,128)}', space=vmem, size = 0x12000, scoped, tag = 'internal scratch']
  %s0 = inlined_call_operand.vmem [shape: bf16[32,512], index: 0, kind: input, shape index: {}]
  %s1 = inlined_call_operand.vmem [shape: bf16[512,128], index: 1, kind: input, shape index: {}]
  %s2 = inlined_call_operand.vmem [shape: bf16[32,128], index: 2, kind: output, shape index: {0}]
  %s3 = inlined_call_operand.vmem [shape: f32[1,2,128], index: 3, kind: output, shape index: {1}]
  %4 = xla_tuple %s2, %s3
  %s5 = sld [smem:[#allocation0]]
  $region26: #{_lambda_.11} parent=0
    _
  %s7 = ssub.s32 1, %s5
  %s8 = scalar_select 0, %s7, %s5
  // Predicated region
  $region2: #{_lambda_.11} parent=0 // pred_check
    _
  $region3: #{_lambda_.11} parent=0 // pred_check_branch
    %10 = sbr.rel (0) target = $region5
  $region4: #{_lambda_.11} parent=0 // pred_region
    _
  $region5: #{_lambda_.11} parent=0 // pred_fallthru
    _
  // Predicated region
  $region6: #{_lambda_.11} parent=0 // pred_check
    _
  $region7: #{_lambda_.11} parent=0 // pred_check_branch
    %12 = sbr.rel (0) target = $region9
  $region8: #{_lambda_.11} parent=0 // pred_region
    _
  $region9: #{_lambda_.11} parent=0 // pred_fallthru
    _
  %v14 = vld [vmem:[%s0] sm:$0xff]
  %v15 = vld [vmem:[%s0 + $0x8] sm:$0xff]
  %v16 = vld [vmem:[%s0 + $0x10] sm:$0xff]
  %v17 = vld [vmem:[%s0 + $0x18] sm:$0xff]
  %v18 = vld [vmem:[%s0 + $0x20] sm:$0xff]
  %v19 = vld [vmem:[%s0 + $0x28] sm:$0xff]
  %v20 = vld [vmem:[%s0 + $0x30] sm:$0xff]
  %v21 = vld [vmem:[%s0 + $0x38] sm:$0xff]
  %v22 = vld [vmem:[%s1] sm:$0xf]
  %v23 = vld [vmem:[%s1 + $0x4] sm:$0xf]
  %v24 = vld [vmem:[%s1 + $0x8] sm:$0xf]
  %v25 = vld [vmem:[%s1 + $0xc] sm:$0xf]
  %v26 = vld [vmem:[%s1 + $0x10] sm:$0xf]
  %v27 = vld [vmem:[%s1 + $0x14] sm:$0xf]
  %v28 = vld [vmem:[%s1 + $0x18] sm:$0xf]
  %v29 = vld [vmem:[%s1 + $0x1c] sm:$0xf]
  %v30 = vld [vmem:[%s1 + $0x20] sm:$0xf]
  %v31 = vld [vmem:[%s1 + $0x24] sm:$0xf]
  %v32 = vld [vmem:[%s1 + $0x28] sm:$0xf]
  %v33 = vld [vmem:[%s1 + $0x2c] sm:$0xf]
  %v34 = vld [vmem:[%s1 + $0x30] sm:$0xf]
  %v35 = vld [vmem:[%s1 + $0x34] sm:$0xf]
  %v36 = vld [vmem:[%s1 + $0x38] sm:$0xf]
  %v37 = vld [vmem:[%s1 + $0x3c] sm:$0xf]
  %v38 = vld [vmem:[%s1 + $0x40] sm:$0xf]
  %v39 = vld [vmem:[%s1 + $0x44] sm:$0xf]
  %v40 = vld [vmem:[%s1 + $0x48] sm:$0xf]
  %v41 = vld [vmem:[%s1 + $0x4c] sm:$0xf]
  %v42 = vld [vmem:[%s1 + $0x50] sm:$0xf]
  %v43 = vld [vmem:[%s1 + $0x54] sm:$0xf]
  %v44 = vld [vmem:[%s1 + $0x58] sm:$0xf]
  %v45 = vld [vmem:[%s1 + $0x5c] sm:$0xf]
  %v46 = vld [vmem:[%s1 + $0x60] sm:$0xf]
  %v47 = vld [vmem:[%s1 + $0x64] sm:$0xf]
  %v48 = vld [vmem:[%s1 + $0x68] sm:$0xf]
  %v49 = vld [vmem:[%s1 + $0x6c] sm:$0xf]
  %v50 = vld [vmem:[%s1 + $0x70] sm:$0xf]
  %v51 = vld [vmem:[%s1 + $0x74] sm:$0xf]
  %v52 = vld [vmem:[%s1 + $0x78] sm:$0xf]
  %v53 = vld [vmem:[%s1 + $0x7c] sm:$0xf]
  %v54 = vld [vmem:[%s1 + $0x80] sm:$0xf]
  %v55 = vld [vmem:[%s1 + $0x84] sm:$0xf]
  %v56 = vld [vmem:[%s1 + $0x88] sm:$0xf]
  %v57 = vld [vmem:[%s1 + $0x8c] sm:$0xf]
  %v58 = vld [vmem:[%s1 + $0x90] sm:$0xf]
  %v59 = vld [vmem:[%s1 + $0x94] sm:$0xf]
  %v60 = vld [vmem:[%s1 + $0x98] sm:$0xf]
  %v61 = vld [vmem:[%s1 + $0x9c] sm:$0xf]
  %v62 = vld [vmem:[%s1 + $0xa0] sm:$0xf]
  %v63 = vld [vmem:[%s1 + $0xa4] sm:$0xf]
  %v64 = vld [vmem:[%s1 + $0xa8] sm:$0xf]
  %v65 = vld [vmem:[%s1 + $0xac] sm:$0xf]
  %v66 = vld [vmem:[%s1 + $0xb0] sm:$0xf]
  %v67 = vld [vmem:[%s1 + $0xb4] sm:$0xf]
  %v68 = vld [vmem:[%s1 + $0xb8] sm:$0xf]
  %v69 = vld [vmem:[%s1 + $0xbc] sm:$0xf]
  %v70 = vld [vmem:[%s1 + $0xc0] sm:$0xf]
  %v71 = vld [vmem:[%s1 + $0xc4] sm:$0xf]
  %v72 = vld [vmem:[%s1 + $0xc8] sm:$0xf]
  %v73 = vld [vmem:[%s1 + $0xcc] sm:$0xf]
  %v74 = vld [vmem:[%s1 + $0xd0] sm:$0xf]
  %v75 = vld [vmem:[%s1 + $0xd4] sm:$0xf]
  %v76 = vld [vmem:[%s1 + $0xd8] sm:$0xf]
  %v77 = vld [vmem:[%s1 + $0xdc] sm:$0xf]
  %v78 = vld [vmem:[%s1 + $0xe0] sm:$0xf]
  %v79 = vld [vmem:[%s1 + $0xe4] sm:$0xf]
  %v80 = vld [vmem:[%s1 + $0xe8] sm:$0xf]
  %v81 = vld [vmem:[%s1 + $0xec] sm:$0xf]
  %v82 = vld [vmem:[%s1 + $0xf0] sm:$0xf]
  %v83 = vld [vmem:[%s1 + $0xf4] sm:$0xf]
  %v84 = vld [vmem:[%s1 + $0xf8] sm:$0xf]
  %v85 = vld [vmem:[%s1 + $0xfc] sm:$0xf]
  %v94 = vunpack.c.l.b16 %v14
  %v95 = vunpack.c.h.b16 %v14
  %v96 = vunpack.c.l.b16 %v15
  %v97 = vunpack.c.h.b16 %v15
  %v98 = vunpack.c.l.b16 %v16
  %v99 = vunpack.c.h.b16 %v16
  %v100 = vunpack.c.l.b16 %v17
  %v101 = vunpack.c.h.b16 %v17
  %v102 = vunpack.c.l.b16 %v18
  %v103 = vunpack.c.h.b16 %v18
  %v104 = vunpack.c.l.b16 %v19
  %v105 = vunpack.c.h.b16 %v19
  %v106 = vunpack.c.l.b16 %v20
  %v107 = vunpack.c.h.b16 %v20
  %v108 = vunpack.c.l.b16 %v21
  %v109 = vunpack.c.h.b16 %v21
  %v110 = vpack.c.b16 %v98, %v94
  %v111 = vpack.c.b16 %v99, %v95
  %v112 = vpack.c.b16 %v100, %v96
  %v113 = vpack.c.b16 %v101, %v97
  %v114 = vpack.c.b16 %v106, %v102
  %v115 = vpack.c.b16 %v107, %v103
  %v116 = vpack.c.b16 %v108, %v104
  %v117 = vpack.c.b16 %v109, %v105
  %v190 = vunpack.c.l.b16 %v22
  %v191 = vunpack.c.l.b16 %v23
  %v192 = vunpack.c.l.b16 %v24
  %v193 = vunpack.c.l.b16 %v25
  %v194 = vunpack.c.l.b16 %v26
  %v195 = vunpack.c.l.b16 %v27
  %v196 = vunpack.c.l.b16 %v28
  %v197 = vunpack.c.l.b16 %v29
  %v198 = vunpack.c.l.b16 %v30
  %v199 = vunpack.c.l.b16 %v31
  %v200 = vunpack.c.l.b16 %v32
  %v201 = vunpack.c.l.b16 %v33
  %v202 = vunpack.c.l.b16 %v34
  %v203 = vunpack.c.l.b16 %v35
  %v204 = vunpack.c.l.b16 %v36
  %v205 = vunpack.c.l.b16 %v37
  %v206 = vunpack.c.l.b16 %v38
  %v207 = vunpack.c.l.b16 %v39
  %v208 = vunpack.c.l.b16 %v40
  %v209 = vunpack.c.l.b16 %v41
  %v210 = vunpack.c.l.b16 %v42
  %v211 = vunpack.c.l.b16 %v43
  %v212 = vunpack.c.l.b16 %v44
  %v213 = vunpack.c.l.b16 %v45
  %v214 = vunpack.c.l.b16 %v46
  %v215 = vunpack.c.l.b16 %v47
  %v216 = vunpack.c.l.b16 %v48
  %v217 = vunpack.c.l.b16 %v49
  %v218 = vunpack.c.l.b16 %v50
  %v219 = vunpack.c.l.b16 %v51
  %v220 = vunpack.c.l.b16 %v52
  %v221 = vunpack.c.l.b16 %v53
  %v222 = vunpack.c.l.b16 %v54
  %v223 = vunpack.c.l.b16 %v55
  %v224 = vunpack.c.l.b16 %v56
  %v225 = vunpack.c.l.b16 %v57
  %v226 = vunpack.c.l.b16 %v58
  %v227 = vunpack.c.l.b16 %v59
  %v228 = vunpack.c.l.b16 %v60
  %v229 = vunpack.c.l.b16 %v61
  %v230 = vunpack.c.l.b16 %v62
  %v231 = vunpack.c.l.b16 %v63
  %v232 = vunpack.c.l.b16 %v64
  %v233 = vunpack.c.l.b16 %v65
  %v234 = vunpack.c.l.b16 %v66
  %v235 = vunpack.c.l.b16 %v67
  %v236 = vunpack.c.l.b16 %v68
  %v237 = vunpack.c.l.b16 %v69
  %v238 = vunpack.c.l.b16 %v70
  %v239 = vunpack.c.l.b16 %v71
  %v240 = vunpack.c.l.b16 %v72
  %v241 = vunpack.c.l.b16 %v73
  %v242 = vunpack.c.l.b16 %v74
  %v243 = vunpack.c.l.b16 %v75
  %v244 = vunpack.c.l.b16 %v76
  %v245 = vunpack.c.l.b16 %v77
  %v246 = vunpack.c.l.b16 %v78
  %v247 = vunpack.c.l.b16 %v79
  %v248 = vunpack.c.l.b16 %v80
  %v249 = vunpack.c.l.b16 %v81
  %v250 = vunpack.c.l.b16 %v82
  %v251 = vunpack.c.l.b16 %v83
  %v252 = vunpack.c.l.b16 %v84
  %v253 = vunpack.c.l.b16 %v85
  %v254 = vpack.c.b16 %v191, %v190
  %v255 = vpack.c.b16 %v193, %v192
  %v256 = vpack.c.b16 %v195, %v194
  %v257 = vpack.c.b16 %v197, %v196
  %v258 = vpack.c.b16 %v199, %v198
  %v259 = vpack.c.b16 %v201, %v200
  %v260 = vpack.c.b16 %v203, %v202
  %v261 = vpack.c.b16 %v205, %v204
  %v262 = vpack.c.b16 %v207, %v206
  %v263 = vpack.c.b16 %v209, %v208
  %v264 = vpack.c.b16 %v211, %v210
  %v265 = vpack.c.b16 %v213, %v212
  %v266 = vpack.c.b16 %v215, %v214
  %v267 = vpack.c.b16 %v217, %v216
  %v268 = vpack.c.b16 %v219, %v218
  %v269 = vpack.c.b16 %v221, %v220
  %v270 = vpack.c.b16 %v223, %v222
  %v271 = vpack.c.b16 %v225, %v224
  %v272 = vpack.c.b16 %v227, %v226
  %v273 = vpack.c.b16 %v229, %v228
  %v274 = vpack.c.b16 %v231, %v230
  %v275 = vpack.c.b16 %v233, %v232
  %v276 = vpack.c.b16 %v235, %v234
  %v277 = vpack.c.b16 %v237, %v236
  %v278 = vpack.c.b16 %v239, %v238
  %v279 = vpack.c.b16 %v241, %v240
  %v280 = vpack.c.b16 %v243, %v242
  %v281 = vpack.c.b16 %v245, %v244
  %v282 = vpack.c.b16 %v247, %v246
  %v283 = vpack.c.b16 %v249, %v248
  %v284 = vpack.c.b16 %v251, %v250
  %v285 = vpack.c.b16 %v253, %v252
  %318 = vmatprep.subr.bf16.mxu0 0
  %319 = vmatpush1.bf16.msra.mxu0 %v254
  %320 = vmatprep.subr.bf16.mxu0 0
  %321 = vmatpush1.bf16.msra.mxu0 %v255
  %322 = vmatprep.subr.bf16.mxu0 0
  %323 = vmatpush1.bf16.msra.mxu0 %v256
  %324 = vmatprep.subr.bf16.mxu0 0
  %325 = vmatpush1.bf16.msra.mxu0 %v257
  %326 = vmatprep.subr.bf16.mxu0 0
  %327 = vmatpush1.bf16.msra.mxu0 %v258
  %328 = vmatprep.subr.bf16.mxu0 0
  %329 = vmatpush1.bf16.msra.mxu0 %v259
  %330 = vmatprep.subr.bf16.mxu0 0
  %331 = vmatpush1.bf16.msra.mxu0 %v260
  %332 = vmatprep.subr.bf16.mxu0 0
  %333 = vmatpush1.bf16.msra.mxu0 %v261
  %334 = vmatprep.subr.bf16.mxu0 0
  %335 = vmatpush1.bf16.msra.mxu0 %v262
  %336 = vmatprep.subr.bf16.mxu0 0
  %337 = vmatpush1.bf16.msra.mxu0 %v263
  %338 = vmatprep.subr.bf16.mxu0 0
  %339 = vmatpush1.bf16.msra.mxu0 %v264
  %340 = vmatprep.subr.bf16.mxu0 0
  %341 = vmatpush1.bf16.msra.mxu0 %v265
  %342 = vmatprep.subr.bf16.mxu0 0
  %343 = vmatpush1.bf16.msra.mxu0 %v266
  %344 = vmatprep.subr.bf16.mxu0 0
  %345 = vmatpush1.bf16.msra.mxu0 %v267
  %346 = vmatprep.subr.bf16.mxu0 0
  %347 = vmatpush1.bf16.msra.mxu0 %v268
  %348 = vmatprep.subr.bf16.mxu0 0
  %349 = vmatpush1.bf16.msra.mxu0 %v269
  %350 = vmatprep.mubr.bf16.mxu0 %v111
  %351 = vmatmul.mubr.bf16.gmra.mrb[0].mxu0 %v110
  %v352 = vpop.f32.mrb[0].mxu0
  %v353 = vadd.f32 0.0, %v352
  %v354 = vpop.f32.mrb[0].mxu0
  %v355 = vpop.f32.mrb[0].mxu0
  %v356 = vadd.f32 0.0, %v355
  %v357 = vpop.f32.mrb[0].mxu0
  %358 = vmatprep.mubr.bf16.mxu0 %v115
  %359 = vmatmul.mubr.bf16.gmra.mrb[0].mxu0 %v114
  %v360 = vpop.f32.mrb[0].mxu0
  %v361 = vadd.f32 0.0, %v360
  %v362 = vpop.f32.mrb[0].mxu0
  %v363 = vpop.f32.mrb[0].mxu0
  %v364 = vadd.f32 0.0, %v363
  %v365 = vpop.f32.mrb[0].mxu0
  %366 = vdwg.mxu0
  %367 = vmatprep.subr.bf16.mxu0 0
  %368 = vmatpush1.bf16.msra.mxu0 %v270
  %369 = vmatprep.subr.bf16.mxu0 0
  %370 = vmatpush1.bf16.msra.mxu0 %v271
  %371 = vmatprep.subr.bf16.mxu0 0
  %372 = vmatpush1.bf16.msra.mxu0 %v272
  %373 = vmatprep.subr.bf16.mxu0 0
  %374 = vmatpush1.bf16.msra.mxu0 %v273
  %375 = vmatprep.subr.bf16.mxu0 0
  %376 = vmatpush1.bf16.msra.mxu0 %v274
  %377 = vmatprep.subr.bf16.mxu0 0
  %378 = vmatpush1.bf16.msra.mxu0 %v275
  %379 = vmatprep.subr.bf16.mxu0 0
  %380 = vmatpush1.bf16.msra.mxu0 %v276
  %381 = vmatprep.subr.bf16.mxu0 0
  %382 = vmatpush1.bf16.msra.mxu0 %v277
  %383 = vmatprep.subr.bf16.mxu0 0
  %384 = vmatpush1.bf16.msra.mxu0 %v278
  %385 = vmatprep.subr.bf16.mxu0 0
  %386 = vmatpush1.bf16.msra.mxu0 %v279
  %387 = vmatprep.subr.bf16.mxu0 0
  %388 = vmatpush1.bf16.msra.mxu0 %v280
  %389 = vmatprep.subr.bf16.mxu0 0
  %390 = vmatpush1.bf16.msra.mxu0 %v281
  %391 = vmatprep.subr.bf16.mxu0 0
  %392 = vmatpush1.bf16.msra.mxu0 %v282
  %393 = vmatprep.subr.bf16.mxu0 0
  %394 = vmatpush1.bf16.msra.mxu0 %v283
  %395 = vmatprep.subr.bf16.mxu0 0
  %396 = vmatpush1.bf16.msra.mxu0 %v284
  %397 = vmatprep.subr.bf16.mxu0 0
  %398 = vmatpush1.bf16.msra.mxu0 %v285
  %399 = vmatprep.mubr.bf16.mxu0 %v113
  %400 = vmatmul.mubr.bf16.gmra.mrb[0].mxu0 %v112
  %v401 = vpop.f32.mrb[0].mxu0
  %v402 = vadd.f32 %v353, %v401
  %v403 = vpop.f32.mrb[0].mxu0
  %v404 = vpop.f32.mrb[0].mxu0
  %v405 = vadd.f32 %v356, %v404
  %v406 = vpop.f32.mrb[0].mxu0
  %407 = vmatprep.mubr.bf16.mxu0 %v117
  %408 = vmatmul.mubr.bf16.gmra.mrb[0].mxu0 %v116
  %v409 = vpop.f32.mrb[0].mxu0
  %v410 = vadd.f32 %v361, %v409
  %v411 = vpop.f32.mrb[0].mxu0
  %v412 = vpop.f32.mrb[0].mxu0
  %v413 = vadd.f32 %v364, %v412
  %v414 = vpop.f32.mrb[0].mxu0
  %415 = vdwg.mxu0
  %v416 = vpack.c.bf16 %v405, %v402
  %v417 = vpack.c.bf16 %v413, %v410
  %v420 = vunpack.c.l.b16 %v416
  %v421 = vunpack.c.h.b16 %v416
  %v422 = vunpack.c.l.b16 %v417
  %v423 = vunpack.c.h.b16 %v417
  %v424 = vpack.c.b16 %v420, %v420
  %v425 = vpack.c.b16 %v421, %v421
  %v426 = vpack.c.b16 %v422, %v422
  %v427 = vpack.c.b16 %v423, %v423
  %432 = vst [vmem:[%s2] sm:$0xf] %v424
  %433 = vst [vmem:[%s2 + $0x4] sm:$0xf] %v425
  %434 = vst [vmem:[%s2 + $0x8] sm:$0xf] %v426
  %435 = vst [vmem:[%s2 + $0xc] sm:$0xf] %v427
  %v436 = vadd.f32 %v402, %v405
  %v437 = vadd.f32 %v436, %v410
  %v438 = vadd.f32 %v437, %v413
  %v439 = vrot.slane %v438, 4
  %v440 = vadd.f32 %v438, %v439
  %v441 = vrot.slane %v440, 2
  %v442 = vadd.f32 %v440, %v441
  %v443 = vrot.slane %v442, 1
  %v444 = vadd.f32 %v442, %v443
  %445 = vst [vmem:[%s3] sm:$0x1] %v444
  %v446 = vmul.f32 %v402, %v402
  %v447 = vmul.f32 %v405, %v405
  %v448 = vmul.f32 %v410, %v410
  %v449 = vmul.f32 %v413, %v413
  %v450 = vadd.f32 %v446, %v447
  %v451 = vadd.f32 %v450, %v448
  %v452 = vadd.f32 %v451, %v449
  %v453 = vrot.slane %v452, 4
  %v454 = vadd.f32 %v452, %v453
  %v455 = vrot.slane %v454, 2
  %v456 = vadd.f32 %v454, %v455
  %v457 = vrot.slane %v456, 1
  %v458 = vadd.f32 %v456, %v457
  %459 = vst [vmem:[%s3 + $0x1] sm:$0x1] %v458
  // Predicated region
  $region10: #{_lambda_.11} parent=0 // pred_check
    _
  $region11: #{_lambda_.11} parent=0 // pred_check_branch
    %461 = sbr.rel (0) target = $region13
  $region12: #{_lambda_.11} parent=0 // pred_region
    _
  $region13: #{_lambda_.11} parent=0 // pred_fallthru
    _
  // Predicated region
  $region14: #{_lambda_.11} parent=0 // pred_check
    _
  $region15: #{_lambda_.11} parent=0 // pred_check_branch
    %463 = sbr.rel (0) target = $region17
  $region16: #{_lambda_.11} parent=0 // pred_region
    _
  $region17: #{_lambda_.11} parent=0 // pred_fallthru
    _
  // Predicated region
  $region18: #{_lambda_.11} parent=0 // pred_check
    _
  $region19: #{_lambda_.11} parent=0 // pred_check_branch
    %465 = sbr.rel (0) target = $region21
  $region20: #{_lambda_.11} parent=0 // pred_region
    _
  $region21: #{_lambda_.11} parent=0 // pred_fallthru
    _
  // Predicated region
  $region22: #{_lambda_.11} parent=0 // pred_check
    _
  $region23: #{_lambda_.11} parent=0 // pred_check_branch
    %467 = sbr.rel (0) target = $region25
  $region24: #{_lambda_.11} parent=0 // pred_region
    _
  $region25: #{_lambda_.11} parent=0 // pred_fallthru
    _

// kernel: _lambda_.12
$region0: #{_lambda_.12}
  #allocation0 [shape = 'u32[]', space=smem, size = 0x4, offset = 0x4, fixed_abs, tag = 'smem constant byte address 0x4 - core index']
  #allocation1 [shape = 'u32[144,128]{1,0:T(1,128)}', space=vmem, size = 0x12000, scoped, tag = 'internal scratch']
  %s0 = inlined_call_operand.vmem [shape: bf16[32,128], index: 0, kind: input, shape index: {}, may-alias: {0,5}]
  %s1 = inlined_call_operand.vmem [shape: f32[1,128], index: 1, kind: input, shape index: {}]
  %s2 = inlined_call_operand.vmem [shape: f32[1,128], index: 2, kind: input, shape index: {}]
  %s3 = inlined_call_operand.vmem [shape: f32[1,128], index: 3, kind: input, shape index: {}]
  %s4 = inlined_call_operand.vmem [shape: f32[1,128], index: 4, kind: input, shape index: {}]
  %s5 = inlined_call_operand.vmem [shape: bf16[32,128], index: 5, kind: output, shape index: {}, may-alias: {0,5}]
  %s6 = sld [smem:[#allocation0]]
  $region30: #{_lambda_.12} parent=0
    _
  %s8 = ssub.s32 1, %s6
  %s9 = scalar_select 0, %s8, %s6
  // Predicated region
  $region2: #{_lambda_.12} parent=0 // pred_check
    _
  $region3: #{_lambda_.12} parent=0 // pred_check_branch
    %11 = sbr.rel (0) target = $region5
  $region4: #{_lambda_.12} parent=0 // pred_region
    _
  $region5: #{_lambda_.12} parent=0 // pred_fallthru
    _
  // Predicated region
  $region6: #{_lambda_.12} parent=0 // pred_check
    _
  $region7: #{_lambda_.12} parent=0 // pred_check_branch
    %13 = sbr.rel (0) target = $region9
  $region8: #{_lambda_.12} parent=0 // pred_region
    _
  $region9: #{_lambda_.12} parent=0 // pred_fallthru
    _
  // Predicated region
  $region10: #{_lambda_.12} parent=0 // pred_check
    _
  $region11: #{_lambda_.12} parent=0 // pred_check_branch
    %15 = sbr.rel (0) target = $region13
  $region12: #{_lambda_.12} parent=0 // pred_region
    _
  $region13: #{_lambda_.12} parent=0 // pred_fallthru
    _
  // Predicated region
  $region14: #{_lambda_.12} parent=0 // pred_check
    _
  $region15: #{_lambda_.12} parent=0 // pred_check_branch
    %17 = sbr.rel (0) target = $region17
  $region16: #{_lambda_.12} parent=0 // pred_region
    _
  $region17: #{_lambda_.12} parent=0 // pred_fallthru
    _
  // Predicated region
  $region18: #{_lambda_.12} parent=0 // pred_check
    _
  $region19: #{_lambda_.12} parent=0 // pred_check_branch
    %19 = sbr.rel (0) target = $region21
  $region20: #{_lambda_.12} parent=0 // pred_region
    _
  $region21: #{_lambda_.12} parent=0 // pred_fallthru
    _
  %v20 = vld [vmem:[%s1] sm:$0x1]
  %v21 = vmul.f32 %v20, 0.03125
  %v22 = vld [vmem:[%s2] sm:$0x1]
  %v23 = vmul.f32 %v22, 0.03125
  %v24 = vmul.f32 %v21, %v21
  %v25 = vsub.f32 %v23, %v24
  %v26 = vmax.f32 %v25, 0.0
  %v27 = vld [vmem:[%s3] sm:$0x1]
  %v28 = vadd.f32 %v26, 1e-05
  %v29 = vrsqrt.pop %v28
  %v30 = vmul.f32 %v27, %v29
  %v31 = vld [vmem:[%s4] sm:$0x1]
  %v32 = vmul.f32 %v21, %v30
  %v33 = vsub.f32 %v31, %v32
  %v34 = vld [vmem:[%s0] sm:$0xf]
  %v35 = vld [vmem:[%s0 + $0x4] sm:$0xf]
  %v36 = vld [vmem:[%s0 + $0x8] sm:$0xf]
  %v37 = vld [vmem:[%s0 + $0xc] sm:$0xf]
  %v38 = vunpack.c.l.bf16 %v34
  %v39 = vunpack.c.l.bf16 %v35
  %v40 = vunpack.c.l.bf16 %v36
  %v41 = vunpack.c.l.bf16 %v37
  %v43 = vlaneseq
  %v44 = vshrl.u32 %v43, 7
  %v45 = vsub.s32 0, %v44
  %v46 = vrot.slane %v30, %v45
  %v48 = vmul.f32 %v38, %v46
  %v49 = vmul.f32 %v39, %v46
  %v50 = vmul.f32 %v40, %v46
  %v51 = vmul.f32 %v41, %v46
  %v53 = vlaneseq
  %v54 = vshrl.u32 %v53, 7
  %v55 = vsub.s32 0, %v54
  %v56 = vrot.slane %v33, %v55
  %v58 = vadd.f32 %v48, %v56
  %v59 = vadd.f32 %v49, %v56
  %v60 = vadd.f32 %v50, %v56
  %v61 = vadd.f32 %v51, %v56
  %vm62 = vcmp.ge.f32.partialorder %v58, 0.0
  %vm63 = vcmp.ge.f32.partialorder %v59, 0.0
  %vm64 = vcmp.ge.f32.partialorder %v60, 0.0
  %vm65 = vcmp.ge.f32.partialorder %v61, 0.0
  %v66 = vmul.f32 %v58, 0.2
  %v67 = vmul.f32 %v59, 0.2
  %v68 = vmul.f32 %v60, 0.2
  %v69 = vmul.f32 %v61, 0.2
  %v70 = vsel %vm62, %v58, %v66
  %v71 = vsel %vm63, %v59, %v67
  %v72 = vsel %vm64, %v60, %v68
  %v73 = vsel %vm65, %v61, %v69
  %v74 = vpack.c.bf16 %v71, %v70
  %v75 = vpack.c.bf16 %v73, %v72
  %v78 = vunpack.c.l.b16 %v74
  %v79 = vunpack.c.h.b16 %v74
  %v80 = vunpack.c.l.b16 %v75
  %v81 = vunpack.c.h.b16 %v75
  %v82 = vpack.c.b16 %v78, %v78
  %v83 = vpack.c.b16 %v79, %v79
  %v84 = vpack.c.b16 %v80, %v80
  %v85 = vpack.c.b16 %v81, %v81
  %90 = vst [vmem:[%s5] sm:$0xf] %v82
  %91 = vst [vmem:[%s5 + $0x4] sm:$0xf] %v83
  %92 = vst [vmem:[%s5 + $0x8] sm:$0xf] %v84
  %93 = vst [vmem:[%s5 + $0xc] sm:$0xf] %v85
  // Predicated region
  $region22: #{_lambda_.12} parent=0 // pred_check
    _
  $region23: #{_lambda_.12} parent=0 // pred_check_branch
    %95 = sbr.rel (0) target = $region25
  $region24: #{_lambda_.12} parent=0 // pred_region
    _
  $region25: #{_lambda_.12} parent=0 // pred_fallthru
    _
  // Predicated region
  $region26: #{_lambda_.12} parent=0 // pred_check
    _
  $region27: #{_lambda_.12} parent=0 // pred_check_branch
    %97 = sbr.rel (0) target = $region29
  $region28: #{_lambda_.12} parent=0 // pred_region
    _
  $region29: #{_lambda_.12} parent=0 // pred_fallthru
    _

// kernel: _lambda_.14
$region0: #{_lambda_.14}
  #allocation0 [shape = 'u32[]', space=smem, size = 0x4, offset = 0x4, fixed_abs, tag = 'smem constant byte address 0x4 - core index']
  #allocation1 [shape = 'u32[144,128]{1,0:T(1,128)}', space=vmem, size = 0x12000, scoped, tag = 'internal scratch']
  %s0 = inlined_call_operand.vmem [shape: bf16[16,128], index: 0, kind: input, shape index: {}, may-alias: {0,5}]
  %s1 = inlined_call_operand.vmem [shape: f32[1,128], index: 1, kind: input, shape index: {}]
  %s2 = inlined_call_operand.vmem [shape: f32[1,128], index: 2, kind: input, shape index: {}]
  %s3 = inlined_call_operand.vmem [shape: f32[1,128], index: 3, kind: input, shape index: {}]
  %s4 = inlined_call_operand.vmem [shape: f32[1,128], index: 4, kind: input, shape index: {}]
  %s5 = inlined_call_operand.vmem [shape: bf16[16,128], index: 5, kind: output, shape index: {}, may-alias: {0,5}]
  %s6 = sld [smem:[#allocation0]]
  $region30: #{_lambda_.14} parent=0
    _
  %s8 = ssub.s32 1, %s6
  %s9 = scalar_select 0, %s8, %s6
  // Predicated region
  $region2: #{_lambda_.14} parent=0 // pred_check
    _
  $region3: #{_lambda_.14} parent=0 // pred_check_branch
    %11 = sbr.rel (0) target = $region5
  $region4: #{_lambda_.14} parent=0 // pred_region
    _
  $region5: #{_lambda_.14} parent=0 // pred_fallthru
    _
  // Predicated region
  $region6: #{_lambda_.14} parent=0 // pred_check
    _
  $region7: #{_lambda_.14} parent=0 // pred_check_branch
    %13 = sbr.rel (0) target = $region9
  $region8: #{_lambda_.14} parent=0 // pred_region
    _
  $region9: #{_lambda_.14} parent=0 // pred_fallthru
    _
  // Predicated region
  $region10: #{_lambda_.14} parent=0 // pred_check
    _
  $region11: #{_lambda_.14} parent=0 // pred_check_branch
    %15 = sbr.rel (0) target = $region13
  $region12: #{_lambda_.14} parent=0 // pred_region
    _
  $region13: #{_lambda_.14} parent=0 // pred_fallthru
    _
  // Predicated region
  $region14: #{_lambda_.14} parent=0 // pred_check
    _
  $region15: #{_lambda_.14} parent=0 // pred_check_branch
    %17 = sbr.rel (0) target = $region17
  $region16: #{_lambda_.14} parent=0 // pred_region
    _
  $region17: #{_lambda_.14} parent=0 // pred_fallthru
    _
  // Predicated region
  $region18: #{_lambda_.14} parent=0 // pred_check
    _
  $region19: #{_lambda_.14} parent=0 // pred_check_branch
    %19 = sbr.rel (0) target = $region21
  $region20: #{_lambda_.14} parent=0 // pred_region
    _
  $region21: #{_lambda_.14} parent=0 // pred_fallthru
    _
  %v20 = vld [vmem:[%s1] sm:$0x1]
  %v21 = vmul.f32 %v20, 0.125
  %v22 = vld [vmem:[%s2] sm:$0x1]
  %v23 = vmul.f32 %v22, 0.125
  %v24 = vmul.f32 %v21, %v21
  %v25 = vsub.f32 %v23, %v24
  %v26 = vmax.f32 %v25, 0.0
  %v27 = vld [vmem:[%s3] sm:$0x1]
  %v28 = vadd.f32 %v26, 1e-05
  %v29 = vrsqrt.pop %v28
  %v30 = vmul.f32 %v27, %v29
  %v31 = vld [vmem:[%s4] sm:$0x1]
  %v32 = vmul.f32 %v21, %v30
  %v33 = vsub.f32 %v31, %v32
  %v34 = vld [vmem:[%s0] sm:$0xf]
  %v35 = vld [vmem:[%s0 + $0x4] sm:$0xf]
  %v36 = vunpack.c.l.bf16 %v34
  %v37 = vunpack.c.l.bf16 %v35
  %v39 = vlaneseq
  %v40 = vshrl.u32 %v39, 7
  %v41 = vsub.s32 0, %v40
  %v42 = vrot.slane %v30, %v41
  %v44 = vmul.f32 %v36, %v42
  %v45 = vmul.f32 %v37, %v42
  %v47 = vlaneseq
  %v48 = vshrl.u32 %v47, 7
  %v49 = vsub.s32 0, %v48
  %v50 = vrot.slane %v33, %v49
  %v52 = vadd.f32 %v44, %v50
  %v53 = vadd.f32 %v45, %v50
  %vm54 = vcmp.ge.f32.partialorder %v52, 0.0
  %vm55 = vcmp.ge.f32.partialorder %v53, 0.0
  %v56 = vmul.f32 %v52, 0.2
  %v57 = vmul.f32 %v53, 0.2
  %v58 = vsel %vm54, %v52, %v56
  %v59 = vsel %vm55, %v53, %v57
  %v60 = vpack.c.bf16 %v59, %v58
  %v62 = vunpack.c.l.b16 %v60
  %v63 = vunpack.c.h.b16 %v60
  %v64 = vpack.c.b16 %v62, %v62
  %v65 = vpack.c.b16 %v63, %v63
  %68 = vst [vmem:[%s5] sm:$0xf] %v64
  %69 = vst [vmem:[%s5 + $0x4] sm:$0xf] %v65
  // Predicated region
  $region22: #{_lambda_.14} parent=0 // pred_check
    _
  $region23: #{_lambda_.14} parent=0 // pred_check_branch
    %71 = sbr.rel (0) target = $region25
  $region24: #{_lambda_.14} parent=0 // pred_region
    _
  $region25: #{_lambda_.14} parent=0 // pred_fallthru
    _
  // Predicated region
  $region26: #{_lambda_.14} parent=0 // pred_check
    _
  $region27: #{_lambda_.14} parent=0 // pred_check_branch
    %73 = sbr.rel (0) target = $region29
  $region28: #{_lambda_.14} parent=0 // pred_region
    _
  $region29: #{_lambda_.14} parent=0 // pred_fallthru
    _

// kernel: _lambda_.13
$region0: #{_lambda_.13}
  #allocation0 [shape = 'u32[]', space=smem, size = 0x4, offset = 0x4, fixed_abs, tag = 'smem constant byte address 0x4 - core index']
  #allocation1 [shape = 'u32[144,128]{1,0:T(1,128)}', space=vmem, size = 0x12000, scoped, tag = 'internal scratch']
  %s0 = inlined_call_operand.vmem [shape: bf16[16,1024], index: 0, kind: input, shape index: {}]
  %s1 = inlined_call_operand.vmem [shape: bf16[1024,128], index: 1, kind: input, shape index: {}]
  %s2 = inlined_call_operand.vmem [shape: bf16[16,128], index: 2, kind: output, shape index: {0}]
  %s3 = inlined_call_operand.vmem [shape: f32[1,2,128], index: 3, kind: output, shape index: {1}]
  %4 = xla_tuple %s2, %s3
  %s5 = sld [smem:[#allocation0]]
  $region26: #{_lambda_.13} parent=0
    _
  %s7 = ssub.s32 1, %s5
  %s8 = scalar_select 0, %s7, %s5
  // Predicated region
  $region2: #{_lambda_.13} parent=0 // pred_check
    _
  $region3: #{_lambda_.13} parent=0 // pred_check_branch
    %10 = sbr.rel (0) target = $region5
  $region4: #{_lambda_.13} parent=0 // pred_region
    _
  $region5: #{_lambda_.13} parent=0 // pred_fallthru
    _
  // Predicated region
  $region6: #{_lambda_.13} parent=0 // pred_check
    _
  $region7: #{_lambda_.13} parent=0 // pred_check_branch
    %12 = sbr.rel (0) target = $region9
  $region8: #{_lambda_.13} parent=0 // pred_region
    _
  $region9: #{_lambda_.13} parent=0 // pred_fallthru
    _
  %v14 = vld [vmem:[%s0] sm:$0xff]
  %v15 = vld [vmem:[%s0 + $0x8] sm:$0xff]
  %v16 = vld [vmem:[%s0 + $0x10] sm:$0xff]
  %v17 = vld [vmem:[%s0 + $0x18] sm:$0xff]
  %v18 = vld [vmem:[%s0 + $0x20] sm:$0xff]
  %v19 = vld [vmem:[%s0 + $0x28] sm:$0xff]
  %v20 = vld [vmem:[%s0 + $0x30] sm:$0xff]
  %v21 = vld [vmem:[%s0 + $0x38] sm:$0xff]
  %v22 = vld [vmem:[%s1] sm:$0xf]
  %v23 = vld [vmem:[%s1 + $0x4] sm:$0xf]
  %v24 = vld [vmem:[%s1 + $0x8] sm:$0xf]
  %v25 = vld [vmem:[%s1 + $0xc] sm:$0xf]
  %v26 = vld [vmem:[%s1 + $0x10] sm:$0xf]
  %v27 = vld [vmem:[%s1 + $0x14] sm:$0xf]
  %v28 = vld [vmem:[%s1 + $0x18] sm:$0xf]
  %v29 = vld [vmem:[%s1 + $0x1c] sm:$0xf]
  %v30 = vld [vmem:[%s1 + $0x20] sm:$0xf]
  %v31 = vld [vmem:[%s1 + $0x24] sm:$0xf]
  %v32 = vld [vmem:[%s1 + $0x28] sm:$0xf]
  %v33 = vld [vmem:[%s1 + $0x2c] sm:$0xf]
  %v34 = vld [vmem:[%s1 + $0x30] sm:$0xf]
  %v35 = vld [vmem:[%s1 + $0x34] sm:$0xf]
  %v36 = vld [vmem:[%s1 + $0x38] sm:$0xf]
  %v37 = vld [vmem:[%s1 + $0x3c] sm:$0xf]
  %v38 = vld [vmem:[%s1 + $0x40] sm:$0xf]
  %v39 = vld [vmem:[%s1 + $0x44] sm:$0xf]
  %v40 = vld [vmem:[%s1 + $0x48] sm:$0xf]
  %v41 = vld [vmem:[%s1 + $0x4c] sm:$0xf]
  %v42 = vld [vmem:[%s1 + $0x50] sm:$0xf]
  %v43 = vld [vmem:[%s1 + $0x54] sm:$0xf]
  %v44 = vld [vmem:[%s1 + $0x58] sm:$0xf]
  %v45 = vld [vmem:[%s1 + $0x5c] sm:$0xf]
  %v46 = vld [vmem:[%s1 + $0x60] sm:$0xf]
  %v47 = vld [vmem:[%s1 + $0x64] sm:$0xf]
  %v48 = vld [vmem:[%s1 + $0x68] sm:$0xf]
  %v49 = vld [vmem:[%s1 + $0x6c] sm:$0xf]
  %v50 = vld [vmem:[%s1 + $0x70] sm:$0xf]
  %v51 = vld [vmem:[%s1 + $0x74] sm:$0xf]
  %v52 = vld [vmem:[%s1 + $0x78] sm:$0xf]
  %v53 = vld [vmem:[%s1 + $0x7c] sm:$0xf]
  %v54 = vld [vmem:[%s1 + $0x80] sm:$0xf]
  %v55 = vld [vmem:[%s1 + $0x84] sm:$0xf]
  %v56 = vld [vmem:[%s1 + $0x88] sm:$0xf]
  %v57 = vld [vmem:[%s1 + $0x8c] sm:$0xf]
  %v58 = vld [vmem:[%s1 + $0x90] sm:$0xf]
  %v59 = vld [vmem:[%s1 + $0x94] sm:$0xf]
  %v60 = vld [vmem:[%s1 + $0x98] sm:$0xf]
  %v61 = vld [vmem:[%s1 + $0x9c] sm:$0xf]
  %v62 = vld [vmem:[%s1 + $0xa0] sm:$0xf]
  %v63 = vld [vmem:[%s1 + $0xa4] sm:$0xf]
  %v64 = vld [vmem:[%s1 + $0xa8] sm:$0xf]
  %v65 = vld [vmem:[%s1 + $0xac] sm:$0xf]
  %v66 = vld [vmem:[%s1 + $0xb0] sm:$0xf]
  %v67 = vld [vmem:[%s1 + $0xb4] sm:$0xf]
  %v68 = vld [vmem:[%s1 + $0xb8] sm:$0xf]
  %v69 = vld [vmem:[%s1 + $0xbc] sm:$0xf]
  %v70 = vld [vmem:[%s1 + $0xc0] sm:$0xf]
  %v71 = vld [vmem:[%s1 + $0xc4] sm:$0xf]
  %v72 = vld [vmem:[%s1 + $0xc8] sm:$0xf]
  %v73 = vld [vmem:[%s1 + $0xcc] sm:$0xf]
  %v74 = vld [vmem:[%s1 + $0xd0] sm:$0xf]
  %v75 = vld [vmem:[%s1 + $0xd4] sm:$0xf]
  %v76 = vld [vmem:[%s1 + $0xd8] sm:$0xf]
  %v77 = vld [vmem:[%s1 + $0xdc] sm:$0xf]
  %v78 = vld [vmem:[%s1 + $0xe0] sm:$0xf]
  %v79 = vld [vmem:[%s1 + $0xe4] sm:$0xf]
  %v80 = vld [vmem:[%s1 + $0xe8] sm:$0xf]
  %v81 = vld [vmem:[%s1 + $0xec] sm:$0xf]
  %v82 = vld [vmem:[%s1 + $0xf0] sm:$0xf]
  %v83 = vld [vmem:[%s1 + $0xf4] sm:$0xf]
  %v84 = vld [vmem:[%s1 + $0xf8] sm:$0xf]
  %v85 = vld [vmem:[%s1 + $0xfc] sm:$0xf]
  %v86 = vld [vmem:[%s1 + $0x100] sm:$0xf]
  %v87 = vld [vmem:[%s1 + $0x104] sm:$0xf]
  %v88 = vld [vmem:[%s1 + $0x108] sm:$0xf]
  %v89 = vld [vmem:[%s1 + $0x10c] sm:$0xf]
  %v90 = vld [vmem:[%s1 + $0x110] sm:$0xf]
  %v91 = vld [vmem:[%s1 + $0x114] sm:$0xf]
  %v92 = vld [vmem:[%s1 + $0x118] sm:$0xf]
  %v93 = vld [vmem:[%s1 + $0x11c] sm:$0xf]
  %v94 = vld [vmem:[%s1 + $0x120] sm:$0xf]
  %v95 = vld [vmem:[%s1 + $0x124] sm:$0xf]
  %v96 = vld [vmem:[%s1 + $0x128] sm:$0xf]
  %v97 = vld [vmem:[%s1 + $0x12c] sm:$0xf]
  %v98 = vld [vmem:[%s1 + $0x130] sm:$0xf]
  %v99 = vld [vmem:[%s1 + $0x134] sm:$0xf]
  %v100 = vld [vmem:[%s1 + $0x138] sm:$0xf]
  %v101 = vld [vmem:[%s1 + $0x13c] sm:$0xf]
  %v102 = vld [vmem:[%s1 + $0x140] sm:$0xf]
  %v103 = vld [vmem:[%s1 + $0x144] sm:$0xf]
  %v104 = vld [vmem:[%s1 + $0x148] sm:$0xf]
  %v105 = vld [vmem:[%s1 + $0x14c] sm:$0xf]
  %v106 = vld [vmem:[%s1 + $0x150] sm:$0xf]
  %v107 = vld [vmem:[%s1 + $0x154] sm:$0xf]
  %v108 = vld [vmem:[%s1 + $0x158] sm:$0xf]
  %v109 = vld [vmem:[%s1 + $0x15c] sm:$0xf]
  %v110 = vld [vmem:[%s1 + $0x160] sm:$0xf]
  %v111 = vld [vmem:[%s1 + $0x164] sm:$0xf]
  %v112 = vld [vmem:[%s1 + $0x168] sm:$0xf]
  %v113 = vld [vmem:[%s1 + $0x16c] sm:$0xf]
  %v114 = vld [vmem:[%s1 + $0x170] sm:$0xf]
  %v115 = vld [vmem:[%s1 + $0x174] sm:$0xf]
  %v116 = vld [vmem:[%s1 + $0x178] sm:$0xf]
  %v117 = vld [vmem:[%s1 + $0x17c] sm:$0xf]
  %v118 = vld [vmem:[%s1 + $0x180] sm:$0xf]
  %v119 = vld [vmem:[%s1 + $0x184] sm:$0xf]
  %v120 = vld [vmem:[%s1 + $0x188] sm:$0xf]
  %v121 = vld [vmem:[%s1 + $0x18c] sm:$0xf]
  %v122 = vld [vmem:[%s1 + $0x190] sm:$0xf]
  %v123 = vld [vmem:[%s1 + $0x194] sm:$0xf]
  %v124 = vld [vmem:[%s1 + $0x198] sm:$0xf]
  %v125 = vld [vmem:[%s1 + $0x19c] sm:$0xf]
  %v126 = vld [vmem:[%s1 + $0x1a0] sm:$0xf]
  %v127 = vld [vmem:[%s1 + $0x1a4] sm:$0xf]
  %v128 = vld [vmem:[%s1 + $0x1a8] sm:$0xf]
  %v129 = vld [vmem:[%s1 + $0x1ac] sm:$0xf]
  %v130 = vld [vmem:[%s1 + $0x1b0] sm:$0xf]
  %v131 = vld [vmem:[%s1 + $0x1b4] sm:$0xf]
  %v132 = vld [vmem:[%s1 + $0x1b8] sm:$0xf]
  %v133 = vld [vmem:[%s1 + $0x1bc] sm:$0xf]
  %v134 = vld [vmem:[%s1 + $0x1c0] sm:$0xf]
  %v135 = vld [vmem:[%s1 + $0x1c4] sm:$0xf]
  %v136 = vld [vmem:[%s1 + $0x1c8] sm:$0xf]
  %v137 = vld [vmem:[%s1 + $0x1cc] sm:$0xf]
  %v138 = vld [vmem:[%s1 + $0x1d0] sm:$0xf]
  %v139 = vld [vmem:[%s1 + $0x1d4] sm:$0xf]
  %v140 = vld [vmem:[%s1 + $0x1d8] sm:$0xf]
  %v141 = vld [vmem:[%s1 + $0x1dc] sm:$0xf]
  %v142 = vld [vmem:[%s1 + $0x1e0] sm:$0xf]
  %v143 = vld [vmem:[%s1 + $0x1e4] sm:$0xf]
  %v144 = vld [vmem:[%s1 + $0x1e8] sm:$0xf]
  %v145 = vld [vmem:[%s1 + $0x1ec] sm:$0xf]
  %v146 = vld [vmem:[%s1 + $0x1f0] sm:$0xf]
  %v147 = vld [vmem:[%s1 + $0x1f4] sm:$0xf]
  %v148 = vld [vmem:[%s1 + $0x1f8] sm:$0xf]
  %v149 = vld [vmem:[%s1 + $0x1fc] sm:$0xf]
  %v158 = vunpack.c.l.b16 %v14
  %v159 = vunpack.c.h.b16 %v14
  %v160 = vunpack.c.l.b16 %v15
  %v161 = vunpack.c.h.b16 %v15
  %v162 = vunpack.c.l.b16 %v16
  %v163 = vunpack.c.h.b16 %v16
  %v164 = vunpack.c.l.b16 %v17
  %v165 = vunpack.c.h.b16 %v17
  %v166 = vunpack.c.l.b16 %v18
  %v167 = vunpack.c.h.b16 %v18
  %v168 = vunpack.c.l.b16 %v19
  %v169 = vunpack.c.h.b16 %v19
  %v170 = vunpack.c.l.b16 %v20
  %v171 = vunpack.c.h.b16 %v20
  %v172 = vunpack.c.l.b16 %v21
  %v173 = vunpack.c.h.b16 %v21
  %v174 = vpack.c.b16 %v166, %v158
  %v175 = vpack.c.b16 %v167, %v159
  %v176 = vpack.c.b16 %v168, %v160
  %v177 = vpack.c.b16 %v169, %v161
  %v178 = vpack.c.b16 %v170, %v162
  %v179 = vpack.c.b16 %v171, %v163
  %v180 = vpack.c.b16 %v172, %v164
  %v181 = vpack.c.b16 %v173, %v165
  %v318 = vunpack.c.l.b16 %v22
  %v319 = vunpack.c.l.b16 %v23
  %v320 = vunpack.c.l.b16 %v24
  %v321 = vunpack.c.l.b16 %v25
  %v322 = vunpack.c.l.b16 %v26
  %v323 = vunpack.c.l.b16 %v27
  %v324 = vunpack.c.l.b16 %v28
  %v325 = vunpack.c.l.b16 %v29
  %v326 = vunpack.c.l.b16 %v30
  %v327 = vunpack.c.l.b16 %v31
  %v328 = vunpack.c.l.b16 %v32
  %v329 = vunpack.c.l.b16 %v33
  %v330 = vunpack.c.l.b16 %v34
  %v331 = vunpack.c.l.b16 %v35
  %v332 = vunpack.c.l.b16 %v36
  %v333 = vunpack.c.l.b16 %v37
  %v334 = vunpack.c.l.b16 %v38
  %v335 = vunpack.c.l.b16 %v39
  %v336 = vunpack.c.l.b16 %v40
  %v337 = vunpack.c.l.b16 %v41
  %v338 = vunpack.c.l.b16 %v42
  %v339 = vunpack.c.l.b16 %v43
  %v340 = vunpack.c.l.b16 %v44
  %v341 = vunpack.c.l.b16 %v45
  %v342 = vunpack.c.l.b16 %v46
  %v343 = vunpack.c.l.b16 %v47
  %v344 = vunpack.c.l.b16 %v48
  %v345 = vunpack.c.l.b16 %v49
  %v346 = vunpack.c.l.b16 %v50
  %v347 = vunpack.c.l.b16 %v51
  %v348 = vunpack.c.l.b16 %v52
  %v349 = vunpack.c.l.b16 %v53
  %v350 = vunpack.c.l.b16 %v54
  %v351 = vunpack.c.l.b16 %v55
  %v352 = vunpack.c.l.b16 %v56
  %v353 = vunpack.c.l.b16 %v57
  %v354 = vunpack.c.l.b16 %v58
  %v355 = vunpack.c.l.b16 %v59
  %v356 = vunpack.c.l.b16 %v60
  %v357 = vunpack.c.l.b16 %v61
  %v358 = vunpack.c.l.b16 %v62
  %v359 = vunpack.c.l.b16 %v63
  %v360 = vunpack.c.l.b16 %v64
  %v361 = vunpack.c.l.b16 %v65
  %v362 = vunpack.c.l.b16 %v66
  %v363 = vunpack.c.l.b16 %v67
  %v364 = vunpack.c.l.b16 %v68
  %v365 = vunpack.c.l.b16 %v69
  %v366 = vunpack.c.l.b16 %v70
  %v367 = vunpack.c.l.b16 %v71
  %v368 = vunpack.c.l.b16 %v72
  %v369 = vunpack.c.l.b16 %v73
  %v370 = vunpack.c.l.b16 %v74
  %v371 = vunpack.c.l.b16 %v75
  %v372 = vunpack.c.l.b16 %v76
  %v373 = vunpack.c.l.b16 %v77
  %v374 = vunpack.c.l.b16 %v78
  %v375 = vunpack.c.l.b16 %v79
  %v376 = vunpack.c.l.b16 %v80
  %v377 = vunpack.c.l.b16 %v81
  %v378 = vunpack.c.l.b16 %v82
  %v379 = vunpack.c.l.b16 %v83
  %v380 = vunpack.c.l.b16 %v84
  %v381 = vunpack.c.l.b16 %v85
  %v382 = vunpack.c.l.b16 %v86
  %v383 = vunpack.c.l.b16 %v87
  %v384 = vunpack.c.l.b16 %v88
  %v385 = vunpack.c.l.b16 %v89
  %v386 = vunpack.c.l.b16 %v90
  %v387 = vunpack.c.l.b16 %v91
  %v388 = vunpack.c.l.b16 %v92
  %v389 = vunpack.c.l.b16 %v93
  %v390 = vunpack.c.l.b16 %v94
  %v391 = vunpack.c.l.b16 %v95
  %v392 = vunpack.c.l.b16 %v96
  %v393 = vunpack.c.l.b16 %v97
  %v394 = vunpack.c.l.b16 %v98
  %v395 = vunpack.c.l.b16 %v99
  %v396 = vunpack.c.l.b16 %v100
  %v397 = vunpack.c.l.b16 %v101
  %v398 = vunpack.c.l.b16 %v102
  %v399 = vunpack.c.l.b16 %v103
  %v400 = vunpack.c.l.b16 %v104
  %v401 = vunpack.c.l.b16 %v105
  %v402 = vunpack.c.l.b16 %v106
  %v403 = vunpack.c.l.b16 %v107
  %v404 = vunpack.c.l.b16 %v108
  %v405 = vunpack.c.l.b16 %v109
  %v406 = vunpack.c.l.b16 %v110
  %v407 = vunpack.c.l.b16 %v111
  %v408 = vunpack.c.l.b16 %v112
  %v409 = vunpack.c.l.b16 %v113
  %v410 = vunpack.c.l.b16 %v114
  %v411 = vunpack.c.l.b16 %v115
  %v412 = vunpack.c.l.b16 %v116
  %v413 = vunpack.c.l.b16 %v117
  %v414 = vunpack.c.l.b16 %v118
  %v415 = vunpack.c.l.b16 %v119
  %v416 = vunpack.c.l.b16 %v120
  %v417 = vunpack.c.l.b16 %v121
  %v418 = vunpack.c.l.b16 %v122
  %v419 = vunpack.c.l.b16 %v123
  %v420 = vunpack.c.l.b16 %v124
  %v421 = vunpack.c.l.b16 %v125
  %v422 = vunpack.c.l.b16 %v126
  %v423 = vunpack.c.l.b16 %v127
  %v424 = vunpack.c.l.b16 %v128
  %v425 = vunpack.c.l.b16 %v129
  %v426 = vunpack.c.l.b16 %v130
  %v427 = vunpack.c.l.b16 %v131
  %v428 = vunpack.c.l.b16 %v132
  %v429 = vunpack.c.l.b16 %v133
  %v430 = vunpack.c.l.b16 %v134
  %v431 = vunpack.c.l.b16 %v135
  %v432 = vunpack.c.l.b16 %v136
  %v433 = vunpack.c.l.b16 %v137
  %v434 = vunpack.c.l.b16 %v138
  %v435 = vunpack.c.l.b16 %v139
  %v436 = vunpack.c.l.b16 %v140
  %v437 = vunpack.c.l.b16 %v141
  %v438 = vunpack.c.l.b16 %v142
  %v439 = vunpack.c.l.b16 %v143
  %v440 = vunpack.c.l.b16 %v144
  %v441 = vunpack.c.l.b16 %v145
  %v442 = vunpack.c.l.b16 %v146
  %v443 = vunpack.c.l.b16 %v147
  %v444 = vunpack.c.l.b16 %v148
  %v445 = vunpack.c.l.b16 %v149
  %v446 = vpack.c.b16 %v319, %v318
  %v447 = vpack.c.b16 %v321, %v320
  %v448 = vpack.c.b16 %v323, %v322
  %v449 = vpack.c.b16 %v325, %v324
  %v450 = vpack.c.b16 %v327, %v326
  %v451 = vpack.c.b16 %v329, %v328
  %v452 = vpack.c.b16 %v331, %v330
  %v453 = vpack.c.b16 %v333, %v332
  %v454 = vpack.c.b16 %v335, %v334
  %v455 = vpack.c.b16 %v337, %v336
  %v456 = vpack.c.b16 %v339, %v338
  %v457 = vpack.c.b16 %v341, %v340
  %v458 = vpack.c.b16 %v343, %v342
  %v459 = vpack.c.b16 %v345, %v344
  %v460 = vpack.c.b16 %v347, %v346
  %v461 = vpack.c.b16 %v349, %v348
  %v462 = vpack.c.b16 %v351, %v350
  %v463 = vpack.c.b16 %v353, %v352
  %v464 = vpack.c.b16 %v355, %v354
  %v465 = vpack.c.b16 %v357, %v356
  %v466 = vpack.c.b16 %v359, %v358
  %v467 = vpack.c.b16 %v361, %v360
  %v468 = vpack.c.b16 %v363, %v362
  %v469 = vpack.c.b16 %v365, %v364
  %v470 = vpack.c.b16 %v367, %v366
  %v471 = vpack.c.b16 %v369, %v368
  %v472 = vpack.c.b16 %v371, %v370
  %v473 = vpack.c.b16 %v373, %v372
  %v474 = vpack.c.b16 %v375, %v374
  %v475 = vpack.c.b16 %v377, %v376
  %v476 = vpack.c.b16 %v379, %v378
  %v477 = vpack.c.b16 %v381, %v380
  %v478 = vpack.c.b16 %v383, %v382
  %v479 = vpack.c.b16 %v385, %v384
  %v480 = vpack.c.b16 %v387, %v386
  %v481 = vpack.c.b16 %v389, %v388
  %v482 = vpack.c.b16 %v391, %v390
  %v483 = vpack.c.b16 %v393, %v392
  %v484 = vpack.c.b16 %v395, %v394
  %v485 = vpack.c.b16 %v397, %v396
  %v486 = vpack.c.b16 %v399, %v398
  %v487 = vpack.c.b16 %v401, %v400
  %v488 = vpack.c.b16 %v403, %v402
  %v489 = vpack.c.b16 %v405, %v404
  %v490 = vpack.c.b16 %v407, %v406
  %v491 = vpack.c.b16 %v409, %v408
  %v492 = vpack.c.b16 %v411, %v410
  %v493 = vpack.c.b16 %v413, %v412
  %v494 = vpack.c.b16 %v415, %v414
  %v495 = vpack.c.b16 %v417, %v416
  %v496 = vpack.c.b16 %v419, %v418
  %v497 = vpack.c.b16 %v421, %v420
  %v498 = vpack.c.b16 %v423, %v422
  %v499 = vpack.c.b16 %v425, %v424
  %v500 = vpack.c.b16 %v427, %v426
  %v501 = vpack.c.b16 %v429, %v428
  %v502 = vpack.c.b16 %v431, %v430
  %v503 = vpack.c.b16 %v433, %v432
  %v504 = vpack.c.b16 %v435, %v434
  %v505 = vpack.c.b16 %v437, %v436
  %v506 = vpack.c.b16 %v439, %v438
  %v507 = vpack.c.b16 %v441, %v440
  %v508 = vpack.c.b16 %v443, %v442
  %v509 = vpack.c.b16 %v445, %v444
  %574 = vmatprep.subr.bf16.mxu0 0
  %575 = vmatpush1.bf16.msra.mxu0 %v446
  %576 = vmatprep.subr.bf16.mxu0 0
  %577 = vmatpush1.bf16.msra.mxu0 %v447
  %578 = vmatprep.subr.bf16.mxu0 0
  %579 = vmatpush1.bf16.msra.mxu0 %v448
  %580 = vmatprep.subr.bf16.mxu0 0
  %581 = vmatpush1.bf16.msra.mxu0 %v449
  %582 = vmatprep.subr.bf16.mxu0 0
  %583 = vmatpush1.bf16.msra.mxu0 %v450
  %584 = vmatprep.subr.bf16.mxu0 0
  %585 = vmatpush1.bf16.msra.mxu0 %v451
  %586 = vmatprep.subr.bf16.mxu0 0
  %587 = vmatpush1.bf16.msra.mxu0 %v452
  %588 = vmatprep.subr.bf16.mxu0 0
  %589 = vmatpush1.bf16.msra.mxu0 %v453
  %590 = vmatprep.subr.bf16.mxu0 0
  %591 = vmatpush1.bf16.msra.mxu0 %v454
  %592 = vmatprep.subr.bf16.mxu0 0
  %593 = vmatpush1.bf16.msra.mxu0 %v455
  %594 = vmatprep.subr.bf16.mxu0 0
  %595 = vmatpush1.bf16.msra.mxu0 %v456
  %596 = vmatprep.subr.bf16.mxu0 0
  %597 = vmatpush1.bf16.msra.mxu0 %v457
  %598 = vmatprep.subr.bf16.mxu0 0
  %599 = vmatpush1.bf16.msra.mxu0 %v458
  %600 = vmatprep.subr.bf16.mxu0 0
  %601 = vmatpush1.bf16.msra.mxu0 %v459
  %602 = vmatprep.subr.bf16.mxu0 0
  %603 = vmatpush1.bf16.msra.mxu0 %v460
  %604 = vmatprep.subr.bf16.mxu0 0
  %605 = vmatpush1.bf16.msra.mxu0 %v461
  %606 = vmatprep.mubr.bf16.mxu0 %v175
  %607 = vmatmul.mubr.bf16.gmra.mrb[0].mxu0 %v174
  %v608 = vpop.f32.mrb[0].mxu0
  %v609 = vadd.f32 0.0, %v608
  %v610 = vpop.f32.mrb[0].mxu0
  %v611 = vpop.f32.mrb[0].mxu0
  %v612 = vadd.f32 0.0, %v611
  %v613 = vpop.f32.mrb[0].mxu0
  %614 = vdwg.mxu0
  %615 = vmatprep.subr.bf16.mxu0 0
  %616 = vmatpush1.bf16.msra.mxu0 %v462
  %617 = vmatprep.subr.bf16.mxu0 0
  %618 = vmatpush1.bf16.msra.mxu0 %v463
  %619 = vmatprep.subr.bf16.mxu0 0
  %620 = vmatpush1.bf16.msra.mxu0 %v464
  %621 = vmatprep.subr.bf16.mxu0 0
  %622 = vmatpush1.bf16.msra.mxu0 %v465
  %623 = vmatprep.subr.bf16.mxu0 0
  %624 = vmatpush1.bf16.msra.mxu0 %v466
  %625 = vmatprep.subr.bf16.mxu0 0
  %626 = vmatpush1.bf16.msra.mxu0 %v467
  %627 = vmatprep.subr.bf16.mxu0 0
  %628 = vmatpush1.bf16.msra.mxu0 %v468
  %629 = vmatprep.subr.bf16.mxu0 0
  %630 = vmatpush1.bf16.msra.mxu0 %v469
  %631 = vmatprep.subr.bf16.mxu0 0
  %632 = vmatpush1.bf16.msra.mxu0 %v470
  %633 = vmatprep.subr.bf16.mxu0 0
  %634 = vmatpush1.bf16.msra.mxu0 %v471
  %635 = vmatprep.subr.bf16.mxu0 0
  %636 = vmatpush1.bf16.msra.mxu0 %v472
  %637 = vmatprep.subr.bf16.mxu0 0
  %638 = vmatpush1.bf16.msra.mxu0 %v473
  %639 = vmatprep.subr.bf16.mxu0 0
  %640 = vmatpush1.bf16.msra.mxu0 %v474
  %641 = vmatprep.subr.bf16.mxu0 0
  %642 = vmatpush1.bf16.msra.mxu0 %v475
  %643 = vmatprep.subr.bf16.mxu0 0
  %644 = vmatpush1.bf16.msra.mxu0 %v476
  %645 = vmatprep.subr.bf16.mxu0 0
  %646 = vmatpush1.bf16.msra.mxu0 %v477
  %647 = vmatprep.mubr.bf16.mxu0 %v177
  %648 = vmatmul.mubr.bf16.gmra.mrb[0].mxu0 %v176
  %v649 = vpop.f32.mrb[0].mxu0
  %v650 = vadd.f32 %v609, %v649
  %v651 = vpop.f32.mrb[0].mxu0
  %v652 = vpop.f32.mrb[0].mxu0
  %v653 = vadd.f32 %v612, %v652
  %v654 = vpop.f32.mrb[0].mxu0
  %655 = vdwg.mxu0
  %656 = vmatprep.subr.bf16.mxu0 0
  %657 = vmatpush1.bf16.msra.mxu0 %v478
  %658 = vmatprep.subr.bf16.mxu0 0
  %659 = vmatpush1.bf16.msra.mxu0 %v479
  %660 = vmatprep.subr.bf16.mxu0 0
  %661 = vmatpush1.bf16.msra.mxu0 %v480
  %662 = vmatprep.subr.bf16.mxu0 0
  %663 = vmatpush1.bf16.msra.mxu0 %v481
  %664 = vmatprep.subr.bf16.mxu0 0
  %665 = vmatpush1.bf16.msra.mxu0 %v482
  %666 = vmatprep.subr.bf16.mxu0 0
  %667 = vmatpush1.bf16.msra.mxu0 %v483
  %668 = vmatprep.subr.bf16.mxu0 0
  %669 = vmatpush1.bf16.msra.mxu0 %v484
  %670 = vmatprep.subr.bf16.mxu0 0
  %671 = vmatpush1.bf16.msra.mxu0 %v485
  %672 = vmatprep.subr.bf16.mxu0 0
  %673 = vmatpush1.bf16.msra.mxu0 %v486
  %674 = vmatprep.subr.bf16.mxu0 0
  %675 = vmatpush1.bf16.msra.mxu0 %v487
  %676 = vmatprep.subr.bf16.mxu0 0
  %677 = vmatpush1.bf16.msra.mxu0 %v488
  %678 = vmatprep.subr.bf16.mxu0 0
  %679 = vmatpush1.bf16.msra.mxu0 %v489
  %680 = vmatprep.subr.bf16.mxu0 0
  %681 = vmatpush1.bf16.msra.mxu0 %v490
  %682 = vmatprep.subr.bf16.mxu0 0
  %683 = vmatpush1.bf16.msra.mxu0 %v491
  %684 = vmatprep.subr.bf16.mxu0 0
  %685 = vmatpush1.bf16.msra.mxu0 %v492
  %686 = vmatprep.subr.bf16.mxu0 0
  %687 = vmatpush1.bf16.msra.mxu0 %v493
  %688 = vmatprep.mubr.bf16.mxu0 %v179
  %689 = vmatmul.mubr.bf16.gmra.mrb[0].mxu0 %v178
  %v690 = vpop.f32.mrb[0].mxu0
  %v691 = vadd.f32 %v650, %v690
  %v692 = vpop.f32.mrb[0].mxu0
  %v693 = vpop.f32.mrb[0].mxu0
  %v694 = vadd.f32 %v653, %v693
  %v695 = vpop.f32.mrb[0].mxu0
  %696 = vdwg.mxu0
  %697 = vmatprep.subr.bf16.mxu0 0
  %698 = vmatpush1.bf16.msra.mxu0 %v494
  %699 = vmatprep.subr.bf16.mxu0 0
  %700 = vmatpush1.bf16.msra.mxu0 %v495
  %701 = vmatprep.subr.bf16.mxu0 0
  %702 = vmatpush1.bf16.msra.mxu0 %v496
  %703 = vmatprep.subr.bf16.mxu0 0
  %704 = vmatpush1.bf16.msra.mxu0 %v497
  %705 = vmatprep.subr.bf16.mxu0 0
  %706 = vmatpush1.bf16.msra.mxu0 %v498
  %707 = vmatprep.subr.bf16.mxu0 0
  %708 = vmatpush1.bf16.msra.mxu0 %v499
  %709 = vmatprep.subr.bf16.mxu0 0
  %710 = vmatpush1.bf16.msra.mxu0 %v500
  %711 = vmatprep.subr.bf16.mxu0 0
  %712 = vmatpush1.bf16.msra.mxu0 %v501
  %713 = vmatprep.subr.bf16.mxu0 0
  %714 = vmatpush1.bf16.msra.mxu0 %v502
  %715 = vmatprep.subr.bf16.mxu0 0
  %716 = vmatpush1.bf16.msra.mxu0 %v503
  %717 = vmatprep.subr.bf16.mxu0 0
  %718 = vmatpush1.bf16.msra.mxu0 %v504
  %719 = vmatprep.subr.bf16.mxu0 0
  %720 = vmatpush1.bf16.msra.mxu0 %v505
  %721 = vmatprep.subr.bf16.mxu0 0
  %722 = vmatpush1.bf16.msra.mxu0 %v506
  %723 = vmatprep.subr.bf16.mxu0 0
  %724 = vmatpush1.bf16.msra.mxu0 %v507
  %725 = vmatprep.subr.bf16.mxu0 0
  %726 = vmatpush1.bf16.msra.mxu0 %v508
  %727 = vmatprep.subr.bf16.mxu0 0
  %728 = vmatpush1.bf16.msra.mxu0 %v509
  %729 = vmatprep.mubr.bf16.mxu0 %v181
  %730 = vmatmul.mubr.bf16.gmra.mrb[0].mxu0 %v180
  %v731 = vpop.f32.mrb[0].mxu0
  %v732 = vadd.f32 %v691, %v731
  %v733 = vpop.f32.mrb[0].mxu0
  %v734 = vpop.f32.mrb[0].mxu0
  %v735 = vadd.f32 %v694, %v734
  %v736 = vpop.f32.mrb[0].mxu0
  %737 = vdwg.mxu0
  %v738 = vpack.c.bf16 %v735, %v732
  %v740 = vunpack.c.l.b16 %v738
  %v741 = vunpack.c.h.b16 %v738
  %v742 = vpack.c.b16 %v740, %v740
  %v743 = vpack.c.b16 %v741, %v741
  %746 = vst [vmem:[%s2] sm:$0xf] %v742
  %747 = vst [vmem:[%s2 + $0x4] sm:$0xf] %v743
  %v748 = vadd.f32 %v732, %v735
  %v749 = vrot.slane %v748, 4
  %v750 = vadd.f32 %v748, %v749
  %v751 = vrot.slane %v750, 2
  %v752 = vadd.f32 %v750, %v751
  %v753 = vrot.slane %v752, 1
  %v754 = vadd.f32 %v752, %v753
  %755 = vst [vmem:[%s3] sm:$0x1] %v754
  %v756 = vmul.f32 %v732, %v732
  %v757 = vmul.f32 %v735, %v735
  %v758 = vadd.f32 %v756, %v757
  %v759 = vrot.slane %v758, 4
  %v760 = vadd.f32 %v758, %v759
  %v761 = vrot.slane %v760, 2
  %v762 = vadd.f32 %v760, %v761
  %v763 = vrot.slane %v762, 1
  %v764 = vadd.f32 %v762, %v763
  %765 = vst [vmem:[%s3 + $0x1] sm:$0x1] %v764
  // Predicated region
  $region10: #{_lambda_.13} parent=0 // pred_check
    _
  $region11: #{_lambda_.13} parent=0 // pred_check_branch
    %767 = sbr.rel (0) target = $region13
  $region12: #{_lambda_.13} parent=0 // pred_region
    _
  $region13: #{_lambda_.13} parent=0 // pred_fallthru
    _
  // Predicated region
  $region14: #{_lambda_.13} parent=0 // pred_check
    _
  $region15: #{_lambda_.13} parent=0 // pred_check_branch
    %769 = sbr.rel (0) target = $region17
  $region16: #{_lambda_.13} parent=0 // pred_region
    _
  $region17: #{_lambda_.13} parent=0 // pred_fallthru
    _
  // Predicated region
  $region18: #{_lambda_.13} parent=0 // pred_check
    _
  $region19: #{_lambda_.13} parent=0 // pred_check_branch
    %771 = sbr.rel (0) target = $region21
  $region20: #{_lambda_.13} parent=0 // pred_region
    _
  $region21: #{_lambda_.13} parent=0 // pred_fallthru
    _
  // Predicated region
  $region22: #{_lambda_.13} parent=0 // pred_check
    _
  $region23: #{_lambda_.13} parent=0 // pred_check_branch
    %773 = sbr.rel (0) target = $region25
  $region24: #{_lambda_.13} parent=0 // pred_region
    _
  $region25: #{_lambda_.13} parent=0 // pred_fallthru
    _

// kernel: _lambda_.15
$region0: #{_lambda_.15}
  #allocation0 [shape = 'u32[]', space=smem, size = 0x4, offset = 0x4, fixed_abs, tag = 'smem constant byte address 0x4 - core index']
  #allocation1 [shape = 'u32[144,128]{1,0:T(1,128)}', space=vmem, size = 0x12000, scoped, tag = 'internal scratch']
  %s0 = inlined_call_operand.vmem [shape: bf16[16,2048], index: 0, kind: input, shape index: {}]
  %s1 = inlined_call_operand.vmem [shape: bf16[2048,128], index: 1, kind: input, shape index: {}]
  %s2 = inlined_call_operand.vmem [shape: f32[1,128], index: 2, kind: input, shape index: {}]
  %s3 = inlined_call_operand.vmem [shape: f32[16,128], index: 3, kind: output, shape index: {}]
  %s4 = sld [smem:[#allocation0]]
  $region22: #{_lambda_.15} parent=0
    _
  %s6 = ssub.s32 1, %s4
  %s7 = scalar_select 0, %s6, %s4
  // Predicated region
  $region2: #{_lambda_.15} parent=0 // pred_check
    _
  $region3: #{_lambda_.15} parent=0 // pred_check_branch
    %9 = sbr.rel (0) target = $region5
  $region4: #{_lambda_.15} parent=0 // pred_region
    _
  $region5: #{_lambda_.15} parent=0 // pred_fallthru
    _
  // Predicated region
  $region6: #{_lambda_.15} parent=0 // pred_check
    _
  $region7: #{_lambda_.15} parent=0 // pred_check_branch
    %11 = sbr.rel (0) target = $region9
  $region8: #{_lambda_.15} parent=0 // pred_region
    _
  $region9: #{_lambda_.15} parent=0 // pred_fallthru
    _
  // Predicated region
  $region10: #{_lambda_.15} parent=0 // pred_check
    _
  $region11: #{_lambda_.15} parent=0 // pred_check_branch
    %13 = sbr.rel (0) target = $region13
  $region12: #{_lambda_.15} parent=0 // pred_region
    _
  $region13: #{_lambda_.15} parent=0 // pred_fallthru
    _
  %v15 = vld [vmem:[%s0] sm:$0xff]
  %v16 = vld [vmem:[%s0 + $0x8] sm:$0xff]
  %v17 = vld [vmem:[%s0 + $0x10] sm:$0xff]
  %v18 = vld [vmem:[%s0 + $0x18] sm:$0xff]
  %v19 = vld [vmem:[%s0 + $0x20] sm:$0xff]
  %v20 = vld [vmem:[%s0 + $0x28] sm:$0xff]
  %v21 = vld [vmem:[%s0 + $0x30] sm:$0xff]
  %v22 = vld [vmem:[%s0 + $0x38] sm:$0xff]
  %v23 = vld [vmem:[%s0 + $0x40] sm:$0xff]
  %v24 = vld [vmem:[%s0 + $0x48] sm:$0xff]
  %v25 = vld [vmem:[%s0 + $0x50] sm:$0xff]
  %v26 = vld [vmem:[%s0 + $0x58] sm:$0xff]
  %v27 = vld [vmem:[%s0 + $0x60] sm:$0xff]
  %v28 = vld [vmem:[%s0 + $0x68] sm:$0xff]
  %v29 = vld [vmem:[%s0 + $0x70] sm:$0xff]
  %v30 = vld [vmem:[%s0 + $0x78] sm:$0xff]
  %v31 = vld [vmem:[%s1] sm:$0xf]
  %v32 = vld [vmem:[%s1 + $0x4] sm:$0xf]
  %v33 = vld [vmem:[%s1 + $0x8] sm:$0xf]
  %v34 = vld [vmem:[%s1 + $0xc] sm:$0xf]
  %v35 = vld [vmem:[%s1 + $0x10] sm:$0xf]
  %v36 = vld [vmem:[%s1 + $0x14] sm:$0xf]
  %v37 = vld [vmem:[%s1 + $0x18] sm:$0xf]
  %v38 = vld [vmem:[%s1 + $0x1c] sm:$0xf]
  %v39 = vld [vmem:[%s1 + $0x20] sm:$0xf]
  %v40 = vld [vmem:[%s1 + $0x24] sm:$0xf]
  %v41 = vld [vmem:[%s1 + $0x28] sm:$0xf]
  %v42 = vld [vmem:[%s1 + $0x2c] sm:$0xf]
  %v43 = vld [vmem:[%s1 + $0x30] sm:$0xf]
  %v44 = vld [vmem:[%s1 + $0x34] sm:$0xf]
  %v45 = vld [vmem:[%s1 + $0x38] sm:$0xf]
  %v46 = vld [vmem:[%s1 + $0x3c] sm:$0xf]
  %v47 = vld [vmem:[%s1 + $0x40] sm:$0xf]
  %v48 = vld [vmem:[%s1 + $0x44] sm:$0xf]
  %v49 = vld [vmem:[%s1 + $0x48] sm:$0xf]
  %v50 = vld [vmem:[%s1 + $0x4c] sm:$0xf]
  %v51 = vld [vmem:[%s1 + $0x50] sm:$0xf]
  %v52 = vld [vmem:[%s1 + $0x54] sm:$0xf]
  %v53 = vld [vmem:[%s1 + $0x58] sm:$0xf]
  %v54 = vld [vmem:[%s1 + $0x5c] sm:$0xf]
  %v55 = vld [vmem:[%s1 + $0x60] sm:$0xf]
  %v56 = vld [vmem:[%s1 + $0x64] sm:$0xf]
  %v57 = vld [vmem:[%s1 + $0x68] sm:$0xf]
  %v58 = vld [vmem:[%s1 + $0x6c] sm:$0xf]
  %v59 = vld [vmem:[%s1 + $0x70] sm:$0xf]
  %v60 = vld [vmem:[%s1 + $0x74] sm:$0xf]
  %v61 = vld [vmem:[%s1 + $0x78] sm:$0xf]
  %v62 = vld [vmem:[%s1 + $0x7c] sm:$0xf]
  %v63 = vld [vmem:[%s1 + $0x80] sm:$0xf]
  %v64 = vld [vmem:[%s1 + $0x84] sm:$0xf]
  %v65 = vld [vmem:[%s1 + $0x88] sm:$0xf]
  %v66 = vld [vmem:[%s1 + $0x8c] sm:$0xf]
  %v67 = vld [vmem:[%s1 + $0x90] sm:$0xf]
  %v68 = vld [vmem:[%s1 + $0x94] sm:$0xf]
  %v69 = vld [vmem:[%s1 + $0x98] sm:$0xf]
  %v70 = vld [vmem:[%s1 + $0x9c] sm:$0xf]
  %v71 = vld [vmem:[%s1 + $0xa0] sm:$0xf]
  %v72 = vld [vmem:[%s1 + $0xa4] sm:$0xf]
  %v73 = vld [vmem:[%s1 + $0xa8] sm:$0xf]
  %v74 = vld [vmem:[%s1 + $0xac] sm:$0xf]
  %v75 = vld [vmem:[%s1 + $0xb0] sm:$0xf]
  %v76 = vld [vmem:[%s1 + $0xb4] sm:$0xf]
  %v77 = vld [vmem:[%s1 + $0xb8] sm:$0xf]
  %v78 = vld [vmem:[%s1 + $0xbc] sm:$0xf]
  %v79 = vld [vmem:[%s1 + $0xc0] sm:$0xf]
  %v80 = vld [vmem:[%s1 + $0xc4] sm:$0xf]
  %v81 = vld [vmem:[%s1 + $0xc8] sm:$0xf]
  %v82 = vld [vmem:[%s1 + $0xcc] sm:$0xf]
  %v83 = vld [vmem:[%s1 + $0xd0] sm:$0xf]
  %v84 = vld [vmem:[%s1 + $0xd4] sm:$0xf]
  %v85 = vld [vmem:[%s1 + $0xd8] sm:$0xf]
  %v86 = vld [vmem:[%s1 + $0xdc] sm:$0xf]
  %v87 = vld [vmem:[%s1 + $0xe0] sm:$0xf]
  %v88 = vld [vmem:[%s1 + $0xe4] sm:$0xf]
  %v89 = vld [vmem:[%s1 + $0xe8] sm:$0xf]
  %v90 = vld [vmem:[%s1 + $0xec] sm:$0xf]
  %v91 = vld [vmem:[%s1 + $0xf0] sm:$0xf]
  %v92 = vld [vmem:[%s1 + $0xf4] sm:$0xf]
  %v93 = vld [vmem:[%s1 + $0xf8] sm:$0xf]
  %v94 = vld [vmem:[%s1 + $0xfc] sm:$0xf]
  %v95 = vld [vmem:[%s1 + $0x100] sm:$0xf]
  %v96 = vld [vmem:[%s1 + $0x104] sm:$0xf]
  %v97 = vld [vmem:[%s1 + $0x108] sm:$0xf]
  %v98 = vld [vmem:[%s1 + $0x10c] sm:$0xf]
  %v99 = vld [vmem:[%s1 + $0x110] sm:$0xf]
  %v100 = vld [vmem:[%s1 + $0x114] sm:$0xf]
  %v101 = vld [vmem:[%s1 + $0x118] sm:$0xf]
  %v102 = vld [vmem:[%s1 + $0x11c] sm:$0xf]
  %v103 = vld [vmem:[%s1 + $0x120] sm:$0xf]
  %v104 = vld [vmem:[%s1 + $0x124] sm:$0xf]
  %v105 = vld [vmem:[%s1 + $0x128] sm:$0xf]
  %v106 = vld [vmem:[%s1 + $0x12c] sm:$0xf]
  %v107 = vld [vmem:[%s1 + $0x130] sm:$0xf]
  %v108 = vld [vmem:[%s1 + $0x134] sm:$0xf]
  %v109 = vld [vmem:[%s1 + $0x138] sm:$0xf]
  %v110 = vld [vmem:[%s1 + $0x13c] sm:$0xf]
  %v111 = vld [vmem:[%s1 + $0x140] sm:$0xf]
  %v112 = vld [vmem:[%s1 + $0x144] sm:$0xf]
  %v113 = vld [vmem:[%s1 + $0x148] sm:$0xf]
  %v114 = vld [vmem:[%s1 + $0x14c] sm:$0xf]
  %v115 = vld [vmem:[%s1 + $0x150] sm:$0xf]
  %v116 = vld [vmem:[%s1 + $0x154] sm:$0xf]
  %v117 = vld [vmem:[%s1 + $0x158] sm:$0xf]
  %v118 = vld [vmem:[%s1 + $0x15c] sm:$0xf]
  %v119 = vld [vmem:[%s1 + $0x160] sm:$0xf]
  %v120 = vld [vmem:[%s1 + $0x164] sm:$0xf]
  %v121 = vld [vmem:[%s1 + $0x168] sm:$0xf]
  %v122 = vld [vmem:[%s1 + $0x16c] sm:$0xf]
  %v123 = vld [vmem:[%s1 + $0x170] sm:$0xf]
  %v124 = vld [vmem:[%s1 + $0x174] sm:$0xf]
  %v125 = vld [vmem:[%s1 + $0x178] sm:$0xf]
  %v126 = vld [vmem:[%s1 + $0x17c] sm:$0xf]
  %v127 = vld [vmem:[%s1 + $0x180] sm:$0xf]
  %v128 = vld [vmem:[%s1 + $0x184] sm:$0xf]
  %v129 = vld [vmem:[%s1 + $0x188] sm:$0xf]
  %v130 = vld [vmem:[%s1 + $0x18c] sm:$0xf]
  %v131 = vld [vmem:[%s1 + $0x190] sm:$0xf]
  %v132 = vld [vmem:[%s1 + $0x194] sm:$0xf]
  %v133 = vld [vmem:[%s1 + $0x198] sm:$0xf]
  %v134 = vld [vmem:[%s1 + $0x19c] sm:$0xf]
  %v135 = vld [vmem:[%s1 + $0x1a0] sm:$0xf]
  %v136 = vld [vmem:[%s1 + $0x1a4] sm:$0xf]
  %v137 = vld [vmem:[%s1 + $0x1a8] sm:$0xf]
  %v138 = vld [vmem:[%s1 + $0x1ac] sm:$0xf]
  %v139 = vld [vmem:[%s1 + $0x1b0] sm:$0xf]
  %v140 = vld [vmem:[%s1 + $0x1b4] sm:$0xf]
  %v141 = vld [vmem:[%s1 + $0x1b8] sm:$0xf]
  %v142 = vld [vmem:[%s1 + $0x1bc] sm:$0xf]
  %v143 = vld [vmem:[%s1 + $0x1c0] sm:$0xf]
  %v144 = vld [vmem:[%s1 + $0x1c4] sm:$0xf]
  %v145 = vld [vmem:[%s1 + $0x1c8] sm:$0xf]
  %v146 = vld [vmem:[%s1 + $0x1cc] sm:$0xf]
  %v147 = vld [vmem:[%s1 + $0x1d0] sm:$0xf]
  %v148 = vld [vmem:[%s1 + $0x1d4] sm:$0xf]
  %v149 = vld [vmem:[%s1 + $0x1d8] sm:$0xf]
  %v150 = vld [vmem:[%s1 + $0x1dc] sm:$0xf]
  %v151 = vld [vmem:[%s1 + $0x1e0] sm:$0xf]
  %v152 = vld [vmem:[%s1 + $0x1e4] sm:$0xf]
  %v153 = vld [vmem:[%s1 + $0x1e8] sm:$0xf]
  %v154 = vld [vmem:[%s1 + $0x1ec] sm:$0xf]
  %v155 = vld [vmem:[%s1 + $0x1f0] sm:$0xf]
  %v156 = vld [vmem:[%s1 + $0x1f4] sm:$0xf]
  %v157 = vld [vmem:[%s1 + $0x1f8] sm:$0xf]
  %v158 = vld [vmem:[%s1 + $0x1fc] sm:$0xf]
  %v159 = vld [vmem:[%s1 + $0x200] sm:$0xf]
  %v160 = vld [vmem:[%s1 + $0x204] sm:$0xf]
  %v161 = vld [vmem:[%s1 + $0x208] sm:$0xf]
  %v162 = vld [vmem:[%s1 + $0x20c] sm:$0xf]
  %v163 = vld [vmem:[%s1 + $0x210] sm:$0xf]
  %v164 = vld [vmem:[%s1 + $0x214] sm:$0xf]
  %v165 = vld [vmem:[%s1 + $0x218] sm:$0xf]
  %v166 = vld [vmem:[%s1 + $0x21c] sm:$0xf]
  %v167 = vld [vmem:[%s1 + $0x220] sm:$0xf]
  %v168 = vld [vmem:[%s1 + $0x224] sm:$0xf]
  %v169 = vld [vmem:[%s1 + $0x228] sm:$0xf]
  %v170 = vld [vmem:[%s1 + $0x22c] sm:$0xf]
  %v171 = vld [vmem:[%s1 + $0x230] sm:$0xf]
  %v172 = vld [vmem:[%s1 + $0x234] sm:$0xf]
  %v173 = vld [vmem:[%s1 + $0x238] sm:$0xf]
  %v174 = vld [vmem:[%s1 + $0x23c] sm:$0xf]
  %v175 = vld [vmem:[%s1 + $0x240] sm:$0xf]
  %v176 = vld [vmem:[%s1 + $0x244] sm:$0xf]
  %v177 = vld [vmem:[%s1 + $0x248] sm:$0xf]
  %v178 = vld [vmem:[%s1 + $0x24c] sm:$0xf]
  %v179 = vld [vmem:[%s1 + $0x250] sm:$0xf]
  %v180 = vld [vmem:[%s1 + $0x254] sm:$0xf]
  %v181 = vld [vmem:[%s1 + $0x258] sm:$0xf]
  %v182 = vld [vmem:[%s1 + $0x25c] sm:$0xf]
  %v183 = vld [vmem:[%s1 + $0x260] sm:$0xf]
  %v184 = vld [vmem:[%s1 + $0x264] sm:$0xf]
  %v185 = vld [vmem:[%s1 + $0x268] sm:$0xf]
  %v186 = vld [vmem:[%s1 + $0x26c] sm:$0xf]
  %v187 = vld [vmem:[%s1 + $0x270] sm:$0xf]
  %v188 = vld [vmem:[%s1 + $0x274] sm:$0xf]
  %v189 = vld [vmem:[%s1 + $0x278] sm:$0xf]
  %v190 = vld [vmem:[%s1 + $0x27c] sm:$0xf]
  %v191 = vld [vmem:[%s1 + $0x280] sm:$0xf]
  %v192 = vld [vmem:[%s1 + $0x284] sm:$0xf]
  %v193 = vld [vmem:[%s1 + $0x288] sm:$0xf]
  %v194 = vld [vmem:[%s1 + $0x28c] sm:$0xf]
  %v195 = vld [vmem:[%s1 + $0x290] sm:$0xf]
  %v196 = vld [vmem:[%s1 + $0x294] sm:$0xf]
  %v197 = vld [vmem:[%s1 + $0x298] sm:$0xf]
  %v198 = vld [vmem:[%s1 + $0x29c] sm:$0xf]
  %v199 = vld [vmem:[%s1 + $0x2a0] sm:$0xf]
  %v200 = vld [vmem:[%s1 + $0x2a4] sm:$0xf]
  %v201 = vld [vmem:[%s1 + $0x2a8] sm:$0xf]
  %v202 = vld [vmem:[%s1 + $0x2ac] sm:$0xf]
  %v203 = vld [vmem:[%s1 + $0x2b0] sm:$0xf]
  %v204 = vld [vmem:[%s1 + $0x2b4] sm:$0xf]
  %v205 = vld [vmem:[%s1 + $0x2b8] sm:$0xf]
  %v206 = vld [vmem:[%s1 + $0x2bc] sm:$0xf]
  %v207 = vld [vmem:[%s1 + $0x2c0] sm:$0xf]
  %v208 = vld [vmem:[%s1 + $0x2c4] sm:$0xf]
  %v209 = vld [vmem:[%s1 + $0x2c8] sm:$0xf]
  %v210 = vld [vmem:[%s1 + $0x2cc] sm:$0xf]
  %v211 = vld [vmem:[%s1 + $0x2d0] sm:$0xf]
  %v212 = vld [vmem:[%s1 + $0x2d4] sm:$0xf]
  %v213 = vld [vmem:[%s1 + $0x2d8] sm:$0xf]
  %v214 = vld [vmem:[%s1 + $0x2dc] sm:$0xf]
  %v215 = vld [vmem:[%s1 + $0x2e0] sm:$0xf]
  %v216 = vld [vmem:[%s1 + $0x2e4] sm:$0xf]
  %v217 = vld [vmem:[%s1 + $0x2e8] sm:$0xf]
  %v218 = vld [vmem:[%s1 + $0x2ec] sm:$0xf]
  %v219 = vld [vmem:[%s1 + $0x2f0] sm:$0xf]
  %v220 = vld [vmem:[%s1 + $0x2f4] sm:$0xf]
  %v221 = vld [vmem:[%s1 + $0x2f8] sm:$0xf]
  %v222 = vld [vmem:[%s1 + $0x2fc] sm:$0xf]
  %v223 = vld [vmem:[%s1 + $0x300] sm:$0xf]
  %v224 = vld [vmem:[%s1 + $0x304] sm:$0xf]
  %v225 = vld [vmem:[%s1 + $0x308] sm:$0xf]
  %v226 = vld [vmem:[%s1 + $0x30c] sm:$0xf]
  %v227 = vld [vmem:[%s1 + $0x310] sm:$0xf]
  %v228 = vld [vmem:[%s1 + $0x314] sm:$0xf]
  %v229 = vld [vmem:[%s1 + $0x318] sm:$0xf]
  %v230 = vld [vmem:[%s1 + $0x31c] sm:$0xf]
  %v231 = vld [vmem:[%s1 + $0x320] sm:$0xf]
  %v232 = vld [vmem:[%s1 + $0x324] sm:$0xf]
  %v233 = vld [vmem:[%s1 + $0x328] sm:$0xf]
  %v234 = vld [vmem:[%s1 + $0x32c] sm:$0xf]
  %v235 = vld [vmem:[%s1 + $0x330] sm:$0xf]
  %v236 = vld [vmem:[%s1 + $0x334] sm:$0xf]
  %v237 = vld [vmem:[%s1 + $0x338] sm:$0xf]
  %v238 = vld [vmem:[%s1 + $0x33c] sm:$0xf]
  %v239 = vld [vmem:[%s1 + $0x340] sm:$0xf]
  %v240 = vld [vmem:[%s1 + $0x344] sm:$0xf]
  %v241 = vld [vmem:[%s1 + $0x348] sm:$0xf]
  %v242 = vld [vmem:[%s1 + $0x34c] sm:$0xf]
  %v243 = vld [vmem:[%s1 + $0x350] sm:$0xf]
  %v244 = vld [vmem:[%s1 + $0x354] sm:$0xf]
  %v245 = vld [vmem:[%s1 + $0x358] sm:$0xf]
  %v246 = vld [vmem:[%s1 + $0x35c] sm:$0xf]
  %v247 = vld [vmem:[%s1 + $0x360] sm:$0xf]
  %v248 = vld [vmem:[%s1 + $0x364] sm:$0xf]
  %v249 = vld [vmem:[%s1 + $0x368] sm:$0xf]
  %v250 = vld [vmem:[%s1 + $0x36c] sm:$0xf]
  %v251 = vld [vmem:[%s1 + $0x370] sm:$0xf]
  %v252 = vld [vmem:[%s1 + $0x374] sm:$0xf]
  %v253 = vld [vmem:[%s1 + $0x378] sm:$0xf]
  %v254 = vld [vmem:[%s1 + $0x37c] sm:$0xf]
  %v255 = vld [vmem:[%s1 + $0x380] sm:$0xf]
  %v256 = vld [vmem:[%s1 + $0x384] sm:$0xf]
  %v257 = vld [vmem:[%s1 + $0x388] sm:$0xf]
  %v258 = vld [vmem:[%s1 + $0x38c] sm:$0xf]
  %v259 = vld [vmem:[%s1 + $0x390] sm:$0xf]
  %v260 = vld [vmem:[%s1 + $0x394] sm:$0xf]
  %v261 = vld [vmem:[%s1 + $0x398] sm:$0xf]
  %v262 = vld [vmem:[%s1 + $0x39c] sm:$0xf]
  %v263 = vld [vmem:[%s1 + $0x3a0] sm:$0xf]
  %v264 = vld [vmem:[%s1 + $0x3a4] sm:$0xf]
  %v265 = vld [vmem:[%s1 + $0x3a8] sm:$0xf]
  %v266 = vld [vmem:[%s1 + $0x3ac] sm:$0xf]
  %v267 = vld [vmem:[%s1 + $0x3b0] sm:$0xf]
  %v268 = vld [vmem:[%s1 + $0x3b4] sm:$0xf]
  %v269 = vld [vmem:[%s1 + $0x3b8] sm:$0xf]
  %v270 = vld [vmem:[%s1 + $0x3bc] sm:$0xf]
  %v271 = vld [vmem:[%s1 + $0x3c0] sm:$0xf]
  %v272 = vld [vmem:[%s1 + $0x3c4] sm:$0xf]
  %v273 = vld [vmem:[%s1 + $0x3c8] sm:$0xf]
  %v274 = vld [vmem:[%s1 + $0x3cc] sm:$0xf]
  %v275 = vld [vmem:[%s1 + $0x3d0] sm:$0xf]
  %v276 = vld [vmem:[%s1 + $0x3d4] sm:$0xf]
  %v277 = vld [vmem:[%s1 + $0x3d8] sm:$0xf]
  %v278 = vld [vmem:[%s1 + $0x3dc] sm:$0xf]
  %v279 = vld [vmem:[%s1 + $0x3e0] sm:$0xf]
  %v280 = vld [vmem:[%s1 + $0x3e4] sm:$0xf]
  %v281 = vld [vmem:[%s1 + $0x3e8] sm:$0xf]
  %v282 = vld [vmem:[%s1 + $0x3ec] sm:$0xf]
  %v283 = vld [vmem:[%s1 + $0x3f0] sm:$0xf]
  %v284 = vld [vmem:[%s1 + $0x3f4] sm:$0xf]
  %v285 = vld [vmem:[%s1 + $0x3f8] sm:$0xf]
  %v286 = vld [vmem:[%s1 + $0x3fc] sm:$0xf]
  %v287 = vld [vmem:[%s2] sm:$0x1]
  %v289 = vlaneseq
  %v290 = vshrl.u32 %v289, 7
  %v291 = vsub.s32 0, %v290
  %v292 = vrot.slane %v287, %v291
  %v310 = vunpack.c.l.b16 %v15
  %v311 = vunpack.c.h.b16 %v15
  %v312 = vunpack.c.l.b16 %v16
  %v313 = vunpack.c.h.b16 %v16
  %v314 = vunpack.c.l.b16 %v17
  %v315 = vunpack.c.h.b16 %v17
  %v316 = vunpack.c.l.b16 %v18
  %v317 = vunpack.c.h.b16 %v18
  %v318 = vunpack.c.l.b16 %v19
  %v319 = vunpack.c.h.b16 %v19
  %v320 = vunpack.c.l.b16 %v20
  %v321 = vunpack.c.h.b16 %v20
  %v322 = vunpack.c.l.b16 %v21
  %v323 = vunpack.c.h.b16 %v21
  %v324 = vunpack.c.l.b16 %v22
  %v325 = vunpack.c.h.b16 %v22
  %v326 = vunpack.c.l.b16 %v23
  %v327 = vunpack.c.h.b16 %v23
  %v328 = vunpack.c.l.b16 %v24
  %v329 = vunpack.c.h.b16 %v24
  %v330 = vunpack.c.l.b16 %v25
  %v331 = vunpack.c.h.b16 %v25
  %v332 = vunpack.c.l.b16 %v26
  %v333 = vunpack.c.h.b16 %v26
  %v334 = vunpack.c.l.b16 %v27
  %v335 = vunpack.c.h.b16 %v27
  %v336 = vunpack.c.l.b16 %v28
  %v337 = vunpack.c.h.b16 %v28
  %v338 = vunpack.c.l.b16 %v29
  %v339 = vunpack.c.h.b16 %v29
  %v340 = vunpack.c.l.b16 %v30
  %v341 = vunpack.c.h.b16 %v30
  %v342 = vpack.c.b16 %v326, %v310
  %v343 = vpack.c.b16 %v327, %v311
  %v344 = vpack.c.b16 %v328, %v312
  %v345 = vpack.c.b16 %v329, %v313
  %v346 = vpack.c.b16 %v330, %v314
  %v347 = vpack.c.b16 %v331, %v315
  %v348 = vpack.c.b16 %v332, %v316
  %v349 = vpack.c.b16 %v333, %v317
  %v350 = vpack.c.b16 %v334, %v318
  %v351 = vpack.c.b16 %v335, %v319
  %v352 = vpack.c.b16 %v336, %v320
  %v353 = vpack.c.b16 %v337, %v321
  %v354 = vpack.c.b16 %v338, %v322
  %v355 = vpack.c.b16 %v339, %v323
  %v356 = vpack.c.b16 %v340, %v324
  %v357 = vpack.c.b16 %v341, %v325
  %v630 = vunpack.c.l.b16 %v31
  %v631 = vunpack.c.l.b16 %v32
  %v632 = vunpack.c.l.b16 %v33
  %v633 = vunpack.c.l.b16 %v34
  %v634 = vunpack.c.l.b16 %v35
  %v635 = vunpack.c.l.b16 %v36
  %v636 = vunpack.c.l.b16 %v37
  %v637 = vunpack.c.l.b16 %v38
  %v638 = vunpack.c.l.b16 %v39
  %v639 = vunpack.c.l.b16 %v40
  %v640 = vunpack.c.l.b16 %v41
  %v641 = vunpack.c.l.b16 %v42
  %v642 = vunpack.c.l.b16 %v43
  %v643 = vunpack.c.l.b16 %v44
  %v644 = vunpack.c.l.b16 %v45
  %v645 = vunpack.c.l.b16 %v46
  %v646 = vunpack.c.l.b16 %v47
  %v647 = vunpack.c.l.b16 %v48
  %v648 = vunpack.c.l.b16 %v49
  %v649 = vunpack.c.l.b16 %v50
  %v650 = vunpack.c.l.b16 %v51
  %v651 = vunpack.c.l.b16 %v52
  %v652 = vunpack.c.l.b16 %v53
  %v653 = vunpack.c.l.b16 %v54
  %v654 = vunpack.c.l.b16 %v55
  %v655 = vunpack.c.l.b16 %v56
  %v656 = vunpack.c.l.b16 %v57
  %v657 = vunpack.c.l.b16 %v58
  %v658 = vunpack.c.l.b16 %v59
  %v659 = vunpack.c.l.b16 %v60
  %v660 = vunpack.c.l.b16 %v61
  %v661 = vunpack.c.l.b16 %v62
  %v662 = vunpack.c.l.b16 %v63
  %v663 = vunpack.c.l.b16 %v64
  %v664 = vunpack.c.l.b16 %v65
  %v665 = vunpack.c.l.b16 %v66
  %v666 = vunpack.c.l.b16 %v67
  %v667 = vunpack.c.l.b16 %v68
  %v668 = vunpack.c.l.b16 %v69
  %v669 = vunpack.c.l.b16 %v70
  %v670 = vunpack.c.l.b16 %v71
  %v671 = vunpack.c.l.b16 %v72
  %v672 = vunpack.c.l.b16 %v73
  %v673 = vunpack.c.l.b16 %v74
  %v674 = vunpack.c.l.b16 %v75
  %v675 = vunpack.c.l.b16 %v76
  %v676 = vunpack.c.l.b16 %v77
  %v677 = vunpack.c.l.b16 %v78
  %v678 = vunpack.c.l.b16 %v79
  %v679 = vunpack.c.l.b16 %v80
  %v680 = vunpack.c.l.b16 %v81
  %v681 = vunpack.c.l.b16 %v82
  %v682 = vunpack.c.l.b16 %v83
  %v683 = vunpack.c.l.b16 %v84
  %v684 = vunpack.c.l.b16 %v85
  %v685 = vunpack.c.l.b16 %v86
  %v686 = vunpack.c.l.b16 %v87
  %v687 = vunpack.c.l.b16 %v88
  %v688 = vunpack.c.l.b16 %v89
  %v689 = vunpack.c.l.b16 %v90
  %v690 = vunpack.c.l.b16 %v91
  %v691 = vunpack.c.l.b16 %v92
  %v692 = vunpack.c.l.b16 %v93
  %v693 = vunpack.c.l.b16 %v94
  %v694 = vunpack.c.l.b16 %v95
  %v695 = vunpack.c.l.b16 %v96
  %v696 = vunpack.c.l.b16 %v97
  %v697 = vunpack.c.l.b16 %v98
  %v698 = vunpack.c.l.b16 %v99
  %v699 = vunpack.c.l.b16 %v100
  %v700 = vunpack.c.l.b16 %v101
  %v701 = vunpack.c.l.b16 %v102
  %v702 = vunpack.c.l.b16 %v103
  %v703 = vunpack.c.l.b16 %v104
  %v704 = vunpack.c.l.b16 %v105
  %v705 = vunpack.c.l.b16 %v106
  %v706 = vunpack.c.l.b16 %v107
  %v707 = vunpack.c.l.b16 %v108
  %v708 = vunpack.c.l.b16 %v109
  %v709 = vunpack.c.l.b16 %v110
  %v710 = vunpack.c.l.b16 %v111
  %v711 = vunpack.c.l.b16 %v112
  %v712 = vunpack.c.l.b16 %v113
  %v713 = vunpack.c.l.b16 %v114
  %v714 = vunpack.c.l.b16 %v115
  %v715 = vunpack.c.l.b16 %v116
  %v716 = vunpack.c.l.b16 %v117
  %v717 = vunpack.c.l.b16 %v118
  %v718 = vunpack.c.l.b16 %v119
  %v719 = vunpack.c.l.b16 %v120
  %v720 = vunpack.c.l.b16 %v121
  %v721 = vunpack.c.l.b16 %v122
  %v722 = vunpack.c.l.b16 %v123
  %v723 = vunpack.c.l.b16 %v124
  %v724 = vunpack.c.l.b16 %v125
  %v725 = vunpack.c.l.b16 %v126
  %v726 = vunpack.c.l.b16 %v127
  %v727 = vunpack.c.l.b16 %v128
  %v728 = vunpack.c.l.b16 %v129
  %v729 = vunpack.c.l.b16 %v130
  %v730 = vunpack.c.l.b16 %v131
  %v731 = vunpack.c.l.b16 %v132
  %v732 = vunpack.c.l.b16 %v133
  %v733 = vunpack.c.l.b16 %v134
  %v734 = vunpack.c.l.b16 %v135
  %v735 = vunpack.c.l.b16 %v136
  %v736 = vunpack.c.l.b16 %v137
  %v737 = vunpack.c.l.b16 %v138
  %v738 = vunpack.c.l.b16 %v139
  %v739 = vunpack.c.l.b16 %v140
  %v740 = vunpack.c.l.b16 %v141
  %v741 = vunpack.c.l.b16 %v142
  %v742 = vunpack.c.l.b16 %v143
  %v743 = vunpack.c.l.b16 %v144
  %v744 = vunpack.c.l.b16 %v145
  %v745 = vunpack.c.l.b16 %v146
  %v746 = vunpack.c.l.b16 %v147
  %v747 = vunpack.c.l.b16 %v148
  %v748 = vunpack.c.l.b16 %v149
  %v749 = vunpack.c.l.b16 %v150
  %v750 = vunpack.c.l.b16 %v151
  %v751 = vunpack.c.l.b16 %v152
  %v752 = vunpack.c.l.b16 %v153
  %v753 = vunpack.c.l.b16 %v154
  %v754 = vunpack.c.l.b16 %v155
  %v755 = vunpack.c.l.b16 %v156
  %v756 = vunpack.c.l.b16 %v157
  %v757 = vunpack.c.l.b16 %v158
  %v758 = vunpack.c.l.b16 %v159
  %v759 = vunpack.c.l.b16 %v160
  %v760 = vunpack.c.l.b16 %v161
  %v761 = vunpack.c.l.b16 %v162
  %v762 = vunpack.c.l.b16 %v163
  %v763 = vunpack.c.l.b16 %v164
  %v764 = vunpack.c.l.b16 %v165
  %v765 = vunpack.c.l.b16 %v166
  %v766 = vunpack.c.l.b16 %v167
  %v767 = vunpack.c.l.b16 %v168
  %v768 = vunpack.c.l.b16 %v169
  %v769 = vunpack.c.l.b16 %v170
  %v770 = vunpack.c.l.b16 %v171
  %v771 = vunpack.c.l.b16 %v172
  %v772 = vunpack.c.l.b16 %v173
  %v773 = vunpack.c.l.b16 %v174
  %v774 = vunpack.c.l.b16 %v175
  %v775 = vunpack.c.l.b16 %v176
  %v776 = vunpack.c.l.b16 %v177
  %v777 = vunpack.c.l.b16 %v178
  %v778 = vunpack.c.l.b16 %v179
  %v779 = vunpack.c.l.b16 %v180
  %v780 = vunpack.c.l.b16 %v181
  %v781 = vunpack.c.l.b16 %v182
  %v782 = vunpack.c.l.b16 %v183
  %v783 = vunpack.c.l.b16 %v184
  %v784 = vunpack.c.l.b16 %v185
  %v785 = vunpack.c.l.b16 %v186
  %v786 = vunpack.c.l.b16 %v187
  %v787 = vunpack.c.l.b16 %v188
  %v788 = vunpack.c.l.b16 %v189
  %v789 = vunpack.c.l.b16 %v190
  %v790 = vunpack.c.l.b16 %v191
  %v791 = vunpack.c.l.b16 %v192
  %v792 = vunpack.c.l.b16 %v193
  %v793 = vunpack.c.l.b16 %v194
  %v794 = vunpack.c.l.b16 %v195
  %v795 = vunpack.c.l.b16 %v196
  %v796 = vunpack.c.l.b16 %v197
  %v797 = vunpack.c.l.b16 %v198
  %v798 = vunpack.c.l.b16 %v199
  %v799 = vunpack.c.l.b16 %v200
  %v800 = vunpack.c.l.b16 %v201
  %v801 = vunpack.c.l.b16 %v202
  %v802 = vunpack.c.l.b16 %v203
  %v803 = vunpack.c.l.b16 %v204
  %v804 = vunpack.c.l.b16 %v205
  %v805 = vunpack.c.l.b16 %v206
  %v806 = vunpack.c.l.b16 %v207
  %v807 = vunpack.c.l.b16 %v208
  %v808 = vunpack.c.l.b16 %v209
  %v809 = vunpack.c.l.b16 %v210
  %v810 = vunpack.c.l.b16 %v211
  %v811 = vunpack.c.l.b16 %v212
  %v812 = vunpack.c.l.b16 %v213
  %v813 = vunpack.c.l.b16 %v214
  %v814 = vunpack.c.l.b16 %v215
  %v815 = vunpack.c.l.b16 %v216
  %v816 = vunpack.c.l.b16 %v217
  %v817 = vunpack.c.l.b16 %v218
  %v818 = vunpack.c.l.b16 %v219
  %v819 = vunpack.c.l.b16 %v220
  %v820 = vunpack.c.l.b16 %v221
  %v821 = vunpack.c.l.b16 %v222
  %v822 = vunpack.c.l.b16 %v223
  %v823 = vunpack.c.l.b16 %v224
  %v824 = vunpack.c.l.b16 %v225
  %v825 = vunpack.c.l.b16 %v226
  %v826 = vunpack.c.l.b16 %v227
  %v827 = vunpack.c.l.b16 %v228
  %v828 = vunpack.c.l.b16 %v229
  %v829 = vunpack.c.l.b16 %v230
  %v830 = vunpack.c.l.b16 %v231
  %v831 = vunpack.c.l.b16 %v232
  %v832 = vunpack.c.l.b16 %v233
  %v833 = vunpack.c.l.b16 %v234
  %v834 = vunpack.c.l.b16 %v235
  %v835 = vunpack.c.l.b16 %v236
  %v836 = vunpack.c.l.b16 %v237
  %v837 = vunpack.c.l.b16 %v238
  %v838 = vunpack.c.l.b16 %v239
  %v839 = vunpack.c.l.b16 %v240
  %v840 = vunpack.c.l.b16 %v241
  %v841 = vunpack.c.l.b16 %v242
  %v842 = vunpack.c.l.b16 %v243
  %v843 = vunpack.c.l.b16 %v244
  %v844 = vunpack.c.l.b16 %v245
  %v845 = vunpack.c.l.b16 %v246
  %v846 = vunpack.c.l.b16 %v247
  %v847 = vunpack.c.l.b16 %v248
  %v848 = vunpack.c.l.b16 %v249
  %v849 = vunpack.c.l.b16 %v250
  %v850 = vunpack.c.l.b16 %v251
  %v851 = vunpack.c.l.b16 %v252
  %v852 = vunpack.c.l.b16 %v253
  %v853 = vunpack.c.l.b16 %v254
  %v854 = vunpack.c.l.b16 %v255
  %v855 = vunpack.c.l.b16 %v256
  %v856 = vunpack.c.l.b16 %v257
  %v857 = vunpack.c.l.b16 %v258
  %v858 = vunpack.c.l.b16 %v259
  %v859 = vunpack.c.l.b16 %v260
  %v860 = vunpack.c.l.b16 %v261
  %v861 = vunpack.c.l.b16 %v262
  %v862 = vunpack.c.l.b16 %v263
  %v863 = vunpack.c.l.b16 %v264
  %v864 = vunpack.c.l.b16 %v265
  %v865 = vunpack.c.l.b16 %v266
  %v866 = vunpack.c.l.b16 %v267
  %v867 = vunpack.c.l.b16 %v268
  %v868 = vunpack.c.l.b16 %v269
  %v869 = vunpack.c.l.b16 %v270
  %v870 = vunpack.c.l.b16 %v271
  %v871 = vunpack.c.l.b16 %v272
  %v872 = vunpack.c.l.b16 %v273
  %v873 = vunpack.c.l.b16 %v274
  %v874 = vunpack.c.l.b16 %v275
  %v875 = vunpack.c.l.b16 %v276
  %v876 = vunpack.c.l.b16 %v277
  %v877 = vunpack.c.l.b16 %v278
  %v878 = vunpack.c.l.b16 %v279
  %v879 = vunpack.c.l.b16 %v280
  %v880 = vunpack.c.l.b16 %v281
  %v881 = vunpack.c.l.b16 %v282
  %v882 = vunpack.c.l.b16 %v283
  %v883 = vunpack.c.l.b16 %v284
  %v884 = vunpack.c.l.b16 %v285
  %v885 = vunpack.c.l.b16 %v286
  %v886 = vpack.c.b16 %v631, %v630
  %v887 = vpack.c.b16 %v633, %v632
  %v888 = vpack.c.b16 %v635, %v634
  %v889 = vpack.c.b16 %v637, %v636
  %v890 = vpack.c.b16 %v639, %v638
  %v891 = vpack.c.b16 %v641, %v640
  %v892 = vpack.c.b16 %v643, %v642
  %v893 = vpack.c.b16 %v645, %v644
  %v894 = vpack.c.b16 %v647, %v646
  %v895 = vpack.c.b16 %v649, %v648
  %v896 = vpack.c.b16 %v651, %v650
  %v897 = vpack.c.b16 %v653, %v652
  %v898 = vpack.c.b16 %v655, %v654
  %v899 = vpack.c.b16 %v657, %v656
  %v900 = vpack.c.b16 %v659, %v658
  %v901 = vpack.c.b16 %v661, %v660
  %v902 = vpack.c.b16 %v663, %v662
  %v903 = vpack.c.b16 %v665, %v664
  %v904 = vpack.c.b16 %v667, %v666
  %v905 = vpack.c.b16 %v669, %v668
  %v906 = vpack.c.b16 %v671, %v670
  %v907 = vpack.c.b16 %v673, %v672
  %v908 = vpack.c.b16 %v675, %v674
  %v909 = vpack.c.b16 %v677, %v676
  %v910 = vpack.c.b16 %v679, %v678
  %v911 = vpack.c.b16 %v681, %v680
  %v912 = vpack.c.b16 %v683, %v682
  %v913 = vpack.c.b16 %v685, %v684
  %v914 = vpack.c.b16 %v687, %v686
  %v915 = vpack.c.b16 %v689, %v688
  %v916 = vpack.c.b16 %v691, %v690
  %v917 = vpack.c.b16 %v693, %v692
  %v918 = vpack.c.b16 %v695, %v694
  %v919 = vpack.c.b16 %v697, %v696
  %v920 = vpack.c.b16 %v699, %v698
  %v921 = vpack.c.b16 %v701, %v700
  %v922 = vpack.c.b16 %v703, %v702
  %v923 = vpack.c.b16 %v705, %v704
  %v924 = vpack.c.b16 %v707, %v706
  %v925 = vpack.c.b16 %v709, %v708
  %v926 = vpack.c.b16 %v711, %v710
  %v927 = vpack.c.b16 %v713, %v712
  %v928 = vpack.c.b16 %v715, %v714
  %v929 = vpack.c.b16 %v717, %v716
  %v930 = vpack.c.b16 %v719, %v718
  %v931 = vpack.c.b16 %v721, %v720
  %v932 = vpack.c.b16 %v723, %v722
  %v933 = vpack.c.b16 %v725, %v724
  %v934 = vpack.c.b16 %v727, %v726
  %v935 = vpack.c.b16 %v729, %v728
  %v936 = vpack.c.b16 %v731, %v730
  %v937 = vpack.c.b16 %v733, %v732
  %v938 = vpack.c.b16 %v735, %v734
  %v939 = vpack.c.b16 %v737, %v736
  %v940 = vpack.c.b16 %v739, %v738
  %v941 = vpack.c.b16 %v741, %v740
  %v942 = vpack.c.b16 %v743, %v742
  %v943 = vpack.c.b16 %v745, %v744
  %v944 = vpack.c.b16 %v747, %v746
  %v945 = vpack.c.b16 %v749, %v748
  %v946 = vpack.c.b16 %v751, %v750
  %v947 = vpack.c.b16 %v753, %v752
  %v948 = vpack.c.b16 %v755, %v754
  %v949 = vpack.c.b16 %v757, %v756
  %v950 = vpack.c.b16 %v759, %v758
  %v951 = vpack.c.b16 %v761, %v760
  %v952 = vpack.c.b16 %v763, %v762
  %v953 = vpack.c.b16 %v765, %v764
  %v954 = vpack.c.b16 %v767, %v766
  %v955 = vpack.c.b16 %v769, %v768
  %v956 = vpack.c.b16 %v771, %v770
  %v957 = vpack.c.b16 %v773, %v772
  %v958 = vpack.c.b16 %v775, %v774
  %v959 = vpack.c.b16 %v777, %v776
  %v960 = vpack.c.b16 %v779, %v778
  %v961 = vpack.c.b16 %v781, %v780
  %v962 = vpack.c.b16 %v783, %v782
  %v963 = vpack.c.b16 %v785, %v784
  %v964 = vpack.c.b16 %v787, %v786
  %v965 = vpack.c.b16 %v789, %v788
  %v966 = vpack.c.b16 %v791, %v790
  %v967 = vpack.c.b16 %v793, %v792
  %v968 = vpack.c.b16 %v795, %v794
  %v969 = vpack.c.b16 %v797, %v796
  %v970 = vpack.c.b16 %v799, %v798
  %v971 = vpack.c.b16 %v801, %v800
  %v972 = vpack.c.b16 %v803, %v802
  %v973 = vpack.c.b16 %v805, %v804
  %v974 = vpack.c.b16 %v807, %v806
  %v975 = vpack.c.b16 %v809, %v808
  %v976 = vpack.c.b16 %v811, %v810
  %v977 = vpack.c.b16 %v813, %v812
  %v978 = vpack.c.b16 %v815, %v814
  %v979 = vpack.c.b16 %v817, %v816
  %v980 = vpack.c.b16 %v819, %v818
  %v981 = vpack.c.b16 %v821, %v820
  %v982 = vpack.c.b16 %v823, %v822
  %v983 = vpack.c.b16 %v825, %v824
  %v984 = vpack.c.b16 %v827, %v826
  %v985 = vpack.c.b16 %v829, %v828
  %v986 = vpack.c.b16 %v831, %v830
  %v987 = vpack.c.b16 %v833, %v832
  %v988 = vpack.c.b16 %v835, %v834
  %v989 = vpack.c.b16 %v837, %v836
  %v990 = vpack.c.b16 %v839, %v838
  %v991 = vpack.c.b16 %v841, %v840
  %v992 = vpack.c.b16 %v843, %v842
  %v993 = vpack.c.b16 %v845, %v844
  %v994 = vpack.c.b16 %v847, %v846
  %v995 = vpack.c.b16 %v849, %v848
  %v996 = vpack.c.b16 %v851, %v850
  %v997 = vpack.c.b16 %v853, %v852
  %v998 = vpack.c.b16 %v855, %v854
  %v999 = vpack.c.b16 %v857, %v856
  %v1000 = vpack.c.b16 %v859, %v858
  %v1001 = vpack.c.b16 %v861, %v860
  %v1002 = vpack.c.b16 %v863, %v862
  %v1003 = vpack.c.b16 %v865, %v864
  %v1004 = vpack.c.b16 %v867, %v866
  %v1005 = vpack.c.b16 %v869, %v868
  %v1006 = vpack.c.b16 %v871, %v870
  %v1007 = vpack.c.b16 %v873, %v872
  %v1008 = vpack.c.b16 %v875, %v874
  %v1009 = vpack.c.b16 %v877, %v876
  %v1010 = vpack.c.b16 %v879, %v878
  %v1011 = vpack.c.b16 %v881, %v880
  %v1012 = vpack.c.b16 %v883, %v882
  %v1013 = vpack.c.b16 %v885, %v884
  %1142 = vmatprep.subr.bf16.mxu0 0
  %1143 = vmatpush1.bf16.msra.mxu0 %v886
  %1144 = vmatprep.subr.bf16.mxu0 0
  %1145 = vmatpush1.bf16.msra.mxu0 %v887
  %1146 = vmatprep.subr.bf16.mxu0 0
  %1147 = vmatpush1.bf16.msra.mxu0 %v888
  %1148 = vmatprep.subr.bf16.mxu0 0
  %1149 = vmatpush1.bf16.msra.mxu0 %v889
  %1150 = vmatprep.subr.bf16.mxu0 0
  %1151 = vmatpush1.bf16.msra.mxu0 %v890
  %1152 = vmatprep.subr.bf16.mxu0 0
  %1153 = vmatpush1.bf16.msra.mxu0 %v891
  %1154 = vmatprep.subr.bf16.mxu0 0
  %1155 = vmatpush1.bf16.msra.mxu0 %v892
  %1156 = vmatprep.subr.bf16.mxu0 0
  %1157 = vmatpush1.bf16.msra.mxu0 %v893
  %1158 = vmatprep.subr.bf16.mxu0 0
  %1159 = vmatpush1.bf16.msra.mxu0 %v894
  %1160 = vmatprep.subr.bf16.mxu0 0
  %1161 = vmatpush1.bf16.msra.mxu0 %v895
  %1162 = vmatprep.subr.bf16.mxu0 0
  %1163 = vmatpush1.bf16.msra.mxu0 %v896
  %1164 = vmatprep.subr.bf16.mxu0 0
  %1165 = vmatpush1.bf16.msra.mxu0 %v897
  %1166 = vmatprep.subr.bf16.mxu0 0
  %1167 = vmatpush1.bf16.msra.mxu0 %v898
  %1168 = vmatprep.subr.bf16.mxu0 0
  %1169 = vmatpush1.bf16.msra.mxu0 %v899
  %1170 = vmatprep.subr.bf16.mxu0 0
  %1171 = vmatpush1.bf16.msra.mxu0 %v900
  %1172 = vmatprep.subr.bf16.mxu0 0
  %1173 = vmatpush1.bf16.msra.mxu0 %v901
  %1174 = vmatprep.mubr.bf16.mxu0 %v343
  %1175 = vmatmul.mubr.bf16.gmra.mrb[0].mxu0 %v342
  %v1176 = vpop.f32.mrb[0].mxu0
  %v1177 = vadd.f32 %v292, %v1176
  %v1178 = vpop.f32.mrb[0].mxu0
  %v1179 = vpop.f32.mrb[0].mxu0
  %v1180 = vadd.f32 %v292, %v1179
  %v1181 = vpop.f32.mrb[0].mxu0
  %1182 = vdwg.mxu0
  %1183 = vmatprep.subr.bf16.mxu0 0
  %1184 = vmatpush1.bf16.msra.mxu0 %v902
  %1185 = vmatprep.subr.bf16.mxu0 0
  %1186 = vmatpush1.bf16.msra.mxu0 %v903
  %1187 = vmatprep.subr.bf16.mxu0 0
  %1188 = vmatpush1.bf16.msra.mxu0 %v904
  %1189 = vmatprep.subr.bf16.mxu0 0
  %1190 = vmatpush1.bf16.msra.mxu0 %v905
  %1191 = vmatprep.subr.bf16.mxu0 0
  %1192 = vmatpush1.bf16.msra.mxu0 %v906
  %1193 = vmatprep.subr.bf16.mxu0 0
  %1194 = vmatpush1.bf16.msra.mxu0 %v907
  %1195 = vmatprep.subr.bf16.mxu0 0
  %1196 = vmatpush1.bf16.msra.mxu0 %v908
  %1197 = vmatprep.subr.bf16.mxu0 0
  %1198 = vmatpush1.bf16.msra.mxu0 %v909
  %1199 = vmatprep.subr.bf16.mxu0 0
  %1200 = vmatpush1.bf16.msra.mxu0 %v910
  %1201 = vmatprep.subr.bf16.mxu0 0
  %1202 = vmatpush1.bf16.msra.mxu0 %v911
  %1203 = vmatprep.subr.bf16.mxu0 0
  %1204 = vmatpush1.bf16.msra.mxu0 %v912
  %1205 = vmatprep.subr.bf16.mxu0 0
  %1206 = vmatpush1.bf16.msra.mxu0 %v913
  %1207 = vmatprep.subr.bf16.mxu0 0
  %1208 = vmatpush1.bf16.msra.mxu0 %v914
  %1209 = vmatprep.subr.bf16.mxu0 0
  %1210 = vmatpush1.bf16.msra.mxu0 %v915
  %1211 = vmatprep.subr.bf16.mxu0 0
  %1212 = vmatpush1.bf16.msra.mxu0 %v916
  %1213 = vmatprep.subr.bf16.mxu0 0
  %1214 = vmatpush1.bf16.msra.mxu0 %v917
  %1215 = vmatprep.mubr.bf16.mxu0 %v345
  %1216 = vmatmul.mubr.bf16.gmra.mrb[0].mxu0 %v344
  %v1217 = vpop.f32.mrb[0].mxu0
  %v1218 = vadd.f32 %v1177, %v1217
  %v1219 = vpop.f32.mrb[0].mxu0
  %v1220 = vpop.f32.mrb[0].mxu0
  %v1221 = vadd.f32 %v1180, %v1220
  %v1222 = vpop.f32.mrb[0].mxu0
  %1223 = vdwg.mxu0
  %1224 = vmatprep.subr.bf16.mxu0 0
  %1225 = vmatpush1.bf16.msra.mxu0 %v918
  %1226 = vmatprep.subr.bf16.mxu0 0
  %1227 = vmatpush1.bf16.msra.mxu0 %v919
  %1228 = vmatprep.subr.bf16.mxu0 0
  %1229 = vmatpush1.bf16.msra.mxu0 %v920
  %1230 = vmatprep.subr.bf16.mxu0 0
  %1231 = vmatpush1.bf16.msra.mxu0 %v921
  %1232 = vmatprep.subr.bf16.mxu0 0
  %1233 = vmatpush1.bf16.msra.mxu0 %v922
  %1234 = vmatprep.subr.bf16.mxu0 0
  %1235 = vmatpush1.bf16.msra.mxu0 %v923
  %1236 = vmatprep.subr.bf16.mxu0 0
  %1237 = vmatpush1.bf16.msra.mxu0 %v924
  %1238 = vmatprep.subr.bf16.mxu0 0
  %1239 = vmatpush1.bf16.msra.mxu0 %v925
  %1240 = vmatprep.subr.bf16.mxu0 0
  %1241 = vmatpush1.bf16.msra.mxu0 %v926
  %1242 = vmatprep.subr.bf16.mxu0 0
  %1243 = vmatpush1.bf16.msra.mxu0 %v927
  %1244 = vmatprep.subr.bf16.mxu0 0
  %1245 = vmatpush1.bf16.msra.mxu0 %v928
  %1246 = vmatprep.subr.bf16.mxu0 0
  %1247 = vmatpush1.bf16.msra.mxu0 %v929
  %1248 = vmatprep.subr.bf16.mxu0 0
  %1249 = vmatpush1.bf16.msra.mxu0 %v930
  %1250 = vmatprep.subr.bf16.mxu0 0
  %1251 = vmatpush1.bf16.msra.mxu0 %v931
  %1252 = vmatprep.subr.bf16.mxu0 0
  %1253 = vmatpush1.bf16.msra.mxu0 %v932
  %1254 = vmatprep.subr.bf16.mxu0 0
  %1255 = vmatpush1.bf16.msra.mxu0 %v933
  %1256 = vmatprep.mubr.bf16.mxu0 %v347
  %1257 = vmatmul.mubr.bf16.gmra.mrb[0].mxu0 %v346
  %v1258 = vpop.f32.mrb[0].mxu0
  %v1259 = vadd.f32 %v1218, %v1258
  %v1260 = vpop.f32.mrb[0].mxu0
  %v1261 = vpop.f32.mrb[0].mxu0
  %v1262 = vadd.f32 %v1221, %v1261
  %v1263 = vpop.f32.mrb[0].mxu0
  %1264 = vdwg.mxu0
  %1265 = vmatprep.subr.bf16.mxu0 0
  %1266 = vmatpush1.bf16.msra.mxu0 %v934
  %1267 = vmatprep.subr.bf16.mxu0 0
  %1268 = vmatpush1.bf16.msra.mxu0 %v935
  %1269 = vmatprep.subr.bf16.mxu0 0
  %1270 = vmatpush1.bf16.msra.mxu0 %v936
  %1271 = vmatprep.subr.bf16.mxu0 0
  %1272 = vmatpush1.bf16.msra.mxu0 %v937
  %1273 = vmatprep.subr.bf16.mxu0 0
  %1274 = vmatpush1.bf16.msra.mxu0 %v938
  %1275 = vmatprep.subr.bf16.mxu0 0
  %1276 = vmatpush1.bf16.msra.mxu0 %v939
  %1277 = vmatprep.subr.bf16.mxu0 0
  %1278 = vmatpush1.bf16.msra.mxu0 %v940
  %1279 = vmatprep.subr.bf16.mxu0 0
  %1280 = vmatpush1.bf16.msra.mxu0 %v941
  %1281 = vmatprep.subr.bf16.mxu0 0
  %1282 = vmatpush1.bf16.msra.mxu0 %v942
  %1283 = vmatprep.subr.bf16.mxu0 0
  %1284 = vmatpush1.bf16.msra.mxu0 %v943
  %1285 = vmatprep.subr.bf16.mxu0 0
  %1286 = vmatpush1.bf16.msra.mxu0 %v944
  %1287 = vmatprep.subr.bf16.mxu0 0
  %1288 = vmatpush1.bf16.msra.mxu0 %v945
  %1289 = vmatprep.subr.bf16.mxu0 0
  %1290 = vmatpush1.bf16.msra.mxu0 %v946
  %1291 = vmatprep.subr.bf16.mxu0 0
  %1292 = vmatpush1.bf16.msra.mxu0 %v947
  %1293 = vmatprep.subr.bf16.mxu0 0
  %1294 = vmatpush1.bf16.msra.mxu0 %v948
  %1295 = vmatprep.subr.bf16.mxu0 0
  %1296 = vmatpush1.bf16.msra.mxu0 %v949
  %1297 = vmatprep.mubr.bf16.mxu0 %v349
  %1298 = vmatmul.mubr.bf16.gmra.mrb[0].mxu0 %v348
  %v1299 = vpop.f32.mrb[0].mxu0
  %v1300 = vadd.f32 %v1259, %v1299
  %v1301 = vpop.f32.mrb[0].mxu0
  %v1302 = vpop.f32.mrb[0].mxu0
  %v1303 = vadd.f32 %v1262, %v1302
  %v1304 = vpop.f32.mrb[0].mxu0
  %1305 = vdwg.mxu0
  %1306 = vmatprep.subr.bf16.mxu0 0
  %1307 = vmatpush1.bf16.msra.mxu0 %v950
  %1308 = vmatprep.subr.bf16.mxu0 0
  %1309 = vmatpush1.bf16.msra.mxu0 %v951
  %1310 = vmatprep.subr.bf16.mxu0 0
  %1311 = vmatpush1.bf16.msra.mxu0 %v952
  %1312 = vmatprep.subr.bf16.mxu0 0
  %1313 = vmatpush1.bf16.msra.mxu0 %v953
  %1314 = vmatprep.subr.bf16.mxu0 0
  %1315 = vmatpush1.bf16.msra.mxu0 %v954
  %1316 = vmatprep.subr.bf16.mxu0 0
  %1317 = vmatpush1.bf16.msra.mxu0 %v955
  %1318 = vmatprep.subr.bf16.mxu0 0
  %1319 = vmatpush1.bf16.msra.mxu0 %v956
  %1320 = vmatprep.subr.bf16.mxu0 0
  %1321 = vmatpush1.bf16.msra.mxu0 %v957
  %1322 = vmatprep.subr.bf16.mxu0 0
  %1323 = vmatpush1.bf16.msra.mxu0 %v958
  %1324 = vmatprep.subr.bf16.mxu0 0
  %1325 = vmatpush1.bf16.msra.mxu0 %v959
  %1326 = vmatprep.subr.bf16.mxu0 0
  %1327 = vmatpush1.bf16.msra.mxu0 %v960
  %1328 = vmatprep.subr.bf16.mxu0 0
  %1329 = vmatpush1.bf16.msra.mxu0 %v961
  %1330 = vmatprep.subr.bf16.mxu0 0
  %1331 = vmatpush1.bf16.msra.mxu0 %v962
  %1332 = vmatprep.subr.bf16.mxu0 0
  %1333 = vmatpush1.bf16.msra.mxu0 %v963
  %1334 = vmatprep.subr.bf16.mxu0 0
  %1335 = vmatpush1.bf16.msra.mxu0 %v964
  %1336 = vmatprep.subr.bf16.mxu0 0
  %1337 = vmatpush1.bf16.msra.mxu0 %v965
  %1338 = vmatprep.mubr.bf16.mxu0 %v351
  %1339 = vmatmul.mubr.bf16.gmra.mrb[0].mxu0 %v350
  %v1340 = vpop.f32.mrb[0].mxu0
  %v1341 = vadd.f32 %v1300, %v1340
  %v1342 = vpop.f32.mrb[0].mxu0
  %v1343 = vpop.f32.mrb[0].mxu0
  %v1344 = vadd.f32 %v1303, %v1343
  %v1345 = vpop.f32.mrb[0].mxu0
  %1346 = vdwg.mxu0
  %1347 = vmatprep.subr.bf16.mxu0 0
  %1348 = vmatpush1.bf16.msra.mxu0 %v966
  %1349 = vmatprep.subr.bf16.mxu0 0
  %1350 = vmatpush1.bf16.msra.mxu0 %v967
  %1351 = vmatprep.subr.bf16.mxu0 0
  %1352 = vmatpush1.bf16.msra.mxu0 %v968
  %1353 = vmatprep.subr.bf16.mxu0 0
  %1354 = vmatpush1.bf16.msra.mxu0 %v969
  %1355 = vmatprep.subr.bf16.mxu0 0
  %1356 = vmatpush1.bf16.msra.mxu0 %v970
  %1357 = vmatprep.subr.bf16.mxu0 0
  %1358 = vmatpush1.bf16.msra.mxu0 %v971
  %1359 = vmatprep.subr.bf16.mxu0 0
  %1360 = vmatpush1.bf16.msra.mxu0 %v972
  %1361 = vmatprep.subr.bf16.mxu0 0
  %1362 = vmatpush1.bf16.msra.mxu0 %v973
  %1363 = vmatprep.subr.bf16.mxu0 0
  %1364 = vmatpush1.bf16.msra.mxu0 %v974
  %1365 = vmatprep.subr.bf16.mxu0 0
  %1366 = vmatpush1.bf16.msra.mxu0 %v975
  %1367 = vmatprep.subr.bf16.mxu0 0
  %1368 = vmatpush1.bf16.msra.mxu0 %v976
  %1369 = vmatprep.subr.bf16.mxu0 0
  %1370 = vmatpush1.bf16.msra.mxu0 %v977
  %1371 = vmatprep.subr.bf16.mxu0 0
  %1372 = vmatpush1.bf16.msra.mxu0 %v978
  %1373 = vmatprep.subr.bf16.mxu0 0
  %1374 = vmatpush1.bf16.msra.mxu0 %v979
  %1375 = vmatprep.subr.bf16.mxu0 0
  %1376 = vmatpush1.bf16.msra.mxu0 %v980
  %1377 = vmatprep.subr.bf16.mxu0 0
  %1378 = vmatpush1.bf16.msra.mxu0 %v981
  %1379 = vmatprep.mubr.bf16.mxu0 %v353
  %1380 = vmatmul.mubr.bf16.gmra.mrb[0].mxu0 %v352
  %v1381 = vpop.f32.mrb[0].mxu0
  %v1382 = vadd.f32 %v1341, %v1381
  %v1383 = vpop.f32.mrb[0].mxu0
  %v1384 = vpop.f32.mrb[0].mxu0
  %v1385 = vadd.f32 %v1344, %v1384
  %v1386 = vpop.f32.mrb[0].mxu0
  %1387 = vdwg.mxu0
  %1388 = vmatprep.subr.bf16.mxu0 0
  %1389 = vmatpush1.bf16.msra.mxu0 %v982
  %1390 = vmatprep.subr.bf16.mxu0 0
  %1391 = vmatpush1.bf16.msra.mxu0 %v983
  %1392 = vmatprep.subr.bf16.mxu0 0
  %1393 = vmatpush1.bf16.msra.mxu0 %v984
  %1394 = vmatprep.subr.bf16.mxu0 0
  %1395 = vmatpush1.bf16.msra.mxu0 %v985
  %1396 = vmatprep.subr.bf16.mxu0 0
  %1397 = vmatpush1.bf16.msra.mxu0 %v986
  %1398 = vmatprep.subr.bf16.mxu0 0
  %1399 = vmatpush1.bf16.msra.mxu0 %v987
  %1400 = vmatprep.subr.bf16.mxu0 0
  %1401 = vmatpush1.bf16.msra.mxu0 %v988
  %1402 = vmatprep.subr.bf16.mxu0 0
  %1403 = vmatpush1.bf16.msra.mxu0 %v989
  %1404 = vmatprep.subr.bf16.mxu0 0
  %1405 = vmatpush1.bf16.msra.mxu0 %v990
  %1406 = vmatprep.subr.bf16.mxu0 0
  %1407 = vmatpush1.bf16.msra.mxu0 %v991
  %1408 = vmatprep.subr.bf16.mxu0 0
  %1409 = vmatpush1.bf16.msra.mxu0 %v992
  %1410 = vmatprep.subr.bf16.mxu0 0
  %1411 = vmatpush1.bf16.msra.mxu0 %v993
  %1412 = vmatprep.subr.bf16.mxu0 0
  %1413 = vmatpush1.bf16.msra.mxu0 %v994
  %1414 = vmatprep.subr.bf16.mxu0 0
  %1415 = vmatpush1.bf16.msra.mxu0 %v995
  %1416 = vmatprep.subr.bf16.mxu0 0
  %1417 = vmatpush1.bf16.msra.mxu0 %v996
  %1418 = vmatprep.subr.bf16.mxu0 0
  %1419 = vmatpush1.bf16.msra.mxu0 %v997
  %1420 = vmatprep.mubr.bf16.mxu0 %v355
  %1421 = vmatmul.mubr.bf16.gmra.mrb[0].mxu0 %v354
  %v1422 = vpop.f32.mrb[0].mxu0
  %v1423 = vadd.f32 %v1382, %v1422
  %v1424 = vpop.f32.mrb[0].mxu0
  %v1425 = vpop.f32.mrb[0].mxu0
  %v1426 = vadd.f32 %v1385, %v1425
  %v1427 = vpop.f32.mrb[0].mxu0
  %1428 = vdwg.mxu0
  %1429 = vmatprep.subr.bf16.mxu0 0
  %1430 = vmatpush1.bf16.msra.mxu0 %v998
  %1431 = vmatprep.subr.bf16.mxu0 0
  %1432 = vmatpush1.bf16.msra.mxu0 %v999
  %1433 = vmatprep.subr.bf16.mxu0 0
  %1434 = vmatpush1.bf16.msra.mxu0 %v1000
  %1435 = vmatprep.subr.bf16.mxu0 0
  %1436 = vmatpush1.bf16.msra.mxu0 %v1001
  %1437 = vmatprep.subr.bf16.mxu0 0
  %1438 = vmatpush1.bf16.msra.mxu0 %v1002
  %1439 = vmatprep.subr.bf16.mxu0 0
  %1440 = vmatpush1.bf16.msra.mxu0 %v1003
  %1441 = vmatprep.subr.bf16.mxu0 0
  %1442 = vmatpush1.bf16.msra.mxu0 %v1004
  %1443 = vmatprep.subr.bf16.mxu0 0
  %1444 = vmatpush1.bf16.msra.mxu0 %v1005
  %1445 = vmatprep.subr.bf16.mxu0 0
  %1446 = vmatpush1.bf16.msra.mxu0 %v1006
  %1447 = vmatprep.subr.bf16.mxu0 0
  %1448 = vmatpush1.bf16.msra.mxu0 %v1007
  %1449 = vmatprep.subr.bf16.mxu0 0
  %1450 = vmatpush1.bf16.msra.mxu0 %v1008
  %1451 = vmatprep.subr.bf16.mxu0 0
  %1452 = vmatpush1.bf16.msra.mxu0 %v1009
  %1453 = vmatprep.subr.bf16.mxu0 0
  %1454 = vmatpush1.bf16.msra.mxu0 %v1010
  %1455 = vmatprep.subr.bf16.mxu0 0
  %1456 = vmatpush1.bf16.msra.mxu0 %v1011
  %1457 = vmatprep.subr.bf16.mxu0 0
  %1458 = vmatpush1.bf16.msra.mxu0 %v1012
  %1459 = vmatprep.subr.bf16.mxu0 0
  %1460 = vmatpush1.bf16.msra.mxu0 %v1013
  %1461 = vmatprep.mubr.bf16.mxu0 %v357
  %1462 = vmatmul.mubr.bf16.gmra.mrb[0].mxu0 %v356
  %v1463 = vpop.f32.mrb[0].mxu0
  %v1464 = vadd.f32 %v1423, %v1463
  %v1465 = vpop.f32.mrb[0].mxu0
  %v1466 = vpop.f32.mrb[0].mxu0
  %v1467 = vadd.f32 %v1426, %v1466
  %v1468 = vpop.f32.mrb[0].mxu0
  %1469 = vdwg.mxu0
  %1470 = vst [vmem:[%s3] sm:$0xff] %v1464
  %1471 = vst [vmem:[%s3 + $0x8] sm:$0xff] %v1467
  // Predicated region
  $region14: #{_lambda_.15} parent=0 // pred_check
    _
  $region15: #{_lambda_.15} parent=0 // pred_check_branch
    %1473 = sbr.rel (0) target = $region17
  $region16: #{_lambda_.15} parent=0 // pred_region
    _
  $region17: #{_lambda_.15} parent=0 // pred_fallthru
    _
  // Predicated region
  $region18: #{_lambda_.15} parent=0 // pred_check
    _
  $region19: #{_lambda_.15} parent=0 // pred_check_branch
    %1475 = sbr.rel (0) target = $region21
  $region20: #{_lambda_.15} parent=0 // pred_region
    _
  $region21: #{_lambda_.15} parent=0 // pred_fallthru
    _

</llo_original>
